<compile_context>
chip_gen: v5e
topology: v5e:2x2
jax: 0.10.0
libtpu: 0.0.40
codegen_flags: <defaults>
</compile_context>

<pallas_src>
import functools

import numpy as np

import jax
import jax.numpy as jnp
from jax.experimental import pallas as pl
from jax.experimental.pallas import tpu as pltpu

EPS = 1e-5
LANE = 128


def _derive_vmem_limit():
    # ~0.75x physical VMEM (96 MiB on v5e/v6e, 48 MiB on v7x); conservative
    # fallback if the query is unavailable.
    try:
        info = pltpu.get_tpu_info()
        cap = getattr(info, "vmem_capacity_bytes", None)
        if cap:
            return int(min(cap * 3 // 4, 112 * 1024 * 1024))
    except Exception:
        pass
    return 32 * 1024 * 1024


VMEM_LIMIT = _derive_vmem_limit()


# ------------------------------ small helpers -------------------------------

def _rup(x, m):
    return (x + m - 1) // m * m


def _pad_last(t, target):
    c = t.shape[-1]
    if c == target:
        return t
    return jnp.pad(t, [(0, 0)] * (t.ndim - 1) + [(0, target - c)])


def _space_to_depth2(x):
    # (N, H, W, C) with even H, W -> (N, H//2, W//2, 4*C); phase-major channels.
    n, h, w, c = x.shape
    x = x.reshape(n, h // 2, 2, w // 2, 2, c)
    x = jnp.transpose(x, (0, 1, 3, 2, 4, 5))
    return x.reshape(n, h // 2, w // 2, 4 * c)


def _weight_s2(w):
    # (3,3,Cin,Cout) stride-2 kernel -> (2,2,4*Cin,Cout) stride-1 kernel acting
    # on the space-to-depth input: W2[p, q, (a*2+b)*Cin:+Cin] = W[2p+a, 2q+b].
    cin, cout = w.shape[2], w.shape[3]
    w2 = jnp.zeros((2, 2, 4 * cin, cout), w.dtype)
    for p in range(2):
        for q in range(2):
            for a in range(2):
                for b in range(2):
                    kh, kw = 2 * p + a, 2 * q + b
                    if kh < 3 and kw < 3:
                        lo = (a * 2 + b) * cin
                        w2 = w2.at[p, q, lo:lo + cin, :].set(w[kh, kw])
    return w2


def _prep_w_taps(w, cinp, coutp, dtype):
    # (kh, kw, cin, cout) -> (kh*kw, cinp, coutp), zero-padded, MXU dtype.
    kh, kw, cin, cout = w.shape
    w = w.reshape(kh * kw, cin, cout)
    w = jnp.pad(w, ((0, 0), (0, cinp - cin), (0, coutp - cout)))
    return w.astype(dtype)


# ----------------------------- Pallas kernels -------------------------------

def _conv1_kernel(x_ref, w_ref, *rest, kh, kw, ho, wo, sc_tap):
    """Stride-1 valid kh x kw conv (one image/step) + per-image BN partials.

    The conv is accumulated as kh*kw shifted (ho*wo, Cin) @ (Cin, Cout) MXU
    dots in f32, per-tap windows are REF-sliced (only the window is loaded).
    If sc_tap is not None, the 1x1 projection-shortcut conv is fused in,
    reusing the window of tap `sc_tap` that is already in VMEM.
    """
    has_sc = sc_tap is not None
    if has_sc:
        ws_ref = rest[0]
        y_ref, s_ref, q_ref, ys_ref, ss_ref, qs_ref = rest[1:]
    else:
        y_ref, s_ref, q_ref = rest

    cin = x_ref.shape[-1]
    acc = None
    accs = None
    for dh in range(kh):
        for dw in range(kw):
            patch = x_ref[0, dh:dh + ho, dw:dw + wo, :].reshape(ho * wo, cin)
            part = jnp.dot(patch, w_ref[dh * kw + dw],
                           preferred_element_type=jnp.float32)
            acc = part if acc is None else acc + part
            if has_sc and dh * kw + dw == sc_tap:
                accs = jnp.dot(patch, ws_ref[...],
                               preferred_element_type=jnp.float32)

    y_ref[...] = acc.reshape(1, ho, wo, -1).astype(y_ref.dtype)
    s_ref[...] = jnp.sum(acc, axis=0).reshape(1, 1, -1)
    q_ref[...] = jnp.sum(acc * acc, axis=0).reshape(1, 1, -1)
    if has_sc:
        ys_ref[...] = accs.reshape(1, ho, wo, -1).astype(ys_ref.dtype)
        ss_ref[...] = jnp.sum(accs, axis=0).reshape(1, 1, -1)
        qs_ref[...] = jnp.sum(accs * accs, axis=0).reshape(1, 1, -1)


def _conv2_kernel(y1_ref, sc1_ref, bi1_ref, w2_ref, y2_ref, s2_ref, q2_ref,
                  a_pad, *, ho, wo):
    """Fused bn1+relu prologue + 3x3 stride-1 conv2 + per-image bn2 partials.

    The raw conv1 output tile is normalized with the precomputed per-channel
    scale/bias, relu'd, and written into the interior of a zero-bordered VMEM
    scratch, so no halo/pad pass ever touches HBM.
    """
    # Borders must be zero every step: the grid axis is "parallel" (megacore),
    # so a once-at-step-0 init is not safe.  The memset is VMEM-only and cheap.
    a_pad[...] = jnp.zeros_like(a_pad)
    act = jnp.maximum(y1_ref[0] * sc1_ref[0] + bi1_ref[0], 0.0)
    a_pad[1:ho + 1, 1:wo + 1, :] = act.astype(a_pad.dtype)

    cp = a_pad.shape[-1]
    acc = None
    for dh in range(3):
        for dw in range(3):
            patch = a_pad[dh:dh + ho, dw:dw + wo, :].reshape(ho * wo, cp)
            part = jnp.dot(patch, w2_ref[dh * 3 + dw],
                           preferred_element_type=jnp.float32)
            acc = part if acc is None else acc + part

    y2_ref[...] = acc.reshape(1, ho, wo, -1).astype(y2_ref.dtype)
    s2_ref[...] = jnp.sum(acc, axis=0).reshape(1, 1, -1)
    q2_ref[...] = jnp.sum(acc * acc, axis=0).reshape(1, 1, -1)


def _final_proj_kernel(y2_ref, sc2_ref, bi2_ref, r_ref, scs_ref, bis_ref,
                       out_ref, *pre_ref):
    # bn2 + shortcut-bn + residual add + relu; `pre` only when requested.
    pre = (y2_ref[...] * sc2_ref[0] + bi2_ref[0]
           + r_ref[...] * scs_ref[0] + bis_ref[0])
    out_ref[...] = jnp.maximum(pre, 0.0).astype(out_ref.dtype)
    if pre_ref:
        pre_ref[0][...] = pre.astype(pre_ref[0].dtype)


def _final_ident_kernel(y2_ref, sc2_ref, bi2_ref, x_ref, out_ref, *pre_ref,
                        ho, wo):
    # Identity residual is the interior crop of the (halo'd, channel-padded)
    # conv1 input -- no extra residual copy in HBM.
    resid = x_ref[0, 1:ho + 1, 1:wo + 1, :].astype(jnp.float32)
    pre = y2_ref[...] * sc2_ref[0] + bi2_ref[0] + resid[None]
    out_ref[...] = jnp.maximum(pre, 0.0).astype(out_ref.dtype)
    if pre_ref:
        pre_ref[0][...] = pre.astype(pre_ref[0].dtype)


# ------------------------------ pallas_call glue -----------------------------

def _conv1_call(xin, w_taps, ws_full, kh, kw, ho, wo, sc_tap, store_dtype):
    n, hi, wi, cinp = xin.shape
    coutp = w_taps.shape[-1]
    has_sc = ws_full is not None

    x_spec = pl.BlockSpec((1, hi, wi, cinp), lambda i: (i, 0, 0, 0))
    w_spec = pl.BlockSpec((kh * kw, cinp, coutp), lambda i: (0, 0, 0))
    y_spec = pl.BlockSpec((1, ho, wo, coutp), lambda i: (i, 0, 0, 0))
    p_spec = pl.BlockSpec((1, 1, coutp), lambda i: (i, 0, 0))

    in_specs = [x_spec, w_spec]
    inputs = [xin, w_taps]
    y_shape = jax.ShapeDtypeStruct((n, ho, wo, coutp), store_dtype)
    p_shape = jax.ShapeDtypeStruct((n, 1, coutp), jnp.float32)
    out_specs = [y_spec, p_spec, p_spec]
    out_shape = [y_shape, p_shape, p_shape]
    if has_sc:
        in_specs.append(pl.BlockSpec((cinp, coutp), lambda i: (0, 0)))
        inputs.append(ws_full)
        out_specs += [y_spec, p_spec, p_spec]
        out_shape += [y_shape, p_shape, p_shape]

    store_bytes = np.dtype(store_dtype).itemsize
    flops = 2 * n * ho * wo * cinp * coutp * (kh * kw + (1 if has_sc else 0))
    bytes_accessed = (sum(a.size * a.dtype.itemsize for a in inputs)
                      + (1 + int(has_sc)) * n * ho * wo * coutp * store_bytes
                      + (2 + 2 * int(has_sc)) * n * coutp * 4)
    return pl.pallas_call(
        functools.partial(_conv1_kernel, kh=kh, kw=kw, ho=ho, wo=wo,
                          sc_tap=(sc_tap if has_sc else None)),
        grid=(n,),
        in_specs=in_specs,
        out_specs=tuple(out_specs),
        out_shape=tuple(out_shape),
        compiler_params=pltpu.CompilerParams(
            dimension_semantics=("parallel",),      # per-step BN partials
            vmem_limit_bytes=VMEM_LIMIT),
        cost_estimate=pl.CostEstimate(flops=flops, transcendentals=0,
                                      bytes_accessed=bytes_accessed),
    )(*inputs)


def _conv2_call(y1, sc1, bi1, w2_taps, ho, wo):
    n, _, _, cp = y1.shape
    coutp = w2_taps.shape[-1]
    store_dtype = y1.dtype

    t_spec = pl.BlockSpec((1, ho, wo, cp), lambda i: (i, 0, 0, 0))
    v_spec = pl.BlockSpec((1, cp), lambda i: (0, 0))
    w_spec = pl.BlockSpec((9, cp, coutp), lambda i: (0, 0, 0))
    p_spec = pl.BlockSpec((1, 1, coutp), lambda i: (i, 0, 0))

    store_bytes = np.dtype(store_dtype).itemsize
    flops = 2 * n * ho * wo * 9 * cp * coutp
    bytes_accessed = (y1.size * y1.dtype.itemsize
                      + w2_taps.size * w2_taps.dtype.itemsize
                      + n * ho * wo * coutp * store_bytes
                      + 2 * n * coutp * 4 + 2 * cp * 4)
    return pl.pallas_call(
        functools.partial(_conv2_kernel, ho=ho, wo=wo),
        grid=(n,),
        in_specs=[t_spec, v_spec, v_spec, w_spec],
        out_specs=(pl.BlockSpec((1, ho, wo, coutp), lambda i: (i, 0, 0, 0)),
                   p_spec, p_spec),
        out_shape=(jax.ShapeDtypeStruct((n, ho, wo, coutp), store_dtype),
                   jax.ShapeDtypeStruct((n, 1, coutp), jnp.float32),
                   jax.ShapeDtypeStruct((n, 1, coutp), jnp.float32)),
        scratch_shapes=[pltpu.VMEM((ho + 2, wo + 2, cp), store_dtype)],
        compiler_params=pltpu.CompilerParams(
            dimension_semantics=("parallel",),
            vmem_limit_bytes=VMEM_LIMIT),
        cost_estimate=pl.CostEstimate(flops=flops, transcendentals=0,
                                      bytes_accessed=bytes_accessed),
    )(y1, sc1, bi1, w2_taps)


def _final_proj_call(y2, sc2, bi2, ysc, scs, bis, is_last):
    n, ho, wo, cp = y2.shape
    t_spec = pl.BlockSpec((1, ho, wo, cp), lambda i: (i, 0, 0, 0))
    v_spec = pl.BlockSpec((1, cp), lambda i: (0, 0))
    out_shape = [jax.ShapeDtypeStruct((n, ho, wo, cp), jnp.float32)]
    out_specs = [t_spec]
    if is_last:
        out_shape.append(jax.ShapeDtypeStruct((n, ho, wo, cp), jnp.float32))
        out_specs.append(t_spec)
    res = pl.pallas_call(
        _final_proj_kernel,
        grid=(n,),
        in_specs=[t_spec, v_spec, v_spec, t_spec, v_spec, v_spec],
        out_specs=tuple(out_specs),
        out_shape=tuple(out_shape),
        compiler_params=pltpu.CompilerParams(
            dimension_semantics=("parallel",),
            vmem_limit_bytes=VMEM_LIMIT),
    )(y2, sc2, bi2, ysc, scs, bis)
    return res if is_last else res[0]


def _final_ident_call(y2, sc2, bi2, xin, is_last, ho, wo):
    n, _, _, cp = y2.shape
    assert xin.shape == (n, ho + 2, wo + 2, cp)
    t_spec = pl.BlockSpec((1, ho, wo, cp), lambda i: (i, 0, 0, 0))
    v_spec = pl.BlockSpec((1, cp), lambda i: (0, 0))
    x_spec = pl.BlockSpec((1, ho + 2, wo + 2, cp), lambda i: (i, 0, 0, 0))
    out_shape = [jax.ShapeDtypeStruct((n, ho, wo, cp), jnp.float32)]
    out_specs = [t_spec]
    if is_last:
        out_shape.append(jax.ShapeDtypeStruct((n, ho, wo, cp), jnp.float32))
        out_specs.append(t_spec)
    res = pl.pallas_call(
        functools.partial(_final_ident_kernel, ho=ho, wo=wo),
        grid=(n,),
        in_specs=[t_spec, v_spec, v_spec, x_spec],
        out_specs=tuple(out_specs),
        out_shape=tuple(out_shape),
        compiler_params=pltpu.CompilerParams(
            dimension_semantics=("parallel",),
            vmem_limit_bytes=VMEM_LIMIT),
    )(y2, sc2, bi2, xin)
    return res if is_last else res[0]


def _affine_from_partials(s, q, m_step, gamma_p, beta_p):
    # Welford-style merge of per-image partial sums / sums-of-squares into the
    # batch mean / biased variance, folded into per-channel scale/bias so the
    # normalization is a single FMA.  Padded channels have gamma = beta = 0.
    s = s.reshape(s.shape[0], -1)
    q = q.reshape(q.shape[0], -1)
    n = s.shape[0]
    mean_i = s / m_step
    mean = jnp.mean(mean_i, axis=0, keepdims=True)
    m2 = (jnp.sum(q - s * mean_i, axis=0, keepdims=True)
          + m_step * jnp.sum((mean_i - mean) ** 2, axis=0, keepdims=True))
    var = m2 / (n * m_step)
    scale = gamma_p * jax.lax.rsqrt(var + EPS)
    bias = beta_p - mean * scale
    return scale, bias


# -------------------------------- BasicBlock --------------------------------

def init_basic_block_params(key, in_planes, planes, stride):
    expansion = 1
    has_shortcut = (stride != 1) or (in_planes != expansion * planes)
    ks = jax.random.split(key, 9)
    p = {
        "w1": 0.1 * jax.random.normal(ks[0], (3, 3, in_planes, planes), jnp.float32),
        "g1": 1.0 + 0.1 * jax.random.normal(ks[1], (planes,), jnp.float32),
        "b1": 0.1 * jax.random.normal(ks[2], (planes,), jnp.float32),
        "w2": 0.1 * jax.random.normal(ks[3], (3, 3, planes, planes), jnp.float32),
        "g2": 1.0 + 0.1 * jax.random.normal(ks[4], (planes,), jnp.float32),
        "b2": 0.1 * jax.random.normal(ks[5], (planes,), jnp.float32),
    }
    if has_shortcut:
        p["ws"] = 0.1 * jax.random.normal(ks[6], (1, 1, in_planes, planes), jnp.float32)
        p["gs"] = 1.0 + 0.1 * jax.random.normal(ks[7], (planes,), jnp.float32)
        p["bs"] = 0.1 * jax.random.normal(ks[8], (planes,), jnp.float32)
    return p


def basic_block_forward(x_nchw, params, stride, is_last,
                        compute_dtype=jnp.bfloat16):
    # TODO(synk): keep the NHWC channel-padded layout across chained blocks at
    # the stage level instead of per-block NCHW<->NHWC transposes.
    x = jnp.transpose(x_nchw, (0, 2, 3, 1)).astype(jnp.float32)    # NCHW -> NHWC
    n, h, w, cin = x.shape
    planes = params["w1"].shape[-1]
    poutp = _rup(planes, LANE)
    has_sc = "ws" in params

    # ---- conv1 prep (stride-2 becomes a stride-1 2x2 conv via space-to-depth)
    if stride == 1:
        ho, wo = h, w
        cinp = _rup(cin, LANE)
        xin = _pad_last(jnp.pad(x, ((0, 0), (1, 1), (1, 1), (0, 0))),
                        cinp).astype(compute_dtype)
        w1 = _prep_w_taps(params["w1"], cinp, poutp, compute_dtype)
        kh = kw = 3
        sc_tap = 1 * kw + 1            # center tap window == x itself
        sc_row_off = 0
    elif stride == 2:
        assert h % 2 == 0 and w % 2 == 0, "stride-2 path assumes even H, W"
        ho, wo = h // 2, w // 2
        z = _space_to_depth2(jnp.pad(x, ((0, 0), (1, 1), (1, 1), (0, 0))))
        cinp = _rup(4 * cin, LANE)
        xin = _pad_last(z, cinp).astype(compute_dtype)
        w1 = _prep_w_taps(_weight_s2(params["w1"]), cinp, poutp, compute_dtype)
        kh = kw = 2
        sc_tap = 0                     # z[i,j, 3*cin:4*cin] == x[2i, 2j]
        sc_row_off = 3 * cin
    else:
        raise NotImplementedError("BasicBlock only uses stride 1 or 2")

    ws_full = None
    if has_sc:
        # 1x1 shortcut folded as a row-shifted (Cinp, Coutp) matmul against the
        # sc_tap window of xin (no separate strided shortcut input in HBM).
        ws = params["ws"].reshape(cin, planes)
        ws_full = jnp.zeros((cinp, poutp), jnp.float32)
        ws_full = ws_full.at[sc_row_off:sc_row_off + cin, :planes].set(ws)
        ws_full = ws_full.astype(compute_dtype)

    # ---- conv1 (+ fused 1x1 shortcut) + per-image BN partials ---------------
    conv1_out = _conv1_call(xin, w1, ws_full, kh, kw, ho, wo, sc_tap,
                            compute_dtype)
    if has_sc:
        y1, s1, q1, ysc, ssc, qsc = conv1_out
    else:
        y1, s1, q1 = conv1_out

    m_step = ho * wo
    g1 = _pad_last(params["g1"].reshape(1, planes), poutp)
    b1 = _pad_last(params["b1"].reshape(1, planes), poutp)
    sc1, bi1 = _affine_from_partials(s1, q1, m_step, g1, b1)

    # ---- conv2 with fused bn1+relu prologue + per-image bn2 partials --------
    w2 = _prep_w_taps(params["w2"], poutp, poutp, compute_dtype)
    y2, s2, q2 = _conv2_call(y1, sc1, bi1, w2, ho, wo)

    g2 = _pad_last(params["g2"].reshape(1, planes), poutp)
    b2 = _pad_last(params["b2"].reshape(1, planes), poutp)
    sc2, bi2 = _affine_from_partials(s2, q2, m_step, g2, b2)

    # ---- bn2 (+ shortcut bn) + residual add + relu ---------------------------
    if has_sc:
        gs = _pad_last(params["gs"].reshape(1, planes), poutp)
        bs = _pad_last(params["bs"].reshape(1, planes), poutp)
        scs, bis = _affine_from_partials(ssc, qsc, m_step, gs, bs)
        outs = _final_proj_call(y2, sc2, bi2, ysc, scs, bis, is_last)
    else:
        assert stride == 1 and cin == planes
        outs = _final_ident_call(y2, sc2, bi2, xin, is_last, ho, wo)

    to_nchw = lambda t: jnp.transpose(t[..., :planes], (0, 3, 1, 2))
    if is_last:
        out_p, pre_p = outs
        return to_nchw(out_p), to_nchw(pre_p)
    return to_nchw(outs)


# ------------------------- pure-JAX reference check --------------------------

def _ref_bn(x, gamma, beta):  # x NHWC, training-mode BN, biased variance
    mean = jnp.mean(x, axis=(0, 1, 2), keepdims=True)
    var = jnp.mean((x - mean) ** 2, axis=(0, 1, 2), keepdims=True)
    return (x - mean) * jax.lax.rsqrt(var + EPS) * gamma + beta


def _ref_conv(x, w, stride, padding, compute_dtype):  # x NHWC, w HWIO
    return jax.lax.conv_general_dilated(
        x.astype(compute_dtype), w.astype(compute_dtype),
        (stride, stride), [(padding, padding), (padding, padding)],
        dimension_numbers=("NHWC", "HWIO", "NHWC"),
        preferred_element_type=jnp.float32)


def basic_block_reference(x_nchw, params, stride, is_last,
                          compute_dtype=jnp.bfloat16):
    x = jnp.transpose(x_nchw, (0, 2, 3, 1)).astype(jnp.float32)
    out = jnp.maximum(_ref_bn(_ref_conv(x, params["w1"], stride, 1, compute_dtype),
                              params["g1"], params["b1"]), 0.0)
    out = _ref_bn(_ref_conv(out, params["w2"], 1, 1, compute_dtype),
                  params["g2"], params["b2"])
    if "ws" in params:
        sc = _ref_bn(_ref_conv(x, params["ws"], stride, 0, compute_dtype),
                     params["gs"], params["bs"])
    else:
        sc = x
    pre = out + sc
    out = jnp.maximum(pre, 0.0)
    to_nchw = lambda t: jnp.transpose(t, (0, 3, 1, 2))
    return (to_nchw(out), to_nchw(pre)) if is_last else to_nchw(out)


# ---------------------------------- main -------------------------------------

if __name__ == "__main__":
    key = jax.random.PRNGKey(0)
    kx1, kx2, kp1, kp2 = jax.random.split(key, 4)

    # Case 1: stride-2 downsampling block (projection shortcut), is_last=True.
    x1 = jax.random.normal(kx1, (2, 4, 16, 16), jnp.float32)      # NCHW input
    params1 = init_basic_block_params(kp1, in_planes=4, planes=8, stride=2)
    fwd1 = jax.jit(functools.partial(basic_block_forward, stride=2, is_last=True))
    out1, pre1 = fwd1(x1, params1)
    jax.block_until_ready((out1, pre1))
    ref_out1, ref_pre1 = basic_block_reference(x1, params1, 2, True)
    assert out1.shape == (2, 8, 8, 8) and pre1.shape == (2, 8, 8, 8)
    assert jnp.allclose(out1, ref_out1, atol=3e-2, rtol=3e-2)
    assert jnp.allclose(pre1, ref_pre1, atol=3e-2, rtol=3e-2)

    # Case 2: identity shortcut (stride=1, in_planes == planes), is_last=False.
    x2 = jax.random.normal(kx2, (2, 8, 16, 16), jnp.float32)
    params2 = init_basic_block_params(kp2, in_planes=8, planes=8, stride=1)
    fwd2 = jax.jit(functools.partial(basic_block_forward, stride=1, is_last=False))
    out2 = fwd2(x2, params2)
    jax.block_until_ready(out2)
    ref_out2 = basic_block_reference(x2, params2, 1, False)
    assert out2.shape == (2, 8, 16, 16)
    assert jnp.allclose(out2, ref_out2, atol=3e-2, rtol=3e-2)

    # Case 3: same kernels on the f32 compute path.
    fwd3 = jax.jit(functools.partial(basic_block_forward, stride=1, is_last=False,
                                     compute_dtype=jnp.float32))
    out3 = fwd3(x2, params2)
    jax.block_until_ready(out3)
    ref_out3 = basic_block_reference(x2, params2, 1, False, jnp.float32)
    assert jnp.allclose(out3, ref_out3, atol=2e-2, rtol=2e-2)

    print("KERNEL_OK")
</pallas_src>

<mosaic_0001>
module attributes {stable_mosaic.version = 11 : i64} {
  func.func @_conv1_kernel(%arg0: i32, %arg1: memref<1x9x9x128xbf16, #tpu.memory_space<vmem>>, %arg2: memref<4x128x128xbf16, #tpu.memory_space<vmem>>, %arg3: memref<128x128xbf16, #tpu.memory_space<vmem>>, %arg4: memref<1x8x8x128xbf16, #tpu.memory_space<vmem>>, %arg5: memref<1x1x128xf32, #tpu.memory_space<vmem>>, %arg6: memref<1x1x128xf32, #tpu.memory_space<vmem>>, %arg7: memref<1x8x8x128xbf16, #tpu.memory_space<vmem>>, %arg8: memref<1x1x128xf32, #tpu.memory_space<vmem>>, %arg9: memref<1x1x128xf32, #tpu.memory_space<vmem>>) attributes {dimension_semantics = [#tpu.dimension_semantics<parallel>], iteration_bounds = array<i64: 2>, scalar_prefetch = 0 : i64, scratch_operands = 0 : i64, tpu.core_type = #tpu.core_type<tc>, window_params = [{transform_indices = @transform_0, window_bounds = array<i64: 1, 9, 9, 128>}, {pipeline_mode = #tpu.pipeline_mode<synchronous>, transform_indices = @transform_1, window_bounds = array<i64: 4, 128, 128>}, {pipeline_mode = #tpu.pipeline_mode<synchronous>, transform_indices = @transform_2, window_bounds = array<i64: 128, 128>}, {transform_indices = @transform_3, window_bounds = array<i64: 1, 8, 8, 128>}, {transform_indices = @transform_4, window_bounds = array<i64: 1, 1, 128>}, {transform_indices = @transform_5, window_bounds = array<i64: 1, 1, 128>}, {transform_indices = @transform_6, window_bounds = array<i64: 1, 8, 8, 128>}, {transform_indices = @transform_7, window_bounds = array<i64: 1, 1, 128>}, {transform_indices = @transform_8, window_bounds = array<i64: 1, 1, 128>}]} {
    %c0 = arith.constant 0 : index
    %c0_0 = arith.constant 0 : index
    %c0_1 = arith.constant 0 : index
    %c0_2 = arith.constant 0 : index
    %0 = vector.load %arg1[%c0, %c0_0, %c0_1, %c0_2] : memref<1x9x9x128xbf16, #tpu.memory_space<vmem>>, vector<1x8x8x128xbf16>
    %1 = vector.shape_cast %0 : vector<1x8x8x128xbf16> to vector<8x8x128xbf16>
    %2 = vector.shape_cast %1 : vector<8x8x128xbf16> to vector<64x128xbf16>
    %c0_3 = arith.constant 0 : index
    %c0_4 = arith.constant 0 : index
    %c0_5 = arith.constant 0 : index
    %3 = vector.load %arg2[%c0_3, %c0_4, %c0_5] : memref<4x128x128xbf16, #tpu.memory_space<vmem>>, vector<1x128x128xbf16>
    %4 = vector.shape_cast %3 : vector<1x128x128xbf16> to vector<128x128xbf16>
    %cst = arith.constant dense<0.000000e+00> : vector<64x128xf32>
    %5 = tpu.matmul %2, %4, %cst {dimension_numbers = #tpu.dot_dimension_numbers<[1], [0], [0], [1], [0, 0, 1, 1], [], []>} : vector<64x128xbf16>, vector<128x128xbf16>, vector<64x128xf32> -> vector<64x128xf32>
    %c0_6 = arith.constant 0 : index
    %c0_7 = arith.constant 0 : index
    %6 = vector.load %arg3[%c0_6, %c0_7] : memref<128x128xbf16, #tpu.memory_space<vmem>>, vector<128x128xbf16>
    %cst_8 = arith.constant dense<0.000000e+00> : vector<64x128xf32>
    %7 = tpu.matmul %2, %6, %cst_8 {dimension_numbers = #tpu.dot_dimension_numbers<[1], [0], [0], [1], [0, 0, 1, 1], [], []>} : vector<64x128xbf16>, vector<128x128xbf16>, vector<64x128xf32> -> vector<64x128xf32>
    %c0_9 = arith.constant 0 : index
    %c0_10 = arith.constant 0 : index
    %c1 = arith.constant 1 : index
    %c0_11 = arith.constant 0 : index
    %8 = vector.load %arg1[%c0_9, %c0_10, %c1, %c0_11] : memref<1x9x9x128xbf16, #tpu.memory_space<vmem>>, vector<1x8x8x128xbf16>
    %9 = vector.shape_cast %8 : vector<1x8x8x128xbf16> to vector<8x8x128xbf16>
    %10 = vector.shape_cast %9 : vector<8x8x128xbf16> to vector<64x128xbf16>
    %c1_12 = arith.constant 1 : index
    %c0_13 = arith.constant 0 : index
    %c0_14 = arith.constant 0 : index
    %11 = vector.load %arg2[%c1_12, %c0_13, %c0_14] : memref<4x128x128xbf16, #tpu.memory_space<vmem>>, vector<1x128x128xbf16>
    %12 = vector.shape_cast %11 : vector<1x128x128xbf16> to vector<128x128xbf16>
    %cst_15 = arith.constant dense<0.000000e+00> : vector<64x128xf32>
    %13 = tpu.matmul %10, %12, %cst_15 {dimension_numbers = #tpu.dot_dimension_numbers<[1], [0], [0], [1], [0, 0, 1, 1], [], []>} : vector<64x128xbf16>, vector<128x128xbf16>, vector<64x128xf32> -> vector<64x128xf32>
    %14 = arith.addf %5, %13 : vector<64x128xf32>
    %c0_16 = arith.constant 0 : index
    %c1_17 = arith.constant 1 : index
    %c0_18 = arith.constant 0 : index
    %c0_19 = arith.constant 0 : index
    %15 = vector.load %arg1[%c0_16, %c1_17, %c0_18, %c0_19] : memref<1x9x9x128xbf16, #tpu.memory_space<vmem>>, vector<1x8x8x128xbf16>
    %16 = vector.shape_cast %15 : vector<1x8x8x128xbf16> to vector<8x8x128xbf16>
    %17 = vector.shape_cast %16 : vector<8x8x128xbf16> to vector<64x128xbf16>
    %c2 = arith.constant 2 : index
    %c0_20 = arith.constant 0 : index
    %c0_21 = arith.constant 0 : index
    %18 = vector.load %arg2[%c2, %c0_20, %c0_21] : memref<4x128x128xbf16, #tpu.memory_space<vmem>>, vector<1x128x128xbf16>
    %19 = vector.shape_cast %18 : vector<1x128x128xbf16> to vector<128x128xbf16>
    %cst_22 = arith.constant dense<0.000000e+00> : vector<64x128xf32>
    %20 = tpu.matmul %17, %19, %cst_22 {dimension_numbers = #tpu.dot_dimension_numbers<[1], [0], [0], [1], [0, 0, 1, 1], [], []>} : vector<64x128xbf16>, vector<128x128xbf16>, vector<64x128xf32> -> vector<64x128xf32>
    %21 = arith.addf %14, %20 : vector<64x128xf32>
    %c0_23 = arith.constant 0 : index
    %c1_24 = arith.constant 1 : index
    %c1_25 = arith.constant 1 : index
    %c0_26 = arith.constant 0 : index
    %22 = vector.load %arg1[%c0_23, %c1_24, %c1_25, %c0_26] : memref<1x9x9x128xbf16, #tpu.memory_space<vmem>>, vector<1x8x8x128xbf16>
    %23 = vector.shape_cast %22 : vector<1x8x8x128xbf16> to vector<8x8x128xbf16>
    %24 = vector.shape_cast %23 : vector<8x8x128xbf16> to vector<64x128xbf16>
    %c3 = arith.constant 3 : index
    %c0_27 = arith.constant 0 : index
    %c0_28 = arith.constant 0 : index
    %25 = vector.load %arg2[%c3, %c0_27, %c0_28] : memref<4x128x128xbf16, #tpu.memory_space<vmem>>, vector<1x128x128xbf16>
    %26 = vector.shape_cast %25 : vector<1x128x128xbf16> to vector<128x128xbf16>
    %cst_29 = arith.constant dense<0.000000e+00> : vector<64x128xf32>
    %27 = tpu.matmul %24, %26, %cst_29 {dimension_numbers = #tpu.dot_dimension_numbers<[1], [0], [0], [1], [0, 0, 1, 1], [], []>} : vector<64x128xbf16>, vector<128x128xbf16>, vector<64x128xf32> -> vector<64x128xf32>
    %28 = arith.addf %21, %27 : vector<64x128xf32>
    %29 = vector.shape_cast %28 : vector<64x128xf32> to vector<1x8x8x128xf32>
    %30 = arith.truncf %29 : vector<1x8x8x128xf32> to vector<1x8x8x128xbf16>
    %c0_30 = arith.constant 0 : index
    %c0_31 = arith.constant 0 : index
    %c0_32 = arith.constant 0 : index
    %c0_33 = arith.constant 0 : index
    %31 = vector.load %arg4[%c0_30, %c0_31, %c0_32, %c0_33] : memref<1x8x8x128xbf16, #tpu.memory_space<vmem>>, vector<1x8x8x128xbf16>
    tpu.vector_store %arg4[%c0_30, %c0_31, %c0_32, %c0_33], %30 {strides = array<i32>} : memref<1x8x8x128xbf16, #tpu.memory_space<vmem>>, vector<1x8x8x128xbf16>,
    %cst_34 = arith.constant dense<0.000000e+00> : vector<128xf32>
    %32 = vector.multi_reduction <add>, %28, %cst_34 [0] : vector<64x128xf32> to vector<128xf32>
    %33 = vector.shape_cast %32 : vector<128xf32> to vector<1x1x128xf32>
    %c0_35 = arith.constant 0 : index
    %c0_36 = arith.constant 0 : index
    %c0_37 = arith.constant 0 : index
    %34 = vector.load %arg5[%c0_35, %c0_36, %c0_37] : memref<1x1x128xf32, #tpu.memory_space<vmem>>, vector<1x1x128xf32>
    tpu.vector_store %arg5[%c0_35, %c0_36, %c0_37], %33 {strides = array<i32>} : memref<1x1x128xf32, #tpu.memory_space<vmem>>, vector<1x1x128xf32>,
    %35 = arith.mulf %28, %28 : vector<64x128xf32>
    %cst_38 = arith.constant dense<0.000000e+00> : vector<128xf32>
    %36 = vector.multi_reduction <add>, %35, %cst_38 [0] : vector<64x128xf32> to vector<128xf32>
    %37 = vector.shape_cast %36 : vector<128xf32> to vector<1x1x128xf32>
    %c0_39 = arith.constant 0 : index
    %c0_40 = arith.constant 0 : index
    %c0_41 = arith.constant 0 : index
    %38 = vector.load %arg6[%c0_39, %c0_40, %c0_41] : memref<1x1x128xf32, #tpu.memory_space<vmem>>, vector<1x1x128xf32>
    tpu.vector_store %arg6[%c0_39, %c0_40, %c0_41], %37 {strides = array<i32>} : memref<1x1x128xf32, #tpu.memory_space<vmem>>, vector<1x1x128xf32>,
    %39 = vector.shape_cast %7 : vector<64x128xf32> to vector<1x8x8x128xf32>
    %40 = arith.truncf %39 : vector<1x8x8x128xf32> to vector<1x8x8x128xbf16>
    %c0_42 = arith.constant 0 : index
    %c0_43 = arith.constant 0 : index
    %c0_44 = arith.constant 0 : index
    %c0_45 = arith.constant 0 : index
    %41 = vector.load %arg7[%c0_42, %c0_43, %c0_44, %c0_45] : memref<1x8x8x128xbf16, #tpu.memory_space<vmem>>, vector<1x8x8x128xbf16>
    tpu.vector_store %arg7[%c0_42, %c0_43, %c0_44, %c0_45], %40 {strides = array<i32>} : memref<1x8x8x128xbf16, #tpu.memory_space<vmem>>, vector<1x8x8x128xbf16>,
    %cst_46 = arith.constant dense<0.000000e+00> : vector<128xf32>
    %42 = vector.multi_reduction <add>, %7, %cst_46 [0] : vector<64x128xf32> to vector<128xf32>
    %43 = vector.shape_cast %42 : vector<128xf32> to vector<1x1x128xf32>
    %c0_47 = arith.constant 0 : index
    %c0_48 = arith.constant 0 : index
    %c0_49 = arith.constant 0 : index
    %44 = vector.load %arg8[%c0_47, %c0_48, %c0_49] : memref<1x1x128xf32, #tpu.memory_space<vmem>>, vector<1x1x128xf32>
    tpu.vector_store %arg8[%c0_47, %c0_48, %c0_49], %43 {strides = array<i32>} : memref<1x1x128xf32, #tpu.memory_space<vmem>>, vector<1x1x128xf32>,
    %45 = arith.mulf %7, %7 : vector<64x128xf32>
    %cst_50 = arith.constant dense<0.000000e+00> : vector<128xf32>
    %46 = vector.multi_reduction <add>, %45, %cst_50 [0] : vector<64x128xf32> to vector<128xf32>
    %47 = vector.shape_cast %46 : vector<128xf32> to vector<1x1x128xf32>
    %c0_51 = arith.constant 0 : index
    %c0_52 = arith.constant 0 : index
    %c0_53 = arith.constant 0 : index
    %48 = vector.load %arg9[%c0_51, %c0_52, %c0_53] : memref<1x1x128xf32, #tpu.memory_space<vmem>>, vector<1x1x128xf32>
    tpu.vector_store %arg9[%c0_51, %c0_52, %c0_53], %47 {strides = array<i32>} : memref<1x1x128xf32, #tpu.memory_space<vmem>>, vector<1x1x128xf32>,
    return
  }
  func.func @transform_0(%arg0: i32) -> (i32, i32, i32, i32) {
    %c0_i32 = arith.constant 0 : i32
    %c0_i32_0 = arith.constant 0 : i32
    %c0_i32_1 = arith.constant 0 : i32
    %c0_i32_2 = arith.constant 0 : i32
    return %arg0, %c0_i32, %c0_i32_0, %c0_i32_1 : i32, i32, i32, i32
  }
  func.func @transform_1(%arg0: i32) -> (i32, i32, i32) {
    %c0_i32 = arith.constant 0 : i32
    %c0_i32_0 = arith.constant 0 : i32
    %c0_i32_1 = arith.constant 0 : i32
    %c0_i32_2 = arith.constant 0 : i32
    return %c0_i32, %c0_i32_0, %c0_i32_1 : i32, i32, i32
  }
  func.func @transform_2(%arg0: i32) -> (i32, i32) {
    %c0_i32 = arith.constant 0 : i32
    %c0_i32_0 = arith.constant 0 : i32
    %c0_i32_1 = arith.constant 0 : i32
    return %c0_i32, %c0_i32_0 : i32, i32
  }
  func.func @transform_3(%arg0: i32) -> (i32, i32, i32, i32) {
    %c0_i32 = arith.constant 0 : i32
    %c0_i32_0 = arith.constant 0 : i32
    %c0_i32_1 = arith.constant 0 : i32
    %c0_i32_2 = arith.constant 0 : i32
    return %arg0, %c0_i32, %c0_i32_0, %c0_i32_1 : i32, i32, i32, i32
  }
  func.func @transform_4(%arg0: i32) -> (i32, i32, i32) {
    %c0_i32 = arith.constant 0 : i32
    %c0_i32_0 = arith.constant 0 : i32
    %c0_i32_1 = arith.constant 0 : i32
    return %arg0, %c0_i32, %c0_i32_0 : i32, i32, i32
  }
  func.func @transform_5(%arg0: i32) -> (i32, i32, i32) {
    %c0_i32 = arith.constant 0 : i32
    %c0_i32_0 = arith.constant 0 : i32
    %c0_i32_1 = arith.constant 0 : i32
    return %arg0, %c0_i32, %c0_i32_0 : i32, i32, i32
  }
  func.func @transform_6(%arg0: i32) -> (i32, i32, i32, i32) {
    %c0_i32 = arith.constant 0 : i32
    %c0_i32_0 = arith.constant 0 : i32
    %c0_i32_1 = arith.constant 0 : i32
    %c0_i32_2 = arith.constant 0 : i32
    return %arg0, %c0_i32, %c0_i32_0, %c0_i32_1 : i32, i32, i32, i32
  }
  func.func @transform_7(%arg0: i32) -> (i32, i32, i32) {
    %c0_i32 = arith.constant 0 : i32
    %c0_i32_0 = arith.constant 0 : i32
    %c0_i32_1 = arith.constant 0 : i32
    return %arg0, %c0_i32, %c0_i32_0 : i32, i32, i32
  }
  func.func @transform_8(%arg0: i32) -> (i32, i32, i32) {
    %c0_i32 = arith.constant 0 : i32
    %c0_i32_0 = arith.constant 0 : i32
    %c0_i32_1 = arith.constant 0 : i32
    return %arg0, %c0_i32, %c0_i32_0 : i32, i32, i32
  }
}

module attributes {stable_mosaic.version = 11 : i64} {
  func.func @_final_proj_kernel(%arg0: i32, %arg1: memref<1x8x8x128xbf16, #tpu.memory_space<vmem>>, %arg2: memref<1x128xf32, #tpu.memory_space<vmem>>, %arg3: memref<1x128xf32, #tpu.memory_space<vmem>>, %arg4: memref<1x8x8x128xbf16, #tpu.memory_space<vmem>>, %arg5: memref<1x128xf32, #tpu.memory_space<vmem>>, %arg6: memref<1x128xf32, #tpu.memory_space<vmem>>, %arg7: memref<1x8x8x128xf32, #tpu.memory_space<vmem>>, %arg8: memref<1x8x8x128xf32, #tpu.memory_space<vmem>>) attributes {dimension_semantics = [#tpu.dimension_semantics<parallel>], iteration_bounds = array<i64: 2>, scalar_prefetch = 0 : i64, scratch_operands = 0 : i64, tpu.core_type = #tpu.core_type<tc>, window_params = [{transform_indices = @transform_0, window_bounds = array<i64: 1, 8, 8, 128>}, {pipeline_mode = #tpu.pipeline_mode<synchronous>, transform_indices = @transform_1, window_bounds = array<i64: 1, 128>}, {pipeline_mode = #tpu.pipeline_mode<synchronous>, transform_indices = @transform_2, window_bounds = array<i64: 1, 128>}, {transform_indices = @transform_3, window_bounds = array<i64: 1, 8, 8, 128>}, {pipeline_mode = #tpu.pipeline_mode<synchronous>, transform_indices = @transform_4, window_bounds = array<i64: 1, 128>}, {pipeline_mode = #tpu.pipeline_mode<synchronous>, transform_indices = @transform_5, window_bounds = array<i64: 1, 128>}, {transform_indices = @transform_6, window_bounds = array<i64: 1, 8, 8, 128>}, {transform_indices = @transform_7, window_bounds = array<i64: 1, 8, 8, 128>}]} {
    %c0 = arith.constant 0 : index
    %c0_0 = arith.constant 0 : index
    %c0_1 = arith.constant 0 : index
    %c0_2 = arith.constant 0 : index
    %0 = vector.load %arg1[%c0, %c0_0, %c0_1, %c0_2] : memref<1x8x8x128xbf16, #tpu.memory_space<vmem>>, vector<1x8x8x128xbf16>
    %c0_3 = arith.constant 0 : index
    %c0_4 = arith.constant 0 : index
    %1 = vector.load %arg2[%c0_3, %c0_4] : memref<1x128xf32, #tpu.memory_space<vmem>>, vector<1x128xf32>
    %2 = vector.shape_cast %1 : vector<1x128xf32> to vector<128xf32>
    %3 = arith.extf %0 : vector<1x8x8x128xbf16> to vector<1x8x8x128xf32>
    %4 = vector.shape_cast %2 : vector<128xf32> to vector<1x1x1x128xf32>
    %5 = vector.broadcast %4 : vector<1x1x1x128xf32> to vector<1x8x8x128xf32>
    %6 = arith.mulf %3, %5 : vector<1x8x8x128xf32>
    %c0_5 = arith.constant 0 : index
    %c0_6 = arith.constant 0 : index
    %7 = vector.load %arg3[%c0_5, %c0_6] : memref<1x128xf32, #tpu.memory_space<vmem>>, vector<1x128xf32>
    %8 = vector.shape_cast %7 : vector<1x128xf32> to vector<128xf32>
    %9 = vector.shape_cast %8 : vector<128xf32> to vector<1x1x1x128xf32>
    %10 = vector.broadcast %9 : vector<1x1x1x128xf32> to vector<1x8x8x128xf32>
    %11 = arith.addf %6, %10 : vector<1x8x8x128xf32>
    %c0_7 = arith.constant 0 : index
    %c0_8 = arith.constant 0 : index
    %c0_9 = arith.constant 0 : index
    %c0_10 = arith.constant 0 : index
    %12 = vector.load %arg4[%c0_7, %c0_8, %c0_9, %c0_10] : memref<1x8x8x128xbf16, #tpu.memory_space<vmem>>, vector<1x8x8x128xbf16>
    %c0_11 = arith.constant 0 : index
    %c0_12 = arith.constant 0 : index
    %13 = vector.load %arg5[%c0_11, %c0_12] : memref<1x128xf32, #tpu.memory_space<vmem>>, vector<1x128xf32>
    %14 = vector.shape_cast %13 : vector<1x128xf32> to vector<128xf32>
    %15 = arith.extf %12 : vector<1x8x8x128xbf16> to vector<1x8x8x128xf32>
    %16 = vector.shape_cast %14 : vector<128xf32> to vector<1x1x1x128xf32>
    %17 = vector.broadcast %16 : vector<1x1x1x128xf32> to vector<1x8x8x128xf32>
    %18 = arith.mulf %15, %17 : vector<1x8x8x128xf32>
    %19 = arith.addf %11, %18 : vector<1x8x8x128xf32>
    %c0_13 = arith.constant 0 : index
    %c0_14 = arith.constant 0 : index
    %20 = vector.load %arg6[%c0_13, %c0_14] : memref<1x128xf32, #tpu.memory_space<vmem>>, vector<1x128xf32>
    %21 = vector.shape_cast %20 : vector<1x128xf32> to vector<128xf32>
    %22 = vector.shape_cast %21 : vector<128xf32> to vector<1x1x1x128xf32>
    %23 = vector.broadcast %22 : vector<1x1x1x128xf32> to vector<1x8x8x128xf32>
    %24 = arith.addf %19, %23 : vector<1x8x8x128xf32>
    %cst = arith.constant 0.000000e+00 : f32
    %25 = vector.broadcast %cst : f32 to vector<1x8x8x128xf32>
    %26 = arith.maximumf %24, %25 : vector<1x8x8x128xf32>
    %c0_15 = arith.constant 0 : index
    %c0_16 = arith.constant 0 : index
    %c0_17 = arith.constant 0 : index
    %c0_18 = arith.constant 0 : index
    %27 = vector.load %arg7[%c0_15, %c0_16, %c0_17, %c0_18] : memref<1x8x8x128xf32, #tpu.memory_space<vmem>>, vector<1x8x8x128xf32>
    tpu.vector_store %arg7[%c0_15, %c0_16, %c0_17, %c0_18], %26 {strides = array<i32>} : memref<1x8x8x128xf32, #tpu.memory_space<vmem>>, vector<1x8x8x128xf32>,
    %c0_19 = arith.constant 0 : index
    %c0_20 = arith.constant 0 : index
    %c0_21 = arith.constant 0 : index
    %c0_22 = arith.constant 0 : index
    %28 = vector.load %arg8[%c0_19, %c0_20, %c0_21, %c0_22] : memref<1x8x8x128xf32, #tpu.memory_space<vmem>>, vector<1x8x8x128xf32>
    tpu.vector_store %arg8[%c0_19, %c0_20, %c0_21, %c0_22], %24 {strides = array<i32>} : memref<1x8x8x128xf32, #tpu.memory_space<vmem>>, vector<1x8x8x128xf32>,
    return
  }
  func.func @transform_0(%arg0: i32) -> (i32, i32, i32, i32) {
    %c0_i32 = arith.constant 0 : i32
    %c0_i32_0 = arith.constant 0 : i32
    %c0_i32_1 = arith.constant 0 : i32
    %c0_i32_2 = arith.constant 0 : i32
    return %arg0, %c0_i32, %c0_i32_0, %c0_i32_1 : i32, i32, i32, i32
  }
  func.func @transform_1(%arg0: i32) -> (i32, i32) {
    %c0_i32 = arith.constant 0 : i32
    %c0_i32_0 = arith.constant 0 : i32
    %c0_i32_1 = arith.constant 0 : i32
    return %c0_i32, %c0_i32_0 : i32, i32
  }
  func.func @transform_2(%arg0: i32) -> (i32, i32) {
    %c0_i32 = arith.constant 0 : i32
    %c0_i32_0 = arith.constant 0 : i32
    %c0_i32_1 = arith.constant 0 : i32
    return %c0_i32, %c0_i32_0 : i32, i32
  }
  func.func @transform_3(%arg0: i32) -> (i32, i32, i32, i32) {
    %c0_i32 = arith.constant 0 : i32
    %c0_i32_0 = arith.constant 0 : i32
    %c0_i32_1 = arith.constant 0 : i32
    %c0_i32_2 = arith.constant 0 : i32
    return %arg0, %c0_i32, %c0_i32_0, %c0_i32_1 : i32, i32, i32, i32
  }
  func.func @transform_4(%arg0: i32) -> (i32, i32) {
    %c0_i32 = arith.constant 0 : i32
    %c0_i32_0 = arith.constant 0 : i32
    %c0_i32_1 = arith.constant 0 : i32
    return %c0_i32, %c0_i32_0 : i32, i32
  }
  func.func @transform_5(%arg0: i32) -> (i32, i32) {
    %c0_i32 = arith.constant 0 : i32
    %c0_i32_0 = arith.constant 0 : i32
    %c0_i32_1 = arith.constant 0 : i32
    return %c0_i32, %c0_i32_0 : i32, i32
  }
  func.func @transform_6(%arg0: i32) -> (i32, i32, i32, i32) {
    %c0_i32 = arith.constant 0 : i32
    %c0_i32_0 = arith.constant 0 : i32
    %c0_i32_1 = arith.constant 0 : i32
    %c0_i32_2 = arith.constant 0 : i32
    return %arg0, %c0_i32, %c0_i32_0, %c0_i32_1 : i32, i32, i32, i32
  }
  func.func @transform_7(%arg0: i32) -> (i32, i32, i32, i32) {
    %c0_i32 = arith.constant 0 : i32
    %c0_i32_0 = arith.constant 0 : i32
    %c0_i32_1 = arith.constant 0 : i32
    %c0_i32_2 = arith.constant 0 : i32
    return %arg0, %c0_i32, %c0_i32_0, %c0_i32_1 : i32, i32, i32, i32
  }
}

module attributes {stable_mosaic.version = 11 : i64} {
  func.func @_conv2_kernel(%arg0: i32, %arg1: memref<1x8x8x128xbf16, #tpu.memory_space<vmem>>, %arg2: memref<1x128xf32, #tpu.memory_space<vmem>>, %arg3: memref<1x128xf32, #tpu.memory_space<vmem>>, %arg4: memref<9x128x128xbf16, #tpu.memory_space<vmem>>, %arg5: memref<1x8x8x128xbf16, #tpu.memory_space<vmem>>, %arg6: memref<1x1x128xf32, #tpu.memory_space<vmem>>, %arg7: memref<1x1x128xf32, #tpu.memory_space<vmem>>, %arg8: memref<10x10x128xbf16, #tpu.memory_space<vmem>>) attributes {dimension_semantics = [#tpu.dimension_semantics<parallel>], iteration_bounds = array<i64: 2>, scalar_prefetch = 0 : i64, scratch_operands = 1 : i64, tpu.core_type = #tpu.core_type<tc>, window_params = [{transform_indices = @transform_0, window_bounds = array<i64: 1, 8, 8, 128>}, {pipeline_mode = #tpu.pipeline_mode<synchronous>, transform_indices = @transform_1, window_bounds = array<i64: 1, 128>}, {pipeline_mode = #tpu.pipeline_mode<synchronous>, transform_indices = @transform_2, window_bounds = array<i64: 1, 128>}, {pipeline_mode = #tpu.pipeline_mode<synchronous>, transform_indices = @transform_3, window_bounds = array<i64: 9, 128, 128>}, {transform_indices = @transform_4, window_bounds = array<i64: 1, 8, 8, 128>}, {transform_indices = @transform_5, window_bounds = array<i64: 1, 1, 128>}, {transform_indices = @transform_6, window_bounds = array<i64: 1, 1, 128>}]} {
    %cst = arith.constant 0.000000e+00 : bf16
    %0 = vector.broadcast %cst : bf16 to vector<10x10x128xbf16>
    %c0 = arith.constant 0 : index
    %c0_0 = arith.constant 0 : index
    %c0_1 = arith.constant 0 : index
    %1 = vector.load %arg8[%c0, %c0_0, %c0_1] : memref<10x10x128xbf16, #tpu.memory_space<vmem>>, vector<10x10x128xbf16>
    tpu.vector_store %arg8[%c0, %c0_0, %c0_1], %0 {strides = array<i32>} : memref<10x10x128xbf16, #tpu.memory_space<vmem>>, vector<10x10x128xbf16>,
    %c0_2 = arith.constant 0 : index
    %c0_3 = arith.constant 0 : index
    %c0_4 = arith.constant 0 : index
    %c0_5 = arith.constant 0 : index
    %2 = vector.load %arg1[%c0_2, %c0_3, %c0_4, %c0_5] : memref<1x8x8x128xbf16, #tpu.memory_space<vmem>>, vector<1x8x8x128xbf16>
    %3 = vector.shape_cast %2 : vector<1x8x8x128xbf16> to vector<8x8x128xbf16>
    %c0_6 = arith.constant 0 : index
    %c0_7 = arith.constant 0 : index
    %4 = vector.load %arg2[%c0_6, %c0_7] : memref<1x128xf32, #tpu.memory_space<vmem>>, vector<1x128xf32>
    %5 = vector.shape_cast %4 : vector<1x128xf32> to vector<128xf32>
    %6 = arith.extf %3 : vector<8x8x128xbf16> to vector<8x8x128xf32>
    %7 = vector.shape_cast %5 : vector<128xf32> to vector<1x1x128xf32>
    %8 = vector.broadcast %7 : vector<1x1x128xf32> to vector<8x8x128xf32>
    %9 = arith.mulf %6, %8 : vector<8x8x128xf32>
    %c0_8 = arith.constant 0 : index
    %c0_9 = arith.constant 0 : index
    %10 = vector.load %arg3[%c0_8, %c0_9] : memref<1x128xf32, #tpu.memory_space<vmem>>, vector<1x128xf32>
    %11 = vector.shape_cast %10 : vector<1x128xf32> to vector<128xf32>
    %12 = vector.shape_cast %11 : vector<128xf32> to vector<1x1x128xf32>
    %13 = vector.broadcast %12 : vector<1x1x128xf32> to vector<8x8x128xf32>
    %14 = arith.addf %9, %13 : vector<8x8x128xf32>
    %cst_10 = arith.constant 0.000000e+00 : f32
    %15 = vector.broadcast %cst_10 : f32 to vector<8x8x128xf32>
    %16 = arith.maximumf %14, %15 : vector<8x8x128xf32>
    %17 = arith.truncf %16 : vector<8x8x128xf32> to vector<8x8x128xbf16>
    %c1 = arith.constant 1 : index
    %c1_11 = arith.constant 1 : index
    %c0_12 = arith.constant 0 : index
    %18 = vector.load %arg8[%c1, %c1_11, %c0_12] : memref<10x10x128xbf16, #tpu.memory_space<vmem>>, vector<8x8x128xbf16>
    tpu.vector_store %arg8[%c1, %c1_11, %c0_12], %17 {strides = array<i32>} : memref<10x10x128xbf16, #tpu.memory_space<vmem>>, vector<8x8x128xbf16>,
    %c0_13 = arith.constant 0 : index
    %c0_14 = arith.constant 0 : index
    %c0_15 = arith.constant 0 : index
    %19 = vector.load %arg8[%c0_13, %c0_14, %c0_15] : memref<10x10x128xbf16, #tpu.memory_space<vmem>>, vector<8x8x128xbf16>
    %20 = vector.shape_cast %19 : vector<8x8x128xbf16> to vector<64x128xbf16>
    %c0_16 = arith.constant 0 : index
    %c0_17 = arith.constant 0 : index
    %c0_18 = arith.constant 0 : index
    %21 = vector.load %arg4[%c0_16, %c0_17, %c0_18] : memref<9x128x128xbf16, #tpu.memory_space<vmem>>, vector<1x128x128xbf16>
    %22 = vector.shape_cast %21 : vector<1x128x128xbf16> to vector<128x128xbf16>
    %cst_19 = arith.constant dense<0.000000e+00> : vector<64x128xf32>
    %23 = tpu.matmul %20, %22, %cst_19 {dimension_numbers = #tpu.dot_dimension_numbers<[1], [0], [0], [1], [0, 0, 1, 1], [], []>} : vector<64x128xbf16>, vector<128x128xbf16>, vector<64x128xf32> -> vector<64x128xf32>
    %c0_20 = arith.constant 0 : index
    %c1_21 = arith.constant 1 : index
    %c0_22 = arith.constant 0 : index
    %24 = vector.load %arg8[%c0_20, %c1_21, %c0_22] : memref<10x10x128xbf16, #tpu.memory_space<vmem>>, vector<8x8x128xbf16>
    %25 = vector.shape_cast %24 : vector<8x8x128xbf16> to vector<64x128xbf16>
    %c1_23 = arith.constant 1 : index
    %c0_24 = arith.constant 0 : index
    %c0_25 = arith.constant 0 : index
    %26 = vector.load %arg4[%c1_23, %c0_24, %c0_25] : memref<9x128x128xbf16, #tpu.memory_space<vmem>>, vector<1x128x128xbf16>
    %27 = vector.shape_cast %26 : vector<1x128x128xbf16> to vector<128x128xbf16>
    %cst_26 = arith.constant dense<0.000000e+00> : vector<64x128xf32>
    %28 = tpu.matmul %25, %27, %cst_26 {dimension_numbers = #tpu.dot_dimension_numbers<[1], [0], [0], [1], [0, 0, 1, 1], [], []>} : vector<64x128xbf16>, vector<128x128xbf16>, vector<64x128xf32> -> vector<64x128xf32>
    %29 = arith.addf %23, %28 : vector<64x128xf32>
    %c0_27 = arith.constant 0 : index
    %c2 = arith.constant 2 : index
    %c0_28 = arith.constant 0 : index
    %30 = vector.load %arg8[%c0_27, %c2, %c0_28] : memref<10x10x128xbf16, #tpu.memory_space<vmem>>, vector<8x8x128xbf16>
    %31 = vector.shape_cast %30 : vector<8x8x128xbf16> to vector<64x128xbf16>
    %c2_29 = arith.constant 2 : index
    %c0_30 = arith.constant 0 : index
    %c0_31 = arith.constant 0 : index
    %32 = vector.load %arg4[%c2_29, %c0_30, %c0_31] : memref<9x128x128xbf16, #tpu.memory_space<vmem>>, vector<1x128x128xbf16>
    %33 = vector.shape_cast %32 : vector<1x128x128xbf16> to vector<128x128xbf16>
    %cst_32 = arith.constant dense<0.000000e+00> : vector<64x128xf32>
    %34 = tpu.matmul %31, %33, %cst_32 {dimension_numbers = #tpu.dot_dimension_numbers<[1], [0], [0], [1], [0, 0, 1, 1], [], []>} : vector<64x128xbf16>, vector<128x128xbf16>, vector<64x128xf32> -> vector<64x128xf32>
    %35 = arith.addf %29, %34 : vector<64x128xf32>
    %c1_33 = arith.constant 1 : index
    %c0_34 = arith.constant 0 : index
    %c0_35 = arith.constant 0 : index
    %36 = vector.load %arg8[%c1_33, %c0_34, %c0_35] : memref<10x10x128xbf16, #tpu.memory_space<vmem>>, vector<8x8x128xbf16>
    %37 = vector.shape_cast %36 : vector<8x8x128xbf16> to vector<64x128xbf16>
    %c3 = arith.constant 3 : index
    %c0_36 = arith.constant 0 : index
    %c0_37 = arith.constant 0 : index
    %38 = vector.load %arg4[%c3, %c0_36, %c0_37] : memref<9x128x128xbf16, #tpu.memory_space<vmem>>, vector<1x128x128xbf16>
    %39 = vector.shape_cast %38 : vector<1x128x128xbf16> to vector<128x128xbf16>
    %cst_38 = arith.constant dense<0.000000e+00> : vector<64x128xf32>
    %40 = tpu.matmul %37, %39, %cst_38 {dimension_numbers = #tpu.dot_dimension_numbers<[1], [0], [0], [1], [0, 0, 1, 1], [], []>} : vector<64x128xbf16>, vector<128x128xbf16>, vector<64x128xf32> -> vector<64x128xf32>
    %41 = arith.addf %35, %40 : vector<64x128xf32>
    %c1_39 = arith.constant 1 : index
    %c1_40 = arith.constant 1 : index
    %c0_41 = arith.constant 0 : index
    %42 = vector.load %arg8[%c1_39, %c1_40, %c0_41] : memref<10x10x128xbf16, #tpu.memory_space<vmem>>, vector<8x8x128xbf16>
    %43 = vector.shape_cast %42 : vector<8x8x128xbf16> to vector<64x128xbf16>
    %c4 = arith.constant 4 : index
    %c0_42 = arith.constant 0 : index
    %c0_43 = arith.constant 0 : index
    %44 = vector.load %arg4[%c4, %c0_42, %c0_43] : memref<9x128x128xbf16, #tpu.memory_space<vmem>>, vector<1x128x128xbf16>
    %45 = vector.shape_cast %44 : vector<1x128x128xbf16> to vector<128x128xbf16>
    %cst_44 = arith.constant dense<0.000000e+00> : vector<64x128xf32>
    %46 = tpu.matmul %43, %45, %cst_44 {dimension_numbers = #tpu.dot_dimension_numbers<[1], [0], [0], [1], [0, 0, 1, 1], [], []>} : vector<64x128xbf16>, vector<128x128xbf16>, vector<64x128xf32> -> vector<64x128xf32>
    %47 = arith.addf %41, %46 : vector<64x128xf32>
    %c1_45 = arith.constant 1 : index
    %c2_46 = arith.constant 2 : index
    %c0_47 = arith.constant 0 : index
    %48 = vector.load %arg8[%c1_45, %c2_46, %c0_47] : memref<10x10x128xbf16, #tpu.memory_space<vmem>>, vector<8x8x128xbf16>
    %49 = vector.shape_cast %48 : vector<8x8x128xbf16> to vector<64x128xbf16>
    %c5 = arith.constant 5 : index
    %c0_48 = arith.constant 0 : index
    %c0_49 = arith.constant 0 : index
    %50 = vector.load %arg4[%c5, %c0_48, %c0_49] : memref<9x128x128xbf16, #tpu.memory_space<vmem>>, vector<1x128x128xbf16>
    %51 = vector.shape_cast %50 : vector<1x128x128xbf16> to vector<128x128xbf16>
    %cst_50 = arith.constant dense<0.000000e+00> : vector<64x128xf32>
    %52 = tpu.matmul %49, %51, %cst_50 {dimension_numbers = #tpu.dot_dimension_numbers<[1], [0], [0], [1], [0, 0, 1, 1], [], []>} : vector<64x128xbf16>, vector<128x128xbf16>, vector<64x128xf32> -> vector<64x128xf32>
    %53 = arith.addf %47, %52 : vector<64x128xf32>
    %c2_51 = arith.constant 2 : index
    %c0_52 = arith.constant 0 : index
    %c0_53 = arith.constant 0 : index
    %54 = vector.load %arg8[%c2_51, %c0_52, %c0_53] : memref<10x10x128xbf16, #tpu.memory_space<vmem>>, vector<8x8x128xbf16>
    %55 = vector.shape_cast %54 : vector<8x8x128xbf16> to vector<64x128xbf16>
    %c6 = arith.constant 6 : index
    %c0_54 = arith.constant 0 : index
    %c0_55 = arith.constant 0 : index
    %56 = vector.load %arg4[%c6, %c0_54, %c0_55] : memref<9x128x128xbf16, #tpu.memory_space<vmem>>, vector<1x128x128xbf16>
    %57 = vector.shape_cast %56 : vector<1x128x128xbf16> to vector<128x128xbf16>
    %cst_56 = arith.constant dense<0.000000e+00> : vector<64x128xf32>
    %58 = tpu.matmul %55, %57, %cst_56 {dimension_numbers = #tpu.dot_dimension_numbers<[1], [0], [0], [1], [0, 0, 1, 1], [], []>} : vector<64x128xbf16>, vector<128x128xbf16>, vector<64x128xf32> -> vector<64x128xf32>
    %59 = arith.addf %53, %58 : vector<64x128xf32>
    %c2_57 = arith.constant 2 : index
    %c1_58 = arith.constant 1 : index
    %c0_59 = arith.constant 0 : index
    %60 = vector.load %arg8[%c2_57, %c1_58, %c0_59] : memref<10x10x128xbf16, #tpu.memory_space<vmem>>, vector<8x8x128xbf16>
    %61 = vector.shape_cast %60 : vector<8x8x128xbf16> to vector<64x128xbf16>
    %c7 = arith.constant 7 : index
    %c0_60 = arith.constant 0 : index
    %c0_61 = arith.constant 0 : index
    %62 = vector.load %arg4[%c7, %c0_60, %c0_61] : memref<9x128x128xbf16, #tpu.memory_space<vmem>>, vector<1x128x128xbf16>
    %63 = vector.shape_cast %62 : vector<1x128x128xbf16> to vector<128x128xbf16>
    %cst_62 = arith.constant dense<0.000000e+00> : vector<64x128xf32>
    %64 = tpu.matmul %61, %63, %cst_62 {dimension_numbers = #tpu.dot_dimension_numbers<[1], [0], [0], [1], [0, 0, 1, 1], [], []>} : vector<64x128xbf16>, vector<128x128xbf16>, vector<64x128xf32> -> vector<64x128xf32>
    %65 = arith.addf %59, %64 : vector<64x128xf32>
    %c2_63 = arith.constant 2 : index
    %c2_64 = arith.constant 2 : index
    %c0_65 = arith.constant 0 : index
    %66 = vector.load %arg8[%c2_63, %c2_64, %c0_65] : memref<10x10x128xbf16, #tpu.memory_space<vmem>>, vector<8x8x128xbf16>
    %67 = vector.shape_cast %66 : vector<8x8x128xbf16> to vector<64x128xbf16>
    %c8 = arith.constant 8 : index
    %c0_66 = arith.constant 0 : index
    %c0_67 = arith.constant 0 : index
    %68 = vector.load %arg4[%c8, %c0_66, %c0_67] : memref<9x128x128xbf16, #tpu.memory_space<vmem>>, vector<1x128x128xbf16>
    %69 = vector.shape_cast %68 : vector<1x128x128xbf16> to vector<128x128xbf16>
    %cst_68 = arith.constant dense<0.000000e+00> : vector<64x128xf32>
    %70 = tpu.matmul %67, %69, %cst_68 {dimension_numbers = #tpu.dot_dimension_numbers<[1], [0], [0], [1], [0, 0, 1, 1], [], []>} : vector<64x128xbf16>, vector<128x128xbf16>, vector<64x128xf32> -> vector<64x128xf32>
    %71 = arith.addf %65, %70 : vector<64x128xf32>
    %72 = vector.shape_cast %71 : vector<64x128xf32> to vector<1x8x8x128xf32>
    %73 = arith.truncf %72 : vector<1x8x8x128xf32> to vector<1x8x8x128xbf16>
    %c0_69 = arith.constant 0 : index
    %c0_70 = arith.constant 0 : index
    %c0_71 = arith.constant 0 : index
    %c0_72 = arith.constant 0 : index
    %74 = vector.load %arg5[%c0_69, %c0_70, %c0_71, %c0_72] : memref<1x8x8x128xbf16, #tpu.memory_space<vmem>>, vector<1x8x8x128xbf16>
    tpu.vector_store %arg5[%c0_69, %c0_70, %c0_71, %c0_72], %73 {strides = array<i32>} : memref<1x8x8x128xbf16, #tpu.memory_space<vmem>>, vector<1x8x8x128xbf16>,
    %cst_73 = arith.constant dense<0.000000e+00> : vector<128xf32>
    %75 = vector.multi_reduction <add>, %71, %cst_73 [0] : vector<64x128xf32> to vector<128xf32>
    %76 = vector.shape_cast %75 : vector<128xf32> to vector<1x1x128xf32>
    %c0_74 = arith.constant 0 : index
    %c0_75 = arith.constant 0 : index
    %c0_76 = arith.constant 0 : index
    %77 = vector.load %arg6[%c0_74, %c0_75, %c0_76] : memref<1x1x128xf32, #tpu.memory_space<vmem>>, vector<1x1x128xf32>
    tpu.vector_store %arg6[%c0_74, %c0_75, %c0_76], %76 {strides = array<i32>} : memref<1x1x128xf32, #tpu.memory_space<vmem>>, vector<1x1x128xf32>,
    %78 = arith.mulf %71, %71 : vector<64x128xf32>
    %cst_77 = arith.constant dense<0.000000e+00> : vector<128xf32>
    %79 = vector.multi_reduction <add>, %78, %cst_77 [0] : vector<64x128xf32> to vector<128xf32>
    %80 = vector.shape_cast %79 : vector<128xf32> to vector<1x1x128xf32>
    %c0_78 = arith.constant 0 : index
    %c0_79 = arith.constant 0 : index
    %c0_80 = arith.constant 0 : index
    %81 = vector.load %arg7[%c0_78, %c0_79, %c0_80] : memref<1x1x128xf32, #tpu.memory_space<vmem>>, vector<1x1x128xf32>
    tpu.vector_store %arg7[%c0_78, %c0_79, %c0_80], %80 {strides = array<i32>} : memref<1x1x128xf32, #tpu.memory_space<vmem>>, vector<1x1x128xf32>,
    return
  }
  func.func @transform_0(%arg0: i32) -> (i32, i32, i32, i32) {
    %c0_i32 = arith.constant 0 : i32
    %c0_i32_0 = arith.constant 0 : i32
    %c0_i32_1 = arith.constant 0 : i32
    %c0_i32_2 = arith.constant 0 : i32
    return %arg0, %c0_i32, %c0_i32_0, %c0_i32_1 : i32, i32, i32, i32
  }
  func.func @transform_1(%arg0: i32) -> (i32, i32) {
    %c0_i32 = arith.constant 0 : i32
    %c0_i32_0 = arith.constant 0 : i32
    %c0_i32_1 = arith.constant 0 : i32
    return %c0_i32, %c0_i32_0 : i32, i32
  }
  func.func @transform_2(%arg0: i32) -> (i32, i32) {
    %c0_i32 = arith.constant 0 : i32
    %c0_i32_0 = arith.constant 0 : i32
    %c0_i32_1 = arith.constant 0 : i32
    return %c0_i32, %c0_i32_0 : i32, i32
  }
  func.func @transform_3(%arg0: i32) -> (i32, i32, i32) {
    %c0_i32 = arith.constant 0 : i32
    %c0_i32_0 = arith.constant 0 : i32
    %c0_i32_1 = arith.constant 0 : i32
    %c0_i32_2 = arith.constant 0 : i32
    return %c0_i32, %c0_i32_0, %c0_i32_1 : i32, i32, i32
  }
  func.func @transform_4(%arg0: i32) -> (i32, i32, i32, i32) {
    %c0_i32 = arith.constant 0 : i32
    %c0_i32_0 = arith.constant 0 : i32
    %c0_i32_1 = arith.constant 0 : i32
    %c0_i32_2 = arith.constant 0 : i32
    return %arg0, %c0_i32, %c0_i32_0, %c0_i32_1 : i32, i32, i32, i32
  }
  func.func @transform_5(%arg0: i32) -> (i32, i32, i32) {
    %c0_i32 = arith.constant 0 : i32
    %c0_i32_0 = arith.constant 0 : i32
    %c0_i32_1 = arith.constant 0 : i32
    return %arg0, %c0_i32, %c0_i32_0 : i32, i32, i32
  }
  func.func @transform_6(%arg0: i32) -> (i32, i32, i32) {
    %c0_i32 = arith.constant 0 : i32
    %c0_i32_0 = arith.constant 0 : i32
    %c0_i32_1 = arith.constant 0 : i32
    return %arg0, %c0_i32, %c0_i32_0 : i32, i32, i32
  }
}

</mosaic_0001>

<llo_original>
// kernel: basic_block_forward.5
$region0: #{basic_block_forward.5}
  #allocation0 [shape = 'u32[]', space=smem, size = 0x4, offset = 0x4, fixed_abs, tag = 'smem constant byte address 0x4 - core index']
  #allocation1 [shape = 'u32[72,128]{1,0:T(1,128)}', space=vmem, size = 0x9000, scoped, tag = 'internal scratch']
  %s0 = inlined_call_operand.vmem [shape: bf16[2,8,8,128], index: 0, kind: input, shape index: {}]
  %s1 = inlined_call_operand.vmem [shape: f32[1,128], index: 1, kind: input, shape index: {}]
  %s2 = inlined_call_operand.vmem [shape: f32[1,128], index: 2, kind: input, shape index: {}]
  %s3 = inlined_call_operand.vmem [shape: bf16[2,8,8,128], index: 3, kind: input, shape index: {}]
  %s4 = inlined_call_operand.vmem [shape: f32[1,128], index: 4, kind: input, shape index: {}]
  %s5 = inlined_call_operand.vmem [shape: f32[1,128], index: 5, kind: input, shape index: {}]
  %s6 = inlined_call_operand.vmem [shape: f32[2,8,8,128], index: 6, kind: output, shape index: {0}]
  %s7 = inlined_call_operand.vmem [shape: f32[2,8,8,128], index: 7, kind: output, shape index: {1}]
  %8 = xla_tuple %s6, %s7
  %s9 = sld [smem:[#allocation0]]
  $region65: #{basic_block_forward.5} parent=0
    _
  %s11 = ssub.s32 1, %s9
  %s12 = scalar_select 0, %s11, %s9
  loop: start=0, step=1, limit=4
  $region2: #{basic_block_forward.5} parent=0 // loop_pre_header
    _
  $region3: #{basic_block_forward.5} parent=0 // loop_header
    %s14 = sphi 0, %s18
    %p15 = scmp.ge.s32.totalorder %s14, 4
    %s24 = sphi 0, %s26
    %s27 = sphi 0, %s24
    %s28 = sphi 0, %s27
    %s44 = sphi 0, %s28
    %s48 = sphi 0, %s48
    %s50 = sphi 0, %s48
    %s51 = sphi 0, %s50
    %s65 = sphi 0, %s51
    %s69 = sphi 0, %s69
    %s71 = sphi 0, %s69
    %s72 = sphi 0, %s71
    %s86 = sphi 0, %s72
    %s92 = sphi 0, %s94
    %s95 = sphi 0, %s92
    %s96 = sphi 0, %s95
    %s112 = sphi 0, %s96
    %s116 = sphi 0, %s116
    %s118 = sphi 0, %s116
    %s119 = sphi 0, %s118
    %s133 = sphi 0, %s119
    %s137 = sphi 0, %s137
    %s139 = sphi 0, %s137
    %s140 = sphi 0, %s139
    %s154 = sphi 0, %s140
    %s160 = sphi 0, %s162
    %s163 = sphi 0, %s160
    %s164 = sphi 0, %s163
    %s180 = sphi 0, %s164
    %s186 = sphi 0, %s188
    %s189 = sphi 0, %s186
    %s190 = sphi 0, %s189
    %s206 = sphi 0, %s190
  $region4: #{basic_block_forward.5} parent=0 // loop_header_branch
    %17 = sbr.rel (%p15) target = $region8
  $region5: #{basic_block_forward.5} parent=0 // loop_body
    %s19 = ssub.s32 %s14, 1
    %s20 = ssub.s32 %s14, 2
    %s21 = sadd.s32 %s14, 1
    %s22 = ssub.s32 %s14, %s21
    %p23 = scmp.eq.s32.totalorder %s22, 0
    %s25 = sadd.s32 %s24, 1
    %s26 = scalar_select %p23, %s24, %s25
    %p29 = pneg %p23
    %p30 = scmp.eq.s32.totalorder %s14, 1
    %p31 = por %p29, %p30
    %p32 = scmp.ne.s32.totalorder %s24, %s27
    %p33 = scmp.eq.s32.totalorder %s14, 0
    %p34 = por %p32, %p33
    %p35 = scmp.ne.s32.totalorder %s24, %s27
    %p36 = scmp.eq.s32.totalorder %s19, 1
    %p37 = por %p35, %p36
    %p38 = scmp.ne.s32.totalorder %s27, %s28
    %p39 = scmp.eq.s32.totalorder %s19, 0
    %p40 = por %p38, %p39
    %p41 = scmp.ne.s32.totalorder %s27, %s28
    %p42 = scmp.eq.s32.totalorder %s20, 1
    %p43 = por %p41, %p42
    %p45 = scmp.ne.s32.totalorder %s28, %s44
    %p46 = scmp.eq.s32.totalorder %s20, 0
    %p47 = por %p45, %p46
    %s49 = sadd.s32 %s48, 1
    %p52 = scmp.eq.s32.totalorder %s14, 1
    %p53 = scmp.ne.s32.totalorder %s48, %s50
    %p54 = scmp.eq.s32.totalorder %s14, 0
    %p55 = por %p53, %p54
    %p56 = scmp.ne.s32.totalorder %s48, %s50
    %p57 = scmp.eq.s32.totalorder %s19, 1
    %p58 = por %p56, %p57
    %p59 = scmp.ne.s32.totalorder %s50, %s51
    %p60 = scmp.eq.s32.totalorder %s19, 0
    %p61 = por %p59, %p60
    %p62 = scmp.ne.s32.totalorder %s50, %s51
    %p63 = scmp.eq.s32.totalorder %s20, 1
    %p64 = por %p62, %p63
    %p66 = scmp.ne.s32.totalorder %s51, %s65
    %p67 = scmp.eq.s32.totalorder %s20, 0
    %p68 = por %p66, %p67
    %s70 = sadd.s32 %s69, 1
    %p73 = scmp.eq.s32.totalorder %s14, 1
    %p74 = scmp.ne.s32.totalorder %s69, %s71
    %p75 = scmp.eq.s32.totalorder %s14, 0
    %p76 = por %p74, %p75
    %p77 = scmp.ne.s32.totalorder %s69, %s71
    %p78 = scmp.eq.s32.totalorder %s19, 1
    %p79 = por %p77, %p78
    %p80 = scmp.ne.s32.totalorder %s71, %s72
    %p81 = scmp.eq.s32.totalorder %s19, 0
    %p82 = por %p80, %p81
    %p83 = scmp.ne.s32.totalorder %s71, %s72
    %p84 = scmp.eq.s32.totalorder %s20, 1
    %p85 = por %p83, %p84
    %p87 = scmp.ne.s32.totalorder %s72, %s86
    %p88 = scmp.eq.s32.totalorder %s20, 0
    %p89 = por %p87, %p88
    %s90 = ssub.s32 %s14, %s21
    %p91 = scmp.eq.s32.totalorder %s90, 0
    %s93 = sadd.s32 %s92, 1
    %s94 = scalar_select %p91, %s92, %s93
    %p97 = pneg %p91
    %p98 = scmp.eq.s32.totalorder %s14, 1
    %p99 = por %p97, %p98
    %p100 = scmp.ne.s32.totalorder %s92, %s95
    %p101 = scmp.eq.s32.totalorder %s14, 0
    %p102 = por %p100, %p101
    %p103 = scmp.ne.s32.totalorder %s92, %s95
    %p104 = scmp.eq.s32.totalorder %s19, 1
    %p105 = por %p103, %p104
    %p106 = scmp.ne.s32.totalorder %s95, %s96
    %p107 = scmp.eq.s32.totalorder %s19, 0
    %p108 = por %p106, %p107
    %p109 = scmp.ne.s32.totalorder %s95, %s96
    %p110 = scmp.eq.s32.totalorder %s20, 1
    %p111 = por %p109, %p110
    %p113 = scmp.ne.s32.totalorder %s96, %s112
    %p114 = scmp.eq.s32.totalorder %s20, 0
    %p115 = por %p113, %p114
    %s117 = sadd.s32 %s116, 1
    %p120 = scmp.eq.s32.totalorder %s14, 1
    %p121 = scmp.ne.s32.totalorder %s116, %s118
    %p122 = scmp.eq.s32.totalorder %s14, 0
    %p123 = por %p121, %p122
    %p124 = scmp.ne.s32.totalorder %s116, %s118
    %p125 = scmp.eq.s32.totalorder %s19, 1
    %p126 = por %p124, %p125
    %p127 = scmp.ne.s32.totalorder %s118, %s119
    %p128 = scmp.eq.s32.totalorder %s19, 0
    %p129 = por %p127, %p128
    %p130 = scmp.ne.s32.totalorder %s118, %s119
    %p131 = scmp.eq.s32.totalorder %s20, 1
    %p132 = por %p130, %p131
    %p134 = scmp.ne.s32.totalorder %s119, %s133
    %p135 = scmp.eq.s32.totalorder %s20, 0
    %p136 = por %p134, %p135
    %s138 = sadd.s32 %s137, 1
    %p141 = scmp.eq.s32.totalorder %s14, 1
    %p142 = scmp.ne.s32.totalorder %s137, %s139
    %p143 = scmp.eq.s32.totalorder %s14, 0
    %p144 = por %p142, %p143
    %p145 = scmp.ne.s32.totalorder %s137, %s139
    %p146 = scmp.eq.s32.totalorder %s19, 1
    %p147 = por %p145, %p146
    %p148 = scmp.ne.s32.totalorder %s139, %s140
    %p149 = scmp.eq.s32.totalorder %s19, 0
    %p150 = por %p148, %p149
    %p151 = scmp.ne.s32.totalorder %s139, %s140
    %p152 = scmp.eq.s32.totalorder %s20, 1
    %p153 = por %p151, %p152
    %p155 = scmp.ne.s32.totalorder %s140, %s154
    %p156 = scmp.eq.s32.totalorder %s20, 0
    %p157 = por %p155, %p156
    %s158 = ssub.s32 %s14, %s21
    %p159 = scmp.eq.s32.totalorder %s158, 0
    %s161 = sadd.s32 %s160, 1
    %s162 = scalar_select %p159, %s160, %s161
    %p165 = pneg %p159
    %p166 = scmp.eq.s32.totalorder %s14, 1
    %p167 = por %p165, %p166
    %p168 = scmp.ne.s32.totalorder %s160, %s163
    %p169 = scmp.eq.s32.totalorder %s14, 0
    %p170 = por %p168, %p169
    %p171 = scmp.ne.s32.totalorder %s160, %s163
    %p172 = scmp.eq.s32.totalorder %s19, 1
    %p173 = por %p171, %p172
    %p174 = scmp.ne.s32.totalorder %s163, %s164
    %p175 = scmp.eq.s32.totalorder %s19, 0
    %p176 = por %p174, %p175
    %p177 = scmp.ne.s32.totalorder %s163, %s164
    %p178 = scmp.eq.s32.totalorder %s20, 1
    %p179 = por %p177, %p178
    %p181 = scmp.ne.s32.totalorder %s164, %s180
    %p182 = scmp.eq.s32.totalorder %s20, 0
    %p183 = por %p181, %p182
    %s184 = ssub.s32 %s14, %s21
    %p185 = scmp.eq.s32.totalorder %s184, 0
    %s187 = sadd.s32 %s186, 1
    %s188 = scalar_select %p185, %s186, %s187
    %p191 = pneg %p185
    %p192 = scmp.eq.s32.totalorder %s14, 1
    %p193 = por %p191, %p192
    %p194 = scmp.ne.s32.totalorder %s186, %s189
    %p195 = scmp.eq.s32.totalorder %s14, 0
    %p196 = por %p194, %p195
    %p197 = scmp.ne.s32.totalorder %s186, %s189
    %p198 = scmp.eq.s32.totalorder %s19, 1
    %p199 = por %p197, %p198
    %p200 = scmp.ne.s32.totalorder %s189, %s190
    %p201 = scmp.eq.s32.totalorder %s19, 0
    %p202 = por %p200, %p201
    %p203 = scmp.ne.s32.totalorder %s189, %s190
    %p204 = scmp.eq.s32.totalorder %s20, 1
    %p205 = por %p203, %p204
    %p207 = scmp.ne.s32.totalorder %s190, %s206
    %p208 = scmp.eq.s32.totalorder %s20, 0
    %p209 = por %p207, %p208
    %p210 = scmp.le.s32.totalorder 1, %s14
    %p211 = scmp.lt.s32.totalorder %s14, 3
    %p212 = pnand %p210, %p211
    %p213 = pneg %p212
    // Predicated region
    $region9: #{basic_block_forward.5} parent=5 // pred_check
      _
    $region10: #{basic_block_forward.5} parent=5 // pred_check_branch
      %215 = sbr.rel (%p212) target = $region12
    $region11: #{basic_block_forward.5} parent=5 // pred_region
      %s216 = ssub.s32 %s14, 1
      // Predicated region
      $region13: #{basic_block_forward.5} parent=11 // pred_check
        %p217 = pneg %p61
      $region14: #{basic_block_forward.5} parent=11 // pred_check_branch
        %219 = sbr.rel (%p217) target = $region16
      $region15: #{basic_block_forward.5} parent=11 // pred_region
        _
      $region16: #{basic_block_forward.5} parent=11 // pred_fallthru
        _
      // Predicated region
      $region17: #{basic_block_forward.5} parent=11 // pred_check
        %p220 = pneg %p82
      $region18: #{basic_block_forward.5} parent=11 // pred_check_branch
        %222 = sbr.rel (%p220) target = $region20
      $region19: #{basic_block_forward.5} parent=11 // pred_region
        _
      $region20: #{basic_block_forward.5} parent=11 // pred_fallthru
        _
      // Predicated region
      $region21: #{basic_block_forward.5} parent=11 // pred_check
        %p223 = pneg %p129
      $region22: #{basic_block_forward.5} parent=11 // pred_check_branch
        %225 = sbr.rel (%p223) target = $region24
      $region23: #{basic_block_forward.5} parent=11 // pred_region
        _
      $region24: #{basic_block_forward.5} parent=11 // pred_fallthru
        _
      // Predicated region
      $region25: #{basic_block_forward.5} parent=11 // pred_check
        %p226 = pneg %p150
      $region26: #{basic_block_forward.5} parent=11 // pred_check_branch
        %228 = sbr.rel (%p226) target = $region28
      $region27: #{basic_block_forward.5} parent=11 // pred_region
        _
      $region28: #{basic_block_forward.5} parent=11 // pred_fallthru
        _
    $region12: #{basic_block_forward.5} parent=5 // pred_fallthru
      _
    %p229 = scmp.lt.s32.totalorder %s14, 2
    // Predicated region
    $region29: #{basic_block_forward.5} parent=5 // pred_check
      %p230 = pneg %p229
    $region30: #{basic_block_forward.5} parent=5 // pred_check_branch
      %232 = sbr.rel (%p230) target = $region32
    $region31: #{basic_block_forward.5} parent=5 // pred_region
      // Predicated region
      $region33: #{basic_block_forward.5} parent=31 // pred_check
        %p233 = pneg %p34
      $region34: #{basic_block_forward.5} parent=31 // pred_check_branch
        %235 = sbr.rel (%p233) target = $region36
      $region35: #{basic_block_forward.5} parent=31 // pred_region
        %p236 = scmp.lt.s32.totalorder %s14, 1
        %s237 = scalar_select %p236, %s14, 1
        %s238 = smul.addr %s237, 8
        %s239 = smul.addr %s238, 4
        %s240 = scalar_lea.vmem %s0, %s239
      $region36: #{basic_block_forward.5} parent=31 // pred_fallthru
        _
      // Predicated region
      $region37: #{basic_block_forward.5} parent=31 // pred_check
        %p241 = pneg %p102
      $region38: #{basic_block_forward.5} parent=31 // pred_check_branch
        %243 = sbr.rel (%p241) target = $region40
      $region39: #{basic_block_forward.5} parent=31 // pred_region
        %p244 = scmp.lt.s32.totalorder %s14, 1
        %s245 = scalar_select %p244, %s14, 1
        %s246 = smul.addr %s245, 8
        %s247 = smul.addr %s246, 4
        %s248 = scalar_lea.vmem %s3, %s247
      $region40: #{basic_block_forward.5} parent=31 // pred_fallthru
        _
    $region32: #{basic_block_forward.5} parent=5 // pred_fallthru
      _
    %p249 = scmp.le.s32.totalorder 1, %s14
    %p250 = scmp.lt.s32.totalorder %s14, 3
    %p251 = pnand %p249, %p250
    %p252 = pneg %p251
    // Predicated region
    $region41: #{basic_block_forward.5} parent=5 // pred_check
      _
    $region42: #{basic_block_forward.5} parent=5 // pred_check_branch
      %254 = sbr.rel (%p251) target = $region44
    $region43: #{basic_block_forward.5} parent=5 // pred_region
      %s255 = ssub.s32 %s14, 1
      %p256 = scmp.lt.s32.totalorder %s19, 1
      %s257 = scalar_select %p256, %s19, 1
      %s258 = smul.addr %s257, 8
      %s259 = smul.addr %s258, 4
      %s260 = scalar_lea.vmem %s0, %s259
      %p261 = pneg %p40
      %p262 = pneg %p37
      %p263 = pneg %p61
      %p264 = pneg %p58
      %p265 = pneg %p82
      %p266 = pneg %p79
      %p267 = scmp.lt.s32.totalorder %s19, 1
      %s268 = scalar_select %p267, %s19, 1
      %s269 = smul.addr %s268, 8
      %s270 = smul.addr %s269, 4
      %s271 = scalar_lea.vmem %s3, %s270
      %p272 = pneg %p108
      %p273 = pneg %p105
      %p274 = pneg %p129
      %p275 = pneg %p126
      %p276 = pneg %p150
      %p277 = pneg %p147
      %p278 = pneg %p176
      %p279 = pneg %p173
      %p280 = scmp.lt.s32.totalorder %s19, 1
      %s281 = scalar_select %p280, %s19, 1
      %s282 = smul.addr %s281, 8
      %s283 = smul.addr %s282, 8
      %s284 = scalar_lea.vmem %s6, %s283
      %p285 = pneg %p202
      %p286 = pneg %p199
      %p287 = scmp.lt.s32.totalorder %s19, 1
      %s288 = scalar_select %p287, %s19, 1
      %s289 = smul.addr %s288, 8
      %s290 = smul.addr %s289, 8
      %s291 = scalar_lea.vmem %s7, %s290
      %p292 = scmp.lt.s32.totalorder %s19, 1
      %s293 = scalar_select %p292, %s19, 1
      %s294 = smul.addr %s293, 8
      %s295 = smul.addr %s294, 4
      %s296 = scalar_lea.vmem %s0, %s295
      %p297 = scmp.lt.s32.totalorder %s19, 1
      %s298 = scalar_select %p297, %s19, 1
      %s299 = smul.addr %s298, 8
      %s300 = smul.addr %s299, 4
      %s301 = scalar_lea.vmem %s3, %s300
      %p302 = scmp.lt.s32.totalorder %s19, 1
      %s303 = scalar_select %p302, %s19, 1
      %s304 = smul.addr %s303, 8
      %s305 = smul.addr %s304, 8
      %s306 = scalar_lea.vmem %s6, %s305
      %p307 = scmp.lt.s32.totalorder %s19, 1
      %s308 = scalar_select %p307, %s19, 1
      %s309 = smul.addr %s308, 8
      %s310 = smul.addr %s309, 8
      %s311 = scalar_lea.vmem %s7, %s310
      %v312 = vld [vmem:[%s296] sm:$0xf]
      %v313 = vld [vmem:[%s296 + $0x4] sm:$0xf]
      %v314 = vld [vmem:[%s296 + $0x8] sm:$0xf]
      %v315 = vld [vmem:[%s296 + $0xc] sm:$0xf]
      %v316 = vld [vmem:[%s296 + $0x10] sm:$0xf]
      %v317 = vld [vmem:[%s296 + $0x14] sm:$0xf]
      %v318 = vld [vmem:[%s296 + $0x18] sm:$0xf]
      %v319 = vld [vmem:[%s296 + $0x1c] sm:$0xf]
      %v320 = vld [vmem:[%s1] sm:$0x1]
      %v321 = vunpack.c.l.bf16 %v312
      %v322 = vunpack.c.l.bf16 %v313
      %v323 = vunpack.c.l.bf16 %v314
      %v324 = vunpack.c.l.bf16 %v315
      %v325 = vunpack.c.l.bf16 %v316
      %v326 = vunpack.c.l.bf16 %v317
      %v327 = vunpack.c.l.bf16 %v318
      %v328 = vunpack.c.l.bf16 %v319
      %v330 = vperm.slane %v320, 0
      %v332 = vmul.f32 %v321, %v330
      %v333 = vmul.f32 %v322, %v330
      %v334 = vmul.f32 %v323, %v330
      %v335 = vmul.f32 %v324, %v330
      %v336 = vmul.f32 %v325, %v330
      %v337 = vmul.f32 %v326, %v330
      %v338 = vmul.f32 %v327, %v330
      %v339 = vmul.f32 %v328, %v330
      %v340 = vld [vmem:[%s2] sm:$0x1]
      %v342 = vperm.slane %v340, 0
      %v344 = vadd.f32 %v332, %v342
      %v345 = vadd.f32 %v333, %v342
      %v346 = vadd.f32 %v334, %v342
      %v347 = vadd.f32 %v335, %v342
      %v348 = vadd.f32 %v336, %v342
      %v349 = vadd.f32 %v337, %v342
      %v350 = vadd.f32 %v338, %v342
      %v351 = vadd.f32 %v339, %v342
      %v352 = vld [vmem:[%s301] sm:$0xf]
      %v353 = vld [vmem:[%s301 + $0x4] sm:$0xf]
      %v354 = vld [vmem:[%s301 + $0x8] sm:$0xf]
      %v355 = vld [vmem:[%s301 + $0xc] sm:$0xf]
      %v356 = vld [vmem:[%s301 + $0x10] sm:$0xf]
      %v357 = vld [vmem:[%s301 + $0x14] sm:$0xf]
      %v358 = vld [vmem:[%s301 + $0x18] sm:$0xf]
      %v359 = vld [vmem:[%s301 + $0x1c] sm:$0xf]
      %v360 = vld [vmem:[%s4] sm:$0x1]
      %v361 = vunpack.c.l.bf16 %v352
      %v362 = vunpack.c.l.bf16 %v353
      %v363 = vunpack.c.l.bf16 %v354
      %v364 = vunpack.c.l.bf16 %v355
      %v365 = vunpack.c.l.bf16 %v356
      %v366 = vunpack.c.l.bf16 %v357
      %v367 = vunpack.c.l.bf16 %v358
      %v368 = vunpack.c.l.bf16 %v359
      %v370 = vperm.slane %v360, 0
      %v372 = vmul.f32 %v361, %v370
      %v373 = vmul.f32 %v362, %v370
      %v374 = vmul.f32 %v363, %v370
      %v375 = vmul.f32 %v364, %v370
      %v376 = vmul.f32 %v365, %v370
      %v377 = vmul.f32 %v366, %v370
      %v378 = vmul.f32 %v367, %v370
      %v379 = vmul.f32 %v368, %v370
      %v380 = vadd.f32 %v344, %v372
      %v381 = vadd.f32 %v345, %v373
      %v382 = vadd.f32 %v346, %v374
      %v383 = vadd.f32 %v347, %v375
      %v384 = vadd.f32 %v348, %v376
      %v385 = vadd.f32 %v349, %v377
      %v386 = vadd.f32 %v350, %v378
      %v387 = vadd.f32 %v351, %v379
      %v388 = vld [vmem:[%s5] sm:$0x1]
      %v390 = vperm.slane %v388, 0
      %v392 = vadd.f32 %v380, %v390
      %v393 = vadd.f32 %v381, %v390
      %v394 = vadd.f32 %v382, %v390
      %v395 = vadd.f32 %v383, %v390
      %v396 = vadd.f32 %v384, %v390
      %v397 = vadd.f32 %v385, %v390
      %v398 = vadd.f32 %v386, %v390
      %v399 = vadd.f32 %v387, %v390
      %v400 = vmax.f32 %v392, 0.0
      %v401 = vmax.f32 %v393, 0.0
      %v402 = vmax.f32 %v394, 0.0
      %v403 = vmax.f32 %v395, 0.0
      %v404 = vmax.f32 %v396, 0.0
      %v405 = vmax.f32 %v397, 0.0
      %v406 = vmax.f32 %v398, 0.0
      %v407 = vmax.f32 %v399, 0.0
      %408 = vst [vmem:[%s306] sm:$0xff] %v400
      %409 = vst [vmem:[%s306 + $0x8] sm:$0xff] %v401
      %410 = vst [vmem:[%s306 + $0x10] sm:$0xff] %v402
      %411 = vst [vmem:[%s306 + $0x18] sm:$0xff] %v403
      %412 = vst [vmem:[%s306 + $0x20] sm:$0xff] %v404
      %413 = vst [vmem:[%s306 + $0x28] sm:$0xff] %v405
      %414 = vst [vmem:[%s306 + $0x30] sm:$0xff] %v406
      %415 = vst [vmem:[%s306 + $0x38] sm:$0xff] %v407
      %416 = vst [vmem:[%s311] sm:$0xff] %v392
      %417 = vst [vmem:[%s311 + $0x8] sm:$0xff] %v393
      %418 = vst [vmem:[%s311 + $0x10] sm:$0xff] %v394
      %419 = vst [vmem:[%s311 + $0x18] sm:$0xff] %v395
      %420 = vst [vmem:[%s311 + $0x20] sm:$0xff] %v396
      %421 = vst [vmem:[%s311 + $0x28] sm:$0xff] %v397
      %422 = vst [vmem:[%s311 + $0x30] sm:$0xff] %v398
      %423 = vst [vmem:[%s311 + $0x38] sm:$0xff] %v399
      %p424 = scmp.lt.s32.totalorder %s19, 1
      %s425 = scalar_select %p424, %s19, 1
      %s426 = smul.addr %s425, 8
      %s427 = smul.addr %s426, 8
      %s428 = scalar_lea.vmem %s6, %s427
      %p429 = scmp.lt.s32.totalorder %s19, 1
      %s430 = scalar_select %p429, %s19, 1
      %s431 = smul.addr %s430, 8
      %s432 = smul.addr %s431, 8
      %s433 = scalar_lea.vmem %s7, %s432
      // Predicated region
      $region45: #{basic_block_forward.5} parent=43 // pred_check
        %p434 = pneg %p173
      $region46: #{basic_block_forward.5} parent=43 // pred_check_branch
        %436 = sbr.rel (%p434) target = $region48
      $region47: #{basic_block_forward.5} parent=43 // pred_region
        _
      $region48: #{basic_block_forward.5} parent=43 // pred_fallthru
        _
      // Predicated region
      $region49: #{basic_block_forward.5} parent=43 // pred_check
        %p437 = pneg %p199
      $region50: #{basic_block_forward.5} parent=43 // pred_check_branch
        %439 = sbr.rel (%p437) target = $region52
      $region51: #{basic_block_forward.5} parent=43 // pred_region
        _
      $region52: #{basic_block_forward.5} parent=43 // pred_fallthru
        _
    $region44: #{basic_block_forward.5} parent=5 // pred_fallthru
      _
    %p440 = scmp.le.s32.totalorder 2, %s14
    // Predicated region
    $region53: #{basic_block_forward.5} parent=5 // pred_check
      %p441 = pneg %p440
    $region54: #{basic_block_forward.5} parent=5 // pred_check_branch
      %443 = sbr.rel (%p441) target = $region56
    $region55: #{basic_block_forward.5} parent=5 // pred_region
      %s444 = ssub.s32 %s14, 2
      // Predicated region
      $region57: #{basic_block_forward.5} parent=55 // pred_check
        %p445 = pneg %p179
      $region58: #{basic_block_forward.5} parent=55 // pred_check_branch
        %447 = sbr.rel (%p445) target = $region60
      $region59: #{basic_block_forward.5} parent=55 // pred_region
        %p448 = scmp.lt.s32.totalorder %s20, 1
        %s449 = scalar_select %p448, %s20, 1
        %s450 = smul.addr %s449, 8
        %s451 = smul.addr %s450, 8
        %s452 = scalar_lea.vmem %s6, %s451
      $region60: #{basic_block_forward.5} parent=55 // pred_fallthru
        _
      // Predicated region
      $region61: #{basic_block_forward.5} parent=55 // pred_check
        %p453 = pneg %p205
      $region62: #{basic_block_forward.5} parent=55 // pred_check_branch
        %455 = sbr.rel (%p453) target = $region64
      $region63: #{basic_block_forward.5} parent=55 // pred_region
        %p456 = scmp.lt.s32.totalorder %s20, 1
        %s457 = scalar_select %p456, %s20, 1
        %s458 = smul.addr %s457, 8
        %s459 = smul.addr %s458, 8
        %s460 = scalar_lea.vmem %s7, %s459
      $region64: #{basic_block_forward.5} parent=55 // pred_fallthru
        _
    $region56: #{basic_block_forward.5} parent=5 // pred_fallthru
      _
  $region6: #{basic_block_forward.5} parent=0 // loop_footer
    %s18 = sadd.s32 1, %s14
  $region7: #{basic_block_forward.5} parent=0 // loop_footer_branch
    %13 = sbr.rel target = $region3
  $region8: #{basic_block_forward.5} parent=0 // loop_exit
    _

// kernel: basic_block_forward.3
$region0: #{basic_block_forward.3}
  #allocation0 [shape = 'u32[]', space=smem, size = 0x4, offset = 0x4, fixed_abs, tag = 'smem constant byte address 0x4 - core index']
  #allocation1 [shape = 'u32[72,128]{1,0:T(1,128)}', space=vmem, size = 0x9000, scoped, tag = 'internal scratch']
  %s0 = inlined_call_operand.vmem [shape: bf16[2,9,9,128], index: 0, kind: input, shape index: {}]
  %s1 = inlined_call_operand.vmem [shape: bf16[4,128,128], index: 1, kind: input, shape index: {}]
  %s2 = inlined_call_operand.vmem [shape: bf16[128,128], index: 2, kind: input, shape index: {}]
  %s3 = inlined_call_operand.vmem [shape: bf16[2,8,8,128], index: 3, kind: output, shape index: {0}]
  %s4 = inlined_call_operand.vmem [shape: f32[2,1,128], index: 4, kind: output, shape index: {1}]
  %s5 = inlined_call_operand.vmem [shape: f32[2,1,128], index: 5, kind: output, shape index: {2}]
  %s6 = inlined_call_operand.vmem [shape: bf16[2,8,8,128], index: 6, kind: output, shape index: {3}]
  %s7 = inlined_call_operand.vmem [shape: f32[2,1,128], index: 7, kind: output, shape index: {4}]
  %s8 = inlined_call_operand.vmem [shape: f32[2,1,128], index: 8, kind: output, shape index: {5}]
  %9 = xla_tuple %s3, %s4, %s5, %s6, %s7, %s8
  %s10 = sld [smem:[#allocation0]]
  $region85: #{basic_block_forward.3} parent=0
    _
  %s12 = ssub.s32 1, %s10
  %s13 = scalar_select 0, %s12, %s10
  loop: start=0, step=1, limit=4
  $region2: #{basic_block_forward.3} parent=0 // loop_pre_header
    _
  $region3: #{basic_block_forward.3} parent=0 // loop_header
    %s15 = sphi 0, %s19
    %p16 = scmp.ge.s32.totalorder %s15, 4
    %s25 = sphi 0, %s27
    %s28 = sphi 0, %s25
    %s29 = sphi 0, %s28
    %s45 = sphi 0, %s29
    %s49 = sphi 0, %s49
    %s51 = sphi 0, %s49
    %s52 = sphi 0, %s51
    %s66 = sphi 0, %s52
    %s70 = sphi 0, %s70
    %s72 = sphi 0, %s70
    %s73 = sphi 0, %s72
    %s87 = sphi 0, %s73
    %s93 = sphi 0, %s95
    %s96 = sphi 0, %s93
    %s97 = sphi 0, %s96
    %s113 = sphi 0, %s97
    %s119 = sphi 0, %s121
    %s122 = sphi 0, %s119
    %s123 = sphi 0, %s122
    %s139 = sphi 0, %s123
    %s145 = sphi 0, %s147
    %s148 = sphi 0, %s145
    %s149 = sphi 0, %s148
    %s165 = sphi 0, %s149
    %s171 = sphi 0, %s173
    %s174 = sphi 0, %s171
    %s175 = sphi 0, %s174
    %s191 = sphi 0, %s175
    %s197 = sphi 0, %s199
    %s200 = sphi 0, %s197
    %s201 = sphi 0, %s200
    %s217 = sphi 0, %s201
    %s223 = sphi 0, %s225
    %s226 = sphi 0, %s223
    %s227 = sphi 0, %s226
    %s243 = sphi 0, %s227
  $region4: #{basic_block_forward.3} parent=0 // loop_header_branch
    %18 = sbr.rel (%p16) target = $region8
  $region5: #{basic_block_forward.3} parent=0 // loop_body
    %s20 = ssub.s32 %s15, 1
    %s21 = ssub.s32 %s15, 2
    %s22 = sadd.s32 %s15, 1
    %s23 = ssub.s32 %s15, %s22
    %p24 = scmp.eq.s32.totalorder %s23, 0
    %s26 = sadd.s32 %s25, 1
    %s27 = scalar_select %p24, %s25, %s26
    %p30 = pneg %p24
    %p31 = scmp.eq.s32.totalorder %s15, 1
    %p32 = por %p30, %p31
    %p33 = scmp.ne.s32.totalorder %s25, %s28
    %p34 = scmp.eq.s32.totalorder %s15, 0
    %p35 = por %p33, %p34
    %p36 = scmp.ne.s32.totalorder %s25, %s28
    %p37 = scmp.eq.s32.totalorder %s20, 1
    %p38 = por %p36, %p37
    %p39 = scmp.ne.s32.totalorder %s28, %s29
    %p40 = scmp.eq.s32.totalorder %s20, 0
    %p41 = por %p39, %p40
    %p42 = scmp.ne.s32.totalorder %s28, %s29
    %p43 = scmp.eq.s32.totalorder %s21, 1
    %p44 = por %p42, %p43
    %p46 = scmp.ne.s32.totalorder %s29, %s45
    %p47 = scmp.eq.s32.totalorder %s21, 0
    %p48 = por %p46, %p47
    %s50 = sadd.s32 %s49, 1
    %p53 = scmp.eq.s32.totalorder %s15, 1
    %p54 = scmp.ne.s32.totalorder %s49, %s51
    %p55 = scmp.eq.s32.totalorder %s15, 0
    %p56 = por %p54, %p55
    %p57 = scmp.ne.s32.totalorder %s49, %s51
    %p58 = scmp.eq.s32.totalorder %s20, 1
    %p59 = por %p57, %p58
    %p60 = scmp.ne.s32.totalorder %s51, %s52
    %p61 = scmp.eq.s32.totalorder %s20, 0
    %p62 = por %p60, %p61
    %p63 = scmp.ne.s32.totalorder %s51, %s52
    %p64 = scmp.eq.s32.totalorder %s21, 1
    %p65 = por %p63, %p64
    %p67 = scmp.ne.s32.totalorder %s52, %s66
    %p68 = scmp.eq.s32.totalorder %s21, 0
    %p69 = por %p67, %p68
    %s71 = sadd.s32 %s70, 1
    %p74 = scmp.eq.s32.totalorder %s15, 1
    %p75 = scmp.ne.s32.totalorder %s70, %s72
    %p76 = scmp.eq.s32.totalorder %s15, 0
    %p77 = por %p75, %p76
    %p78 = scmp.ne.s32.totalorder %s70, %s72
    %p79 = scmp.eq.s32.totalorder %s20, 1
    %p80 = por %p78, %p79
    %p81 = scmp.ne.s32.totalorder %s72, %s73
    %p82 = scmp.eq.s32.totalorder %s20, 0
    %p83 = por %p81, %p82
    %p84 = scmp.ne.s32.totalorder %s72, %s73
    %p85 = scmp.eq.s32.totalorder %s21, 1
    %p86 = por %p84, %p85
    %p88 = scmp.ne.s32.totalorder %s73, %s87
    %p89 = scmp.eq.s32.totalorder %s21, 0
    %p90 = por %p88, %p89
    %s91 = ssub.s32 %s15, %s22
    %p92 = scmp.eq.s32.totalorder %s91, 0
    %s94 = sadd.s32 %s93, 1
    %s95 = scalar_select %p92, %s93, %s94
    %p98 = pneg %p92
    %p99 = scmp.eq.s32.totalorder %s15, 1
    %p100 = por %p98, %p99
    %p101 = scmp.ne.s32.totalorder %s93, %s96
    %p102 = scmp.eq.s32.totalorder %s15, 0
    %p103 = por %p101, %p102
    %p104 = scmp.ne.s32.totalorder %s93, %s96
    %p105 = scmp.eq.s32.totalorder %s20, 1
    %p106 = por %p104, %p105
    %p107 = scmp.ne.s32.totalorder %s96, %s97
    %p108 = scmp.eq.s32.totalorder %s20, 0
    %p109 = por %p107, %p108
    %p110 = scmp.ne.s32.totalorder %s96, %s97
    %p111 = scmp.eq.s32.totalorder %s21, 1
    %p112 = por %p110, %p111
    %p114 = scmp.ne.s32.totalorder %s97, %s113
    %p115 = scmp.eq.s32.totalorder %s21, 0
    %p116 = por %p114, %p115
    %s117 = ssub.s32 %s15, %s22
    %p118 = scmp.eq.s32.totalorder %s117, 0
    %s120 = sadd.s32 %s119, 1
    %s121 = scalar_select %p118, %s119, %s120
    %p124 = pneg %p118
    %p125 = scmp.eq.s32.totalorder %s15, 1
    %p126 = por %p124, %p125
    %p127 = scmp.ne.s32.totalorder %s119, %s122
    %p128 = scmp.eq.s32.totalorder %s15, 0
    %p129 = por %p127, %p128
    %p130 = scmp.ne.s32.totalorder %s119, %s122
    %p131 = scmp.eq.s32.totalorder %s20, 1
    %p132 = por %p130, %p131
    %p133 = scmp.ne.s32.totalorder %s122, %s123
    %p134 = scmp.eq.s32.totalorder %s20, 0
    %p135 = por %p133, %p134
    %p136 = scmp.ne.s32.totalorder %s122, %s123
    %p137 = scmp.eq.s32.totalorder %s21, 1
    %p138 = por %p136, %p137
    %p140 = scmp.ne.s32.totalorder %s123, %s139
    %p141 = scmp.eq.s32.totalorder %s21, 0
    %p142 = por %p140, %p141
    %s143 = ssub.s32 %s15, %s22
    %p144 = scmp.eq.s32.totalorder %s143, 0
    %s146 = sadd.s32 %s145, 1
    %s147 = scalar_select %p144, %s145, %s146
    %p150 = pneg %p144
    %p151 = scmp.eq.s32.totalorder %s15, 1
    %p152 = por %p150, %p151
    %p153 = scmp.ne.s32.totalorder %s145, %s148
    %p154 = scmp.eq.s32.totalorder %s15, 0
    %p155 = por %p153, %p154
    %p156 = scmp.ne.s32.totalorder %s145, %s148
    %p157 = scmp.eq.s32.totalorder %s20, 1
    %p158 = por %p156, %p157
    %p159 = scmp.ne.s32.totalorder %s148, %s149
    %p160 = scmp.eq.s32.totalorder %s20, 0
    %p161 = por %p159, %p160
    %p162 = scmp.ne.s32.totalorder %s148, %s149
    %p163 = scmp.eq.s32.totalorder %s21, 1
    %p164 = por %p162, %p163
    %p166 = scmp.ne.s32.totalorder %s149, %s165
    %p167 = scmp.eq.s32.totalorder %s21, 0
    %p168 = por %p166, %p167
    %s169 = ssub.s32 %s15, %s22
    %p170 = scmp.eq.s32.totalorder %s169, 0
    %s172 = sadd.s32 %s171, 1
    %s173 = scalar_select %p170, %s171, %s172
    %p176 = pneg %p170
    %p177 = scmp.eq.s32.totalorder %s15, 1
    %p178 = por %p176, %p177
    %p179 = scmp.ne.s32.totalorder %s171, %s174
    %p180 = scmp.eq.s32.totalorder %s15, 0
    %p181 = por %p179, %p180
    %p182 = scmp.ne.s32.totalorder %s171, %s174
    %p183 = scmp.eq.s32.totalorder %s20, 1
    %p184 = por %p182, %p183
    %p185 = scmp.ne.s32.totalorder %s174, %s175
    %p186 = scmp.eq.s32.totalorder %s20, 0
    %p187 = por %p185, %p186
    %p188 = scmp.ne.s32.totalorder %s174, %s175
    %p189 = scmp.eq.s32.totalorder %s21, 1
    %p190 = por %p188, %p189
    %p192 = scmp.ne.s32.totalorder %s175, %s191
    %p193 = scmp.eq.s32.totalorder %s21, 0
    %p194 = por %p192, %p193
    %s195 = ssub.s32 %s15, %s22
    %p196 = scmp.eq.s32.totalorder %s195, 0
    %s198 = sadd.s32 %s197, 1
    %s199 = scalar_select %p196, %s197, %s198
    %p202 = pneg %p196
    %p203 = scmp.eq.s32.totalorder %s15, 1
    %p204 = por %p202, %p203
    %p205 = scmp.ne.s32.totalorder %s197, %s200
    %p206 = scmp.eq.s32.totalorder %s15, 0
    %p207 = por %p205, %p206
    %p208 = scmp.ne.s32.totalorder %s197, %s200
    %p209 = scmp.eq.s32.totalorder %s20, 1
    %p210 = por %p208, %p209
    %p211 = scmp.ne.s32.totalorder %s200, %s201
    %p212 = scmp.eq.s32.totalorder %s20, 0
    %p213 = por %p211, %p212
    %p214 = scmp.ne.s32.totalorder %s200, %s201
    %p215 = scmp.eq.s32.totalorder %s21, 1
    %p216 = por %p214, %p215
    %p218 = scmp.ne.s32.totalorder %s201, %s217
    %p219 = scmp.eq.s32.totalorder %s21, 0
    %p220 = por %p218, %p219
    %s221 = ssub.s32 %s15, %s22
    %p222 = scmp.eq.s32.totalorder %s221, 0
    %s224 = sadd.s32 %s223, 1
    %s225 = scalar_select %p222, %s223, %s224
    %p228 = pneg %p222
    %p229 = scmp.eq.s32.totalorder %s15, 1
    %p230 = por %p228, %p229
    %p231 = scmp.ne.s32.totalorder %s223, %s226
    %p232 = scmp.eq.s32.totalorder %s15, 0
    %p233 = por %p231, %p232
    %p234 = scmp.ne.s32.totalorder %s223, %s226
    %p235 = scmp.eq.s32.totalorder %s20, 1
    %p236 = por %p234, %p235
    %p237 = scmp.ne.s32.totalorder %s226, %s227
    %p238 = scmp.eq.s32.totalorder %s20, 0
    %p239 = por %p237, %p238
    %p240 = scmp.ne.s32.totalorder %s226, %s227
    %p241 = scmp.eq.s32.totalorder %s21, 1
    %p242 = por %p240, %p241
    %p244 = scmp.ne.s32.totalorder %s227, %s243
    %p245 = scmp.eq.s32.totalorder %s21, 0
    %p246 = por %p244, %p245
    %p247 = scmp.le.s32.totalorder 1, %s15
    %p248 = scmp.lt.s32.totalorder %s15, 3
    %p249 = pnand %p247, %p248
    %p250 = pneg %p249
    // Predicated region
    $region9: #{basic_block_forward.3} parent=5 // pred_check
      _
    $region10: #{basic_block_forward.3} parent=5 // pred_check_branch
      %252 = sbr.rel (%p249) target = $region12
    $region11: #{basic_block_forward.3} parent=5 // pred_region
      %s253 = ssub.s32 %s15, 1
      // Predicated region
      $region13: #{basic_block_forward.3} parent=11 // pred_check
        %p254 = pneg %p62
      $region14: #{basic_block_forward.3} parent=11 // pred_check_branch
        %256 = sbr.rel (%p254) target = $region16
      $region15: #{basic_block_forward.3} parent=11 // pred_region
        _
      $region16: #{basic_block_forward.3} parent=11 // pred_fallthru
        _
      // Predicated region
      $region17: #{basic_block_forward.3} parent=11 // pred_check
        %p257 = pneg %p83
      $region18: #{basic_block_forward.3} parent=11 // pred_check_branch
        %259 = sbr.rel (%p257) target = $region20
      $region19: #{basic_block_forward.3} parent=11 // pred_region
        _
      $region20: #{basic_block_forward.3} parent=11 // pred_fallthru
        _
    $region12: #{basic_block_forward.3} parent=5 // pred_fallthru
      _
    %p260 = scmp.lt.s32.totalorder %s15, 2
    // Predicated region
    $region21: #{basic_block_forward.3} parent=5 // pred_check
      %p261 = pneg %p260
    $region22: #{basic_block_forward.3} parent=5 // pred_check_branch
      %263 = sbr.rel (%p261) target = $region24
    $region23: #{basic_block_forward.3} parent=5 // pred_region
      // Predicated region
      $region25: #{basic_block_forward.3} parent=23 // pred_check
        %p264 = pneg %p35
      $region26: #{basic_block_forward.3} parent=23 // pred_check_branch
        %266 = sbr.rel (%p264) target = $region28
      $region27: #{basic_block_forward.3} parent=23 // pred_region
        %p267 = scmp.lt.s32.totalorder %s15, 1
        %s268 = scalar_select %p267, %s15, 1
        %s269 = smul.addr %s268, 18
        %s270 = smul.addr %s269, 4
        %s271 = scalar_lea.vmem %s0, %s270
      $region28: #{basic_block_forward.3} parent=23 // pred_fallthru
        _
    $region24: #{basic_block_forward.3} parent=5 // pred_fallthru
      _
    %p272 = scmp.le.s32.totalorder 1, %s15
    %p273 = scmp.lt.s32.totalorder %s15, 3
    %p274 = pnand %p272, %p273
    %p275 = pneg %p274
    // Predicated region
    $region29: #{basic_block_forward.3} parent=5 // pred_check
      _
    $region30: #{basic_block_forward.3} parent=5 // pred_check_branch
      %277 = sbr.rel (%p274) target = $region32
    $region31: #{basic_block_forward.3} parent=5 // pred_region
      %s278 = ssub.s32 %s15, 1
      %p279 = scmp.lt.s32.totalorder %s20, 1
      %s280 = scalar_select %p279, %s20, 1
      %s281 = smul.addr %s280, 18
      %s282 = smul.addr %s281, 4
      %s283 = scalar_lea.vmem %s0, %s282
      %p284 = pneg %p41
      %p285 = pneg %p38
      %p286 = pneg %p62
      %p287 = pneg %p59
      %p288 = pneg %p83
      %p289 = pneg %p80
      %p290 = pneg %p109
      %p291 = pneg %p106
      %p292 = scmp.lt.s32.totalorder %s20, 1
      %s293 = scalar_select %p292, %s20, 1
      %s294 = smul.addr %s293, 8
      %s295 = smul.addr %s294, 4
      %s296 = scalar_lea.vmem %s3, %s295
      %p297 = pneg %p135
      %p298 = pneg %p132
      %p299 = scmp.lt.s32.totalorder %s20, 1
      %s300 = scalar_select %p299, %s20, 1
      %s301 = scalar_lea.vmem %s4, %s300
      %p302 = pneg %p161
      %p303 = pneg %p158
      %p304 = scmp.lt.s32.totalorder %s20, 1
      %s305 = scalar_select %p304, %s20, 1
      %s306 = scalar_lea.vmem %s5, %s305
      %p307 = pneg %p187
      %p308 = pneg %p184
      %p309 = scmp.lt.s32.totalorder %s20, 1
      %s310 = scalar_select %p309, %s20, 1
      %s311 = smul.addr %s310, 8
      %s312 = smul.addr %s311, 4
      %s313 = scalar_lea.vmem %s6, %s312
      %p314 = pneg %p213
      %p315 = pneg %p210
      %p316 = scmp.lt.s32.totalorder %s20, 1
      %s317 = scalar_select %p316, %s20, 1
      %s318 = scalar_lea.vmem %s7, %s317
      %p319 = pneg %p239
      %p320 = pneg %p236
      %p321 = scmp.lt.s32.totalorder %s20, 1
      %s322 = scalar_select %p321, %s20, 1
      %s323 = scalar_lea.vmem %s8, %s322
      %p324 = scmp.lt.s32.totalorder %s20, 1
      %s325 = scalar_select %p324, %s20, 1
      %s326 = smul.addr %s325, 18
      %s327 = smul.addr %s326, 4
      %s328 = scalar_lea.vmem %s0, %s327
      %p329 = scmp.lt.s32.totalorder %s20, 1
      %s330 = scalar_select %p329, %s20, 1
      %s331 = smul.addr %s330, 8
      %s332 = smul.addr %s331, 4
      %s333 = scalar_lea.vmem %s3, %s332
      %p334 = scmp.lt.s32.totalorder %s20, 1
      %s335 = scalar_select %p334, %s20, 1
      %s336 = scalar_lea.vmem %s4, %s335
      %p337 = scmp.lt.s32.totalorder %s20, 1
      %s338 = scalar_select %p337, %s20, 1
      %s339 = scalar_lea.vmem %s5, %s338
      %p340 = scmp.lt.s32.totalorder %s20, 1
      %s341 = scalar_select %p340, %s20, 1
      %s342 = smul.addr %s341, 8
      %s343 = smul.addr %s342, 4
      %s344 = scalar_lea.vmem %s6, %s343
      %p345 = scmp.lt.s32.totalorder %s20, 1
      %s346 = scalar_select %p345, %s20, 1
      %s347 = scalar_lea.vmem %s7, %s346
      %p348 = scmp.lt.s32.totalorder %s20, 1
      %s349 = scalar_select %p348, %s20, 1
      %s350 = scalar_lea.vmem %s8, %s349
      %v351 = vld [vmem:[%s328] sm:$0xf]
      %v352 = vld [vmem:[%s328 + $0x8] sm:$0xf]
      %v353 = vld [vmem:[%s328 + $0x10] sm:$0xf]
      %v354 = vld [vmem:[%s328 + $0x18] sm:$0xf]
      %v355 = vld [vmem:[%s328 + $0x20] sm:$0xf]
      %v356 = vld [vmem:[%s328 + $0x28] sm:$0xf]
      %v357 = vld [vmem:[%s328 + $0x30] sm:$0xf]
      %v358 = vld [vmem:[%s328 + $0x38] sm:$0xf]
      %v359 = vld [vmem:[%s1] sm:$0xf]
      %v360 = vld [vmem:[%s1 + $0x4] sm:$0xf]
      %v361 = vld [vmem:[%s1 + $0x8] sm:$0xf]
      %v362 = vld [vmem:[%s1 + $0xc] sm:$0xf]
      %v363 = vld [vmem:[%s1 + $0x10] sm:$0xf]
      %v364 = vld [vmem:[%s1 + $0x14] sm:$0xf]
      %v365 = vld [vmem:[%s1 + $0x18] sm:$0xf]
      %v366 = vld [vmem:[%s1 + $0x1c] sm:$0xf]
      %v367 = vld [vmem:[%s1 + $0x20] sm:$0xf]
      %v368 = vld [vmem:[%s1 + $0x24] sm:$0xf]
      %v369 = vld [vmem:[%s1 + $0x28] sm:$0xf]
      %v370 = vld [vmem:[%s1 + $0x2c] sm:$0xf]
      %v371 = vld [vmem:[%s1 + $0x30] sm:$0xf]
      %v372 = vld [vmem:[%s1 + $0x34] sm:$0xf]
      %v373 = vld [vmem:[%s1 + $0x38] sm:$0xf]
      %v374 = vld [vmem:[%s1 + $0x3c] sm:$0xf]
      %v375 = vld [vmem:[%s2] sm:$0xf]
      %v376 = vld [vmem:[%s2 + $0x4] sm:$0xf]
      %v377 = vld [vmem:[%s2 + $0x8] sm:$0xf]
      %v378 = vld [vmem:[%s2 + $0xc] sm:$0xf]
      %v379 = vld [vmem:[%s2 + $0x10] sm:$0xf]
      %v380 = vld [vmem:[%s2 + $0x14] sm:$0xf]
      %v381 = vld [vmem:[%s2 + $0x18] sm:$0xf]
      %v382 = vld [vmem:[%s2 + $0x1c] sm:$0xf]
      %v383 = vld [vmem:[%s2 + $0x20] sm:$0xf]
      %v384 = vld [vmem:[%s2 + $0x24] sm:$0xf]
      %v385 = vld [vmem:[%s2 + $0x28] sm:$0xf]
      %v386 = vld [vmem:[%s2 + $0x2c] sm:$0xf]
      %v387 = vld [vmem:[%s2 + $0x30] sm:$0xf]
      %v388 = vld [vmem:[%s2 + $0x34] sm:$0xf]
      %v389 = vld [vmem:[%s2 + $0x38] sm:$0xf]
      %v390 = vld [vmem:[%s2 + $0x3c] sm:$0xf]
      %v399 = vunpack.c.l.b16 %v351
      %v400 = vunpack.c.l.b16 %v352
      %v401 = vunpack.c.l.b16 %v353
      %v402 = vunpack.c.l.b16 %v354
      %v403 = vunpack.c.l.b16 %v355
      %v404 = vunpack.c.l.b16 %v356
      %v405 = vunpack.c.l.b16 %v357
      %v406 = vunpack.c.l.b16 %v358
      %v407 = vpack.c.b16 %v400, %v399
      %v408 = vpack.c.b16 %v402, %v401
      %v409 = vpack.c.b16 %v404, %v403
      %v410 = vpack.c.b16 %v406, %v405
      %v431 = vunpack.c.l.b16 %v375
      %v432 = vunpack.c.l.b16 %v376
      %v433 = vunpack.c.l.b16 %v377
      %v434 = vunpack.c.l.b16 %v378
      %v435 = vunpack.c.l.b16 %v379
      %v436 = vunpack.c.l.b16 %v380
      %v437 = vunpack.c.l.b16 %v381
      %v438 = vunpack.c.l.b16 %v382
      %v439 = vunpack.c.l.b16 %v383
      %v440 = vunpack.c.l.b16 %v384
      %v441 = vunpack.c.l.b16 %v385
      %v442 = vunpack.c.l.b16 %v386
      %v443 = vunpack.c.l.b16 %v387
      %v444 = vunpack.c.l.b16 %v388
      %v445 = vunpack.c.l.b16 %v389
      %v446 = vunpack.c.l.b16 %v390
      %v447 = vpack.c.b16 %v432, %v431
      %v448 = vpack.c.b16 %v434, %v433
      %v449 = vpack.c.b16 %v436, %v435
      %v450 = vpack.c.b16 %v438, %v437
      %v451 = vpack.c.b16 %v440, %v439
      %v452 = vpack.c.b16 %v442, %v441
      %v453 = vpack.c.b16 %v444, %v443
      %v454 = vpack.c.b16 %v446, %v445
      %463 = vmatpush.bf16.msra.mxu0 %v454
      %464 = vmatpush.bf16.msra.mxu0 %v453
      %465 = vmatpush.bf16.msra.mxu0 %v452
      %466 = vmatpush.bf16.msra.mxu0 %v451
      %467 = vmatpush.bf16.msra.mxu0 %v450
      %468 = vmatpush.bf16.msra.mxu0 %v449
      %469 = vmatpush.bf16.msra.mxu0 %v448
      %470 = vmatpush.bf16.msra.mxu0 %v447
      %471 = vmatmul.bf16.gmra.mxu0 %v407
      %v472 = vpop.f32.mrf.mxu0
      %v473 = vadd.f32 0.0, %v472
      %v474 = vpop.f32.mrf.mxu0
      %v475 = vadd.f32 0.0, %v474
      %476 = vmatmul.bf16.gmra.mxu0 %v408
      %v477 = vpop.f32.mrf.mxu0
      %v478 = vadd.f32 0.0, %v477
      %v479 = vpop.f32.mrf.mxu0
      %v480 = vadd.f32 0.0, %v479
      %481 = vmatmul.bf16.gmra.mxu0 %v409
      %v482 = vpop.f32.mrf.mxu0
      %v483 = vadd.f32 0.0, %v482
      %v484 = vpop.f32.mrf.mxu0
      %v485 = vadd.f32 0.0, %v484
      %486 = vmatmul.bf16.gmra.mxu0 %v410
      %v487 = vpop.f32.mrf.mxu0
      %v488 = vadd.f32 0.0, %v487
      %v489 = vpop.f32.mrf.mxu0
      %v490 = vadd.f32 0.0, %v489
      %491 = vdwg.mxu0
      %v492 = vld [vmem:[%s328] sm:$0xf]
      %v493 = vld [vmem:[%s328 + $0x4] sm:$0x1]
      %v494 = vld [vmem:[%s328 + $0x8] sm:$0xf]
      %v495 = vld [vmem:[%s328 + $0xc] sm:$0x1]
      %v496 = vld [vmem:[%s328 + $0x10] sm:$0xf]
      %v497 = vld [vmem:[%s328 + $0x14] sm:$0x1]
      %v498 = vld [vmem:[%s328 + $0x18] sm:$0xf]
      %v499 = vld [vmem:[%s328 + $0x1c] sm:$0x1]
      %v500 = vld [vmem:[%s328 + $0x20] sm:$0xf]
      %v501 = vld [vmem:[%s328 + $0x24] sm:$0x1]
      %v502 = vld [vmem:[%s328 + $0x28] sm:$0xf]
      %v503 = vld [vmem:[%s328 + $0x2c] sm:$0x1]
      %v504 = vld [vmem:[%s328 + $0x30] sm:$0xf]
      %v505 = vld [vmem:[%s328 + $0x34] sm:$0x1]
      %v506 = vld [vmem:[%s328 + $0x38] sm:$0xf]
      %v507 = vld [vmem:[%s328 + $0x3c] sm:$0x1]
      %vm508 = vsmask.f32 3328
      %vm509 = vsmask.f32 7440
      %vm510 = vmor %vm508, %vm509
      %v512 = vshrl.u32 %v492, 16
      %v514 = vrot.slane %v512, 4
      %v515 = vshll.u32 %v492, 16
      %v517 = vrot.slane %v515, 5
      %v518 = vor.u32 %v514, %v517
      %v519 = vrot.slane %v518, 4
      %v521 = vshll.u32 %v493, 16
      %v523 = vrot.slane %v521, 5
      %v524 = vsel %vm510, %v519, %v523
      %v526 = vshrl.u32 %v494, 16
      %v528 = vrot.slane %v526, 4
      %v529 = vshll.u32 %v494, 16
      %v531 = vrot.slane %v529, 5
      %v532 = vor.u32 %v528, %v531
      %v533 = vrot.slane %v532, 4
      %v535 = vshll.u32 %v495, 16
      %v537 = vrot.slane %v535, 5
      %v538 = vsel %vm510, %v533, %v537
      %v540 = vshrl.u32 %v496, 16
      %v542 = vrot.slane %v540, 4
      %v543 = vshll.u32 %v496, 16
      %v545 = vrot.slane %v543, 5
      %v546 = vor.u32 %v542, %v545
      %v547 = vrot.slane %v546, 4
      %v549 = vshll.u32 %v497, 16
      %v551 = vrot.slane %v549, 5
      %v552 = vsel %vm510, %v547, %v551
      %v554 = vshrl.u32 %v498, 16
      %v556 = vrot.slane %v554, 4
      %v557 = vshll.u32 %v498, 16
      %v559 = vrot.slane %v557, 5
      %v560 = vor.u32 %v556, %v559
      %v561 = vrot.slane %v560, 4
      %v563 = vshll.u32 %v499, 16
      %v565 = vrot.slane %v563, 5
      %v566 = vsel %vm510, %v561, %v565
      %v568 = vshrl.u32 %v500, 16
      %v570 = vrot.slane %v568, 4
      %v571 = vshll.u32 %v500, 16
      %v573 = vrot.slane %v571, 5
      %v574 = vor.u32 %v570, %v573
      %v575 = vrot.slane %v574, 4
      %v577 = vshll.u32 %v501, 16
      %v579 = vrot.slane %v577, 5
      %v580 = vsel %vm510, %v575, %v579
      %v582 = vshrl.u32 %v502, 16
      %v584 = vrot.slane %v582, 4
      %v585 = vshll.u32 %v502, 16
      %v587 = vrot.slane %v585, 5
      %v588 = vor.u32 %v584, %v587
      %v589 = vrot.slane %v588, 4
      %v591 = vshll.u32 %v503, 16
      %v593 = vrot.slane %v591, 5
      %v594 = vsel %vm510, %v589, %v593
      %v596 = vshrl.u32 %v504, 16
      %v598 = vrot.slane %v596, 4
      %v599 = vshll.u32 %v504, 16
      %v601 = vrot.slane %v599, 5
      %v602 = vor.u32 %v598, %v601
      %v603 = vrot.slane %v602, 4
      %v605 = vshll.u32 %v505, 16
      %v607 = vrot.slane %v605, 5
      %v608 = vsel %vm510, %v603, %v607
      %v610 = vshrl.u32 %v506, 16
      %v612 = vrot.slane %v610, 4
      %v613 = vshll.u32 %v506, 16
      %v615 = vrot.slane %v613, 5
      %v616 = vor.u32 %v612, %v615
      %v617 = vrot.slane %v616, 4
      %v619 = vshll.u32 %v507, 16
      %v621 = vrot.slane %v619, 5
      %v622 = vsel %vm510, %v617, %v621
      %s623 = scalar_lea.vmem %s1, 64
      %v624 = vld [vmem:[%s623] sm:$0xf]
      %v625 = vld [vmem:[%s623 + $0x4] sm:$0xf]
      %v626 = vld [vmem:[%s623 + $0x8] sm:$0xf]
      %v627 = vld [vmem:[%s623 + $0xc] sm:$0xf]
      %v628 = vld [vmem:[%s623 + $0x10] sm:$0xf]
      %v629 = vld [vmem:[%s623 + $0x14] sm:$0xf]
      %v630 = vld [vmem:[%s623 + $0x18] sm:$0xf]
      %v631 = vld [vmem:[%s623 + $0x1c] sm:$0xf]
      %v632 = vld [vmem:[%s623 + $0x20] sm:$0xf]
      %v633 = vld [vmem:[%s623 + $0x24] sm:$0xf]
      %v634 = vld [vmem:[%s623 + $0x28] sm:$0xf]
      %v635 = vld [vmem:[%s623 + $0x2c] sm:$0xf]
      %v636 = vld [vmem:[%s623 + $0x30] sm:$0xf]
      %v637 = vld [vmem:[%s623 + $0x34] sm:$0xf]
      %v638 = vld [vmem:[%s623 + $0x38] sm:$0xf]
      %v639 = vld [vmem:[%s623 + $0x3c] sm:$0xf]
      %v640 = vunpack.c.l.b16 %v524
      %v641 = vunpack.c.l.b16 %v538
      %v642 = vunpack.c.l.b16 %v552
      %v643 = vunpack.c.l.b16 %v566
      %v644 = vunpack.c.l.b16 %v580
      %v645 = vunpack.c.l.b16 %v594
      %v646 = vunpack.c.l.b16 %v608
      %v647 = vunpack.c.l.b16 %v622
      %v648 = vpack.c.b16 %v641, %v640
      %v649 = vpack.c.b16 %v643, %v642
      %v650 = vpack.c.b16 %v645, %v644
      %v651 = vpack.c.b16 %v647, %v646
      %v672 = vunpack.c.l.b16 %v624
      %v673 = vunpack.c.l.b16 %v625
      %v674 = vunpack.c.l.b16 %v626
      %v675 = vunpack.c.l.b16 %v627
      %v676 = vunpack.c.l.b16 %v628
      %v677 = vunpack.c.l.b16 %v629
      %v678 = vunpack.c.l.b16 %v630
      %v679 = vunpack.c.l.b16 %v631
      %v680 = vunpack.c.l.b16 %v632
      %v681 = vunpack.c.l.b16 %v633
      %v682 = vunpack.c.l.b16 %v634
      %v683 = vunpack.c.l.b16 %v635
      %v684 = vunpack.c.l.b16 %v636
      %v685 = vunpack.c.l.b16 %v637
      %v686 = vunpack.c.l.b16 %v638
      %v687 = vunpack.c.l.b16 %v639
      %v688 = vpack.c.b16 %v673, %v672
      %v689 = vpack.c.b16 %v675, %v674
      %v690 = vpack.c.b16 %v677, %v676
      %v691 = vpack.c.b16 %v679, %v678
      %v692 = vpack.c.b16 %v681, %v680
      %v693 = vpack.c.b16 %v683, %v682
      %v694 = vpack.c.b16 %v685, %v684
      %v695 = vpack.c.b16 %v687, %v686
      %704 = vmatpush.bf16.msra.mxu0 %v695
      %705 = vmatpush.bf16.msra.mxu0 %v694
      %706 = vmatpush.bf16.msra.mxu0 %v693
      %707 = vmatpush.bf16.msra.mxu0 %v692
      %708 = vmatpush.bf16.msra.mxu0 %v691
      %709 = vmatpush.bf16.msra.mxu0 %v690
      %710 = vmatpush.bf16.msra.mxu0 %v689
      %711 = vmatpush.bf16.msra.mxu0 %v688
      %712 = vmatmul.bf16.gmra.mxu0 %v648
      %v713 = vpop.f32.mrf.mxu0
      %v714 = vadd.f32 0.0, %v713
      %v715 = vpop.f32.mrf.mxu0
      %v716 = vadd.f32 0.0, %v715
      %717 = vmatmul.bf16.gmra.mxu0 %v649
      %v718 = vpop.f32.mrf.mxu0
      %v719 = vadd.f32 0.0, %v718
      %v720 = vpop.f32.mrf.mxu0
      %v721 = vadd.f32 0.0, %v720
      %722 = vmatmul.bf16.gmra.mxu0 %v650
      %v723 = vpop.f32.mrf.mxu0
      %v724 = vadd.f32 0.0, %v723
      %v725 = vpop.f32.mrf.mxu0
      %v726 = vadd.f32 0.0, %v725
      %727 = vmatmul.bf16.gmra.mxu0 %v651
      %v728 = vpop.f32.mrf.mxu0
      %v729 = vadd.f32 0.0, %v728
      %v730 = vpop.f32.mrf.mxu0
      %v731 = vadd.f32 0.0, %v730
      %732 = vdwg.mxu0
      %v749 = vunpack.c.l.b16 %v359
      %v750 = vunpack.c.l.b16 %v360
      %v751 = vunpack.c.l.b16 %v361
      %v752 = vunpack.c.l.b16 %v362
      %v753 = vunpack.c.l.b16 %v363
      %v754 = vunpack.c.l.b16 %v364
      %v755 = vunpack.c.l.b16 %v365
      %v756 = vunpack.c.l.b16 %v366
      %v757 = vunpack.c.l.b16 %v367
      %v758 = vunpack.c.l.b16 %v368
      %v759 = vunpack.c.l.b16 %v369
      %v760 = vunpack.c.l.b16 %v370
      %v761 = vunpack.c.l.b16 %v371
      %v762 = vunpack.c.l.b16 %v372
      %v763 = vunpack.c.l.b16 %v373
      %v764 = vunpack.c.l.b16 %v374
      %v765 = vpack.c.b16 %v750, %v749
      %v766 = vpack.c.b16 %v752, %v751
      %v767 = vpack.c.b16 %v754, %v753
      %v768 = vpack.c.b16 %v756, %v755
      %v769 = vpack.c.b16 %v758, %v757
      %v770 = vpack.c.b16 %v760, %v759
      %v771 = vpack.c.b16 %v762, %v761
      %v772 = vpack.c.b16 %v764, %v763
      %781 = vmatpush.bf16.msra.mxu0 %v772
      %782 = vmatpush.bf16.msra.mxu0 %v771
      %783 = vmatpush.bf16.msra.mxu0 %v770
      %784 = vmatpush.bf16.msra.mxu0 %v769
      %785 = vmatpush.bf16.msra.mxu0 %v768
      %786 = vmatpush.bf16.msra.mxu0 %v767
      %787 = vmatpush.bf16.msra.mxu0 %v766
      %788 = vmatpush.bf16.msra.mxu0 %v765
      %789 = vmatmul.bf16.gmra.mxu0 %v407
      %v790 = vpop.f32.mrf.mxu0
      %v791 = vadd.f32 %v714, %v790
      %v792 = vpop.f32.mrf.mxu0
      %v793 = vadd.f32 %v716, %v792
      %794 = vmatmul.bf16.gmra.mxu0 %v408
      %v795 = vpop.f32.mrf.mxu0
      %v796 = vadd.f32 %v719, %v795
      %v797 = vpop.f32.mrf.mxu0
      %v798 = vadd.f32 %v721, %v797
      %799 = vmatmul.bf16.gmra.mxu0 %v409
      %v800 = vpop.f32.mrf.mxu0
      %v801 = vadd.f32 %v724, %v800
      %v802 = vpop.f32.mrf.mxu0
      %v803 = vadd.f32 %v726, %v802
      %804 = vmatmul.bf16.gmra.mxu0 %v410
      %v805 = vpop.f32.mrf.mxu0
      %v806 = vadd.f32 %v729, %v805
      %v807 = vpop.f32.mrf.mxu0
      %v808 = vadd.f32 %v731, %v807
      %809 = vdwg.mxu0
      %s810 = scalar_lea.vmem %s328, 8
      %v811 = vld [vmem:[%s810] sm:$0xf]
      %v812 = vld [vmem:[%s810 + $0x8] sm:$0xf]
      %v813 = vld [vmem:[%s810 + $0x10] sm:$0xf]
      %v814 = vld [vmem:[%s810 + $0x18] sm:$0xf]
      %v815 = vld [vmem:[%s810 + $0x20] sm:$0xf]
      %v816 = vld [vmem:[%s810 + $0x28] sm:$0xf]
      %v817 = vld [vmem:[%s810 + $0x30] sm:$0xf]
      %v818 = vld [vmem:[%s810 + $0x38] sm:$0xf]
      %s819 = scalar_lea.vmem %s1, 128
      %v820 = vld [vmem:[%s819] sm:$0xf]
      %v821 = vld [vmem:[%s819 + $0x4] sm:$0xf]
      %v822 = vld [vmem:[%s819 + $0x8] sm:$0xf]
      %v823 = vld [vmem:[%s819 + $0xc] sm:$0xf]
      %v824 = vld [vmem:[%s819 + $0x10] sm:$0xf]
      %v825 = vld [vmem:[%s819 + $0x14] sm:$0xf]
      %v826 = vld [vmem:[%s819 + $0x18] sm:$0xf]
      %v827 = vld [vmem:[%s819 + $0x1c] sm:$0xf]
      %v828 = vld [vmem:[%s819 + $0x20] sm:$0xf]
      %v829 = vld [vmem:[%s819 + $0x24] sm:$0xf]
      %v830 = vld [vmem:[%s819 + $0x28] sm:$0xf]
      %v831 = vld [vmem:[%s819 + $0x2c] sm:$0xf]
      %v832 = vld [vmem:[%s819 + $0x30] sm:$0xf]
      %v833 = vld [vmem:[%s819 + $0x34] sm:$0xf]
      %v834 = vld [vmem:[%s819 + $0x38] sm:$0xf]
      %v835 = vld [vmem:[%s819 + $0x3c] sm:$0xf]
      %v844 = vunpack.c.l.b16 %v811
      %v845 = vunpack.c.l.b16 %v812
      %v846 = vunpack.c.l.b16 %v813
      %v847 = vunpack.c.l.b16 %v814
      %v848 = vunpack.c.l.b16 %v815
      %v849 = vunpack.c.l.b16 %v816
      %v850 = vunpack.c.l.b16 %v817
      %v851 = vunpack.c.l.b16 %v818
      %v852 = vpack.c.b16 %v845, %v844
      %v853 = vpack.c.b16 %v847, %v846
      %v854 = vpack.c.b16 %v849, %v848
      %v855 = vpack.c.b16 %v851, %v850
      %v876 = vunpack.c.l.b16 %v820
      %v877 = vunpack.c.l.b16 %v821
      %v878 = vunpack.c.l.b16 %v822
      %v879 = vunpack.c.l.b16 %v823
      %v880 = vunpack.c.l.b16 %v824
      %v881 = vunpack.c.l.b16 %v825
      %v882 = vunpack.c.l.b16 %v826
      %v883 = vunpack.c.l.b16 %v827
      %v884 = vunpack.c.l.b16 %v828
      %v885 = vunpack.c.l.b16 %v829
      %v886 = vunpack.c.l.b16 %v830
      %v887 = vunpack.c.l.b16 %v831
      %v888 = vunpack.c.l.b16 %v832
      %v889 = vunpack.c.l.b16 %v833
      %v890 = vunpack.c.l.b16 %v834
      %v891 = vunpack.c.l.b16 %v835
      %v892 = vpack.c.b16 %v877, %v876
      %v893 = vpack.c.b16 %v879, %v878
      %v894 = vpack.c.b16 %v881, %v880
      %v895 = vpack.c.b16 %v883, %v882
      %v896 = vpack.c.b16 %v885, %v884
      %v897 = vpack.c.b16 %v887, %v886
      %v898 = vpack.c.b16 %v889, %v888
      %v899 = vpack.c.b16 %v891, %v890
      %908 = vmatpush.bf16.msra.mxu0 %v899
      %909 = vmatpush.bf16.msra.mxu0 %v898
      %910 = vmatpush.bf16.msra.mxu0 %v897
      %911 = vmatpush.bf16.msra.mxu0 %v896
      %912 = vmatpush.bf16.msra.mxu0 %v895
      %913 = vmatpush.bf16.msra.mxu0 %v894
      %914 = vmatpush.bf16.msra.mxu0 %v893
      %915 = vmatpush.bf16.msra.mxu0 %v892
      %916 = vmatmul.bf16.gmra.mxu0 %v852
      %v917 = vpop.f32.mrf.mxu0
      %v918 = vadd.f32 0.0, %v917
      %v919 = vpop.f32.mrf.mxu0
      %v920 = vadd.f32 0.0, %v919
      %921 = vmatmul.bf16.gmra.mxu0 %v853
      %v922 = vpop.f32.mrf.mxu0
      %v923 = vadd.f32 0.0, %v922
      %v924 = vpop.f32.mrf.mxu0
      %v925 = vadd.f32 0.0, %v924
      %926 = vmatmul.bf16.gmra.mxu0 %v854
      %v927 = vpop.f32.mrf.mxu0
      %v928 = vadd.f32 0.0, %v927
      %v929 = vpop.f32.mrf.mxu0
      %v930 = vadd.f32 0.0, %v929
      %931 = vmatmul.bf16.gmra.mxu0 %v855
      %v932 = vpop.f32.mrf.mxu0
      %v933 = vadd.f32 0.0, %v932
      %v934 = vpop.f32.mrf.mxu0
      %v935 = vadd.f32 0.0, %v934
      %936 = vdwg.mxu0
      %v937 = vadd.f32 %v791, %v918
      %v938 = vadd.f32 %v793, %v920
      %v939 = vadd.f32 %v796, %v923
      %v940 = vadd.f32 %v798, %v925
      %v941 = vadd.f32 %v801, %v928
      %v942 = vadd.f32 %v803, %v930
      %v943 = vadd.f32 %v806, %v933
      %v944 = vadd.f32 %v808, %v935
      %v945 = vld [vmem:[%s810] sm:$0xf]
      %v946 = vld [vmem:[%s810 + $0x4] sm:$0x1]
      %v947 = vld [vmem:[%s810 + $0x8] sm:$0xf]
      %v948 = vld [vmem:[%s810 + $0xc] sm:$0x1]
      %v949 = vld [vmem:[%s810 + $0x10] sm:$0xf]
      %v950 = vld [vmem:[%s810 + $0x14] sm:$0x1]
      %v951 = vld [vmem:[%s810 + $0x18] sm:$0xf]
      %v952 = vld [vmem:[%s810 + $0x1c] sm:$0x1]
      %v953 = vld [vmem:[%s810 + $0x20] sm:$0xf]
      %v954 = vld [vmem:[%s810 + $0x24] sm:$0x1]
      %v955 = vld [vmem:[%s810 + $0x28] sm:$0xf]
      %v956 = vld [vmem:[%s810 + $0x2c] sm:$0x1]
      %v957 = vld [vmem:[%s810 + $0x30] sm:$0xf]
      %v958 = vld [vmem:[%s810 + $0x34] sm:$0x1]
      %v959 = vld [vmem:[%s810 + $0x38] sm:$0xf]
      %v960 = vld [vmem:[%s810 + $0x3c] sm:$0x1]
      %v962 = vshrl.u32 %v945, 16
      %v964 = vrot.slane %v962, 4
      %v965 = vshll.u32 %v945, 16
      %v967 = vrot.slane %v965, 5
      %v968 = vor.u32 %v964, %v967
      %v969 = vrot.slane %v968, 4
      %v971 = vshll.u32 %v946, 16
      %v973 = vrot.slane %v971, 5
      %v974 = vsel %vm510, %v969, %v973
      %v976 = vshrl.u32 %v947, 16
      %v978 = vrot.slane %v976, 4
      %v979 = vshll.u32 %v947, 16
      %v981 = vrot.slane %v979, 5
      %v982 = vor.u32 %v978, %v981
      %v983 = vrot.slane %v982, 4
      %v985 = vshll.u32 %v948, 16
      %v987 = vrot.slane %v985, 5
      %v988 = vsel %vm510, %v983, %v987
      %v990 = vshrl.u32 %v949, 16
      %v992 = vrot.slane %v990, 4
      %v993 = vshll.u32 %v949, 16
      %v995 = vrot.slane %v993, 5
      %v996 = vor.u32 %v992, %v995
      %v997 = vrot.slane %v996, 4
      %v999 = vshll.u32 %v950, 16
      %v1001 = vrot.slane %v999, 5
      %v1002 = vsel %vm510, %v997, %v1001
      %v1004 = vshrl.u32 %v951, 16
      %v1006 = vrot.slane %v1004, 4
      %v1007 = vshll.u32 %v951, 16
      %v1009 = vrot.slane %v1007, 5
      %v1010 = vor.u32 %v1006, %v1009
      %v1011 = vrot.slane %v1010, 4
      %v1013 = vshll.u32 %v952, 16
      %v1015 = vrot.slane %v1013, 5
      %v1016 = vsel %vm510, %v1011, %v1015
      %v1018 = vshrl.u32 %v953, 16
      %v1020 = vrot.slane %v1018, 4
      %v1021 = vshll.u32 %v953, 16
      %v1023 = vrot.slane %v1021, 5
      %v1024 = vor.u32 %v1020, %v1023
      %v1025 = vrot.slane %v1024, 4
      %v1027 = vshll.u32 %v954, 16
      %v1029 = vrot.slane %v1027, 5
      %v1030 = vsel %vm510, %v1025, %v1029
      %v1032 = vshrl.u32 %v955, 16
      %v1034 = vrot.slane %v1032, 4
      %v1035 = vshll.u32 %v955, 16
      %v1037 = vrot.slane %v1035, 5
      %v1038 = vor.u32 %v1034, %v1037
      %v1039 = vrot.slane %v1038, 4
      %v1041 = vshll.u32 %v956, 16
      %v1043 = vrot.slane %v1041, 5
      %v1044 = vsel %vm510, %v1039, %v1043
      %v1046 = vshrl.u32 %v957, 16
      %v1048 = vrot.slane %v1046, 4
      %v1049 = vshll.u32 %v957, 16
      %v1051 = vrot.slane %v1049, 5
      %v1052 = vor.u32 %v1048, %v1051
      %v1053 = vrot.slane %v1052, 4
      %v1055 = vshll.u32 %v958, 16
      %v1057 = vrot.slane %v1055, 5
      %v1058 = vsel %vm510, %v1053, %v1057
      %v1060 = vshrl.u32 %v959, 16
      %v1062 = vrot.slane %v1060, 4
      %v1063 = vshll.u32 %v959, 16
      %v1065 = vrot.slane %v1063, 5
      %v1066 = vor.u32 %v1062, %v1065
      %v1067 = vrot.slane %v1066, 4
      %v1069 = vshll.u32 %v960, 16
      %v1071 = vrot.slane %v1069, 5
      %v1072 = vsel %vm510, %v1067, %v1071
      %s1073 = scalar_lea.vmem %s1, 192
      %v1074 = vld [vmem:[%s1073] sm:$0xf]
      %v1075 = vld [vmem:[%s1073 + $0x4] sm:$0xf]
      %v1076 = vld [vmem:[%s1073 + $0x8] sm:$0xf]
      %v1077 = vld [vmem:[%s1073 + $0xc] sm:$0xf]
      %v1078 = vld [vmem:[%s1073 + $0x10] sm:$0xf]
      %v1079 = vld [vmem:[%s1073 + $0x14] sm:$0xf]
      %v1080 = vld [vmem:[%s1073 + $0x18] sm:$0xf]
      %v1081 = vld [vmem:[%s1073 + $0x1c] sm:$0xf]
      %v1082 = vld [vmem:[%s1073 + $0x20] sm:$0xf]
      %v1083 = vld [vmem:[%s1073 + $0x24] sm:$0xf]
      %v1084 = vld [vmem:[%s1073 + $0x28] sm:$0xf]
      %v1085 = vld [vmem:[%s1073 + $0x2c] sm:$0xf]
      %v1086 = vld [vmem:[%s1073 + $0x30] sm:$0xf]
      %v1087 = vld [vmem:[%s1073 + $0x34] sm:$0xf]
      %v1088 = vld [vmem:[%s1073 + $0x38] sm:$0xf]
      %v1089 = vld [vmem:[%s1073 + $0x3c] sm:$0xf]
      %v1090 = vunpack.c.l.b16 %v974
      %v1091 = vunpack.c.l.b16 %v988
      %v1092 = vunpack.c.l.b16 %v1002
      %v1093 = vunpack.c.l.b16 %v1016
      %v1094 = vunpack.c.l.b16 %v1030
      %v1095 = vunpack.c.l.b16 %v1044
      %v1096 = vunpack.c.l.b16 %v1058
      %v1097 = vunpack.c.l.b16 %v1072
      %v1098 = vpack.c.b16 %v1091, %v1090
      %v1099 = vpack.c.b16 %v1093, %v1092
      %v1100 = vpack.c.b16 %v1095, %v1094
      %v1101 = vpack.c.b16 %v1097, %v1096
      %v1122 = vunpack.c.l.b16 %v1074
      %v1123 = vunpack.c.l.b16 %v1075
      %v1124 = vunpack.c.l.b16 %v1076
      %v1125 = vunpack.c.l.b16 %v1077
      %v1126 = vunpack.c.l.b16 %v1078
      %v1127 = vunpack.c.l.b16 %v1079
      %v1128 = vunpack.c.l.b16 %v1080
      %v1129 = vunpack.c.l.b16 %v1081
      %v1130 = vunpack.c.l.b16 %v1082
      %v1131 = vunpack.c.l.b16 %v1083
      %v1132 = vunpack.c.l.b16 %v1084
      %v1133 = vunpack.c.l.b16 %v1085
      %v1134 = vunpack.c.l.b16 %v1086
      %v1135 = vunpack.c.l.b16 %v1087
      %v1136 = vunpack.c.l.b16 %v1088
      %v1137 = vunpack.c.l.b16 %v1089
      %v1138 = vpack.c.b16 %v1123, %v1122
      %v1139 = vpack.c.b16 %v1125, %v1124
      %v1140 = vpack.c.b16 %v1127, %v1126
      %v1141 = vpack.c.b16 %v1129, %v1128
      %v1142 = vpack.c.b16 %v1131, %v1130
      %v1143 = vpack.c.b16 %v1133, %v1132
      %v1144 = vpack.c.b16 %v1135, %v1134
      %v1145 = vpack.c.b16 %v1137, %v1136
      %1154 = vmatpush.bf16.msra.mxu0 %v1145
      %1155 = vmatpush.bf16.msra.mxu0 %v1144
      %1156 = vmatpush.bf16.msra.mxu0 %v1143
      %1157 = vmatpush.bf16.msra.mxu0 %v1142
      %1158 = vmatpush.bf16.msra.mxu0 %v1141
      %1159 = vmatpush.bf16.msra.mxu0 %v1140
      %1160 = vmatpush.bf16.msra.mxu0 %v1139
      %1161 = vmatpush.bf16.msra.mxu0 %v1138
      %1162 = vmatmul.bf16.gmra.mxu0 %v1098
      %v1163 = vpop.f32.mrf.mxu0
      %v1164 = vadd.f32 0.0, %v1163
      %v1165 = vpop.f32.mrf.mxu0
      %v1166 = vadd.f32 0.0, %v1165
      %1167 = vmatmul.bf16.gmra.mxu0 %v1099
      %v1168 = vpop.f32.mrf.mxu0
      %v1169 = vadd.f32 0.0, %v1168
      %v1170 = vpop.f32.mrf.mxu0
      %v1171 = vadd.f32 0.0, %v1170
      %1172 = vmatmul.bf16.gmra.mxu0 %v1100
      %v1173 = vpop.f32.mrf.mxu0
      %v1174 = vadd.f32 0.0, %v1173
      %v1175 = vpop.f32.mrf.mxu0
      %v1176 = vadd.f32 0.0, %v1175
      %1177 = vmatmul.bf16.gmra.mxu0 %v1101
      %v1178 = vpop.f32.mrf.mxu0
      %v1179 = vadd.f32 0.0, %v1178
      %v1180 = vpop.f32.mrf.mxu0
      %v1181 = vadd.f32 0.0, %v1180
      %1182 = vdwg.mxu0
      %v1183 = vadd.f32 %v937, %v1164
      %v1184 = vadd.f32 %v938, %v1166
      %v1185 = vadd.f32 %v939, %v1169
      %v1186 = vadd.f32 %v940, %v1171
      %v1187 = vadd.f32 %v941, %v1174
      %v1188 = vadd.f32 %v942, %v1176
      %v1189 = vadd.f32 %v943, %v1179
      %v1190 = vadd.f32 %v944, %v1181
      %v1191 = vpack.c.bf16 %v1183, %v1183
      %v1192 = vpack.c.bf16 %v1184, %v1184
      %v1193 = vpack.c.bf16 %v1185, %v1185
      %v1194 = vpack.c.bf16 %v1186, %v1186
      %v1195 = vpack.c.bf16 %v1187, %v1187
      %v1196 = vpack.c.bf16 %v1188, %v1188
      %v1197 = vpack.c.bf16 %v1189, %v1189
      %v1198 = vpack.c.bf16 %v1190, %v1190
      %1199 = vst [vmem:[%s333] sm:$0xf] %v1191
      %1200 = vst [vmem:[%s333 + $0x4] sm:$0xf] %v1192
      %1201 = vst [vmem:[%s333 + $0x8] sm:$0xf] %v1193
      %1202 = vst [vmem:[%s333 + $0xc] sm:$0xf] %v1194
      %1203 = vst [vmem:[%s333 + $0x10] sm:$0xf] %v1195
      %1204 = vst [vmem:[%s333 + $0x14] sm:$0xf] %v1196
      %1205 = vst [vmem:[%s333 + $0x18] sm:$0xf] %v1197
      %1206 = vst [vmem:[%s333 + $0x1c] sm:$0xf] %v1198
      %v1207 = vadd.f32 %v1183, %v1184
      %v1208 = vadd.f32 %v1207, %v1185
      %v1209 = vadd.f32 %v1208, %v1186
      %v1210 = vadd.f32 %v1209, %v1187
      %v1211 = vadd.f32 %v1210, %v1188
      %v1212 = vadd.f32 %v1211, %v1189
      %v1213 = vadd.f32 %v1212, %v1190
      %v1214 = vrot.slane %v1213, 4
      %v1215 = vadd.f32 %v1213, %v1214
      %v1216 = vrot.slane %v1215, 2
      %v1217 = vadd.f32 %v1215, %v1216
      %v1218 = vrot.slane %v1217, 1
      %v1219 = vadd.f32 %v1217, %v1218
      %1220 = vst [vmem:[%s336] sm:$0x1] %v1219
      %v1221 = vmul.f32 %v1183, %v1183
      %v1222 = vmul.f32 %v1184, %v1184
      %v1223 = vmul.f32 %v1185, %v1185
      %v1224 = vmul.f32 %v1186, %v1186
      %v1225 = vmul.f32 %v1187, %v1187
      %v1226 = vmul.f32 %v1188, %v1188
      %v1227 = vmul.f32 %v1189, %v1189
      %v1228 = vmul.f32 %v1190, %v1190
      %v1229 = vadd.f32 %v1221, %v1222
      %v1230 = vadd.f32 %v1229, %v1223
      %v1231 = vadd.f32 %v1230, %v1224
      %v1232 = vadd.f32 %v1231, %v1225
      %v1233 = vadd.f32 %v1232, %v1226
      %v1234 = vadd.f32 %v1233, %v1227
      %v1235 = vadd.f32 %v1234, %v1228
      %v1236 = vrot.slane %v1235, 4
      %v1237 = vadd.f32 %v1235, %v1236
      %v1238 = vrot.slane %v1237, 2
      %v1239 = vadd.f32 %v1237, %v1238
      %v1240 = vrot.slane %v1239, 1
      %v1241 = vadd.f32 %v1239, %v1240
      %1242 = vst [vmem:[%s339] sm:$0x1] %v1241
      %v1243 = vpack.c.bf16 %v473, %v473
      %v1244 = vpack.c.bf16 %v475, %v475
      %v1245 = vpack.c.bf16 %v478, %v478
      %v1246 = vpack.c.bf16 %v480, %v480
      %v1247 = vpack.c.bf16 %v483, %v483
      %v1248 = vpack.c.bf16 %v485, %v485
      %v1249 = vpack.c.bf16 %v488, %v488
      %v1250 = vpack.c.bf16 %v490, %v490
      %1251 = vst [vmem:[%s344] sm:$0xf] %v1243
      %1252 = vst [vmem:[%s344 + $0x4] sm:$0xf] %v1244
      %1253 = vst [vmem:[%s344 + $0x8] sm:$0xf] %v1245
      %1254 = vst [vmem:[%s344 + $0xc] sm:$0xf] %v1246
      %1255 = vst [vmem:[%s344 + $0x10] sm:$0xf] %v1247
      %1256 = vst [vmem:[%s344 + $0x14] sm:$0xf] %v1248
      %1257 = vst [vmem:[%s344 + $0x18] sm:$0xf] %v1249
      %1258 = vst [vmem:[%s344 + $0x1c] sm:$0xf] %v1250
      %v1259 = vadd.f32 %v473, %v475
      %v1260 = vadd.f32 %v1259, %v478
      %v1261 = vadd.f32 %v1260, %v480
      %v1262 = vadd.f32 %v1261, %v483
      %v1263 = vadd.f32 %v1262, %v485
      %v1264 = vadd.f32 %v1263, %v488
      %v1265 = vadd.f32 %v1264, %v490
      %v1266 = vrot.slane %v1265, 4
      %v1267 = vadd.f32 %v1265, %v1266
      %v1268 = vrot.slane %v1267, 2
      %v1269 = vadd.f32 %v1267, %v1268
      %v1270 = vrot.slane %v1269, 1
      %v1271 = vadd.f32 %v1269, %v1270
      %1272 = vst [vmem:[%s347] sm:$0x1] %v1271
      %v1273 = vmul.f32 %v473, %v473
      %v1274 = vmul.f32 %v475, %v475
      %v1275 = vmul.f32 %v478, %v478
      %v1276 = vmul.f32 %v480, %v480
      %v1277 = vmul.f32 %v483, %v483
      %v1278 = vmul.f32 %v485, %v485
      %v1279 = vmul.f32 %v488, %v488
      %v1280 = vmul.f32 %v490, %v490
      %v1281 = vadd.f32 %v1273, %v1274
      %v1282 = vadd.f32 %v1281, %v1275
      %v1283 = vadd.f32 %v1282, %v1276
      %v1284 = vadd.f32 %v1283, %v1277
      %v1285 = vadd.f32 %v1284, %v1278
      %v1286 = vadd.f32 %v1285, %v1279
      %v1287 = vadd.f32 %v1286, %v1280
      %v1288 = vrot.slane %v1287, 4
      %v1289 = vadd.f32 %v1287, %v1288
      %v1290 = vrot.slane %v1289, 2
      %v1291 = vadd.f32 %v1289, %v1290
      %v1292 = vrot.slane %v1291, 1
      %v1293 = vadd.f32 %v1291, %v1292
      %1294 = vst [vmem:[%s350] sm:$0x1] %v1293
      %p1295 = scmp.lt.s32.totalorder %s20, 1
      %s1296 = scalar_select %p1295, %s20, 1
      %s1297 = smul.addr %s1296, 8
      %s1298 = smul.addr %s1297, 4
      %s1299 = scalar_lea.vmem %s3, %s1298
      %p1300 = scmp.lt.s32.totalorder %s20, 1
      %s1301 = scalar_select %p1300, %s20, 1
      %s1302 = scalar_lea.vmem %s4, %s1301
      %p1303 = scmp.lt.s32.totalorder %s20, 1
      %s1304 = scalar_select %p1303, %s20, 1
      %s1305 = scalar_lea.vmem %s5, %s1304
      %p1306 = scmp.lt.s32.totalorder %s20, 1
      %s1307 = scalar_select %p1306, %s20, 1
      %s1308 = smul.addr %s1307, 8
      %s1309 = smul.addr %s1308, 4
      %s1310 = scalar_lea.vmem %s6, %s1309
      %p1311 = scmp.lt.s32.totalorder %s20, 1
      %s1312 = scalar_select %p1311, %s20, 1
      %s1313 = scalar_lea.vmem %s7, %s1312
      %p1314 = scmp.lt.s32.totalorder %s20, 1
      %s1315 = scalar_select %p1314, %s20, 1
      %s1316 = scalar_lea.vmem %s8, %s1315
      // Predicated region
      $region33: #{basic_block_forward.3} parent=31 // pred_check
        %p1317 = pneg %p106
      $region34: #{basic_block_forward.3} parent=31 // pred_check_branch
        %1319 = sbr.rel (%p1317) target = $region36
      $region35: #{basic_block_forward.3} parent=31 // pred_region
        _
      $region36: #{basic_block_forward.3} parent=31 // pred_fallthru
        _
      // Predicated region
      $region37: #{basic_block_forward.3} parent=31 // pred_check
        %p1320 = pneg %p132
      $region38: #{basic_block_forward.3} parent=31 // pred_check_branch
        %1322 = sbr.rel (%p1320) target = $region40
      $region39: #{basic_block_forward.3} parent=31 // pred_region
        _
      $region40: #{basic_block_forward.3} parent=31 // pred_fallthru
        _
      // Predicated region
      $region41: #{basic_block_forward.3} parent=31 // pred_check
        %p1323 = pneg %p158
      $region42: #{basic_block_forward.3} parent=31 // pred_check_branch
        %1325 = sbr.rel (%p1323) target = $region44
      $region43: #{basic_block_forward.3} parent=31 // pred_region
        _
      $region44: #{basic_block_forward.3} parent=31 // pred_fallthru
        _
      // Predicated region
      $region45: #{basic_block_forward.3} parent=31 // pred_check
        %p1326 = pneg %p184
      $region46: #{basic_block_forward.3} parent=31 // pred_check_branch
        %1328 = sbr.rel (%p1326) target = $region48
      $region47: #{basic_block_forward.3} parent=31 // pred_region
        _
      $region48: #{basic_block_forward.3} parent=31 // pred_fallthru
        _
      // Predicated region
      $region49: #{basic_block_forward.3} parent=31 // pred_check
        %p1329 = pneg %p210
      $region50: #{basic_block_forward.3} parent=31 // pred_check_branch
        %1331 = sbr.rel (%p1329) target = $region52
      $region51: #{basic_block_forward.3} parent=31 // pred_region
        _
      $region52: #{basic_block_forward.3} parent=31 // pred_fallthru
        _
      // Predicated region
      $region53: #{basic_block_forward.3} parent=31 // pred_check
        %p1332 = pneg %p236
      $region54: #{basic_block_forward.3} parent=31 // pred_check_branch
        %1334 = sbr.rel (%p1332) target = $region56
      $region55: #{basic_block_forward.3} parent=31 // pred_region
        _
      $region56: #{basic_block_forward.3} parent=31 // pred_fallthru
        _
    $region32: #{basic_block_forward.3} parent=5 // pred_fallthru
      _
    %p1335 = scmp.le.s32.totalorder 2, %s15
    // Predicated region
    $region57: #{basic_block_forward.3} parent=5 // pred_check
      %p1336 = pneg %p1335
    $region58: #{basic_block_forward.3} parent=5 // pred_check_branch
      %1338 = sbr.rel (%p1336) target = $region60
    $region59: #{basic_block_forward.3} parent=5 // pred_region
      %s1339 = ssub.s32 %s15, 2
      // Predicated region
      $region61: #{basic_block_forward.3} parent=59 // pred_check
        %p1340 = pneg %p112
      $region62: #{basic_block_forward.3} parent=59 // pred_check_branch
        %1342 = sbr.rel (%p1340) target = $region64
      $region63: #{basic_block_forward.3} parent=59 // pred_region
        %p1343 = scmp.lt.s32.totalorder %s21, 1
        %s1344 = scalar_select %p1343, %s21, 1
        %s1345 = smul.addr %s1344, 8
        %s1346 = smul.addr %s1345, 4
        %s1347 = scalar_lea.vmem %s3, %s1346
      $region64: #{basic_block_forward.3} parent=59 // pred_fallthru
        _
      // Predicated region
      $region65: #{basic_block_forward.3} parent=59 // pred_check
        %p1348 = pneg %p138
      $region66: #{basic_block_forward.3} parent=59 // pred_check_branch
        %1350 = sbr.rel (%p1348) target = $region68
      $region67: #{basic_block_forward.3} parent=59 // pred_region
        %p1351 = scmp.lt.s32.totalorder %s21, 1
        %s1352 = scalar_select %p1351, %s21, 1
        %s1353 = scalar_lea.vmem %s4, %s1352
      $region68: #{basic_block_forward.3} parent=59 // pred_fallthru
        _
      // Predicated region
      $region69: #{basic_block_forward.3} parent=59 // pred_check
        %p1354 = pneg %p164
      $region70: #{basic_block_forward.3} parent=59 // pred_check_branch
        %1356 = sbr.rel (%p1354) target = $region72
      $region71: #{basic_block_forward.3} parent=59 // pred_region
        %p1357 = scmp.lt.s32.totalorder %s21, 1
        %s1358 = scalar_select %p1357, %s21, 1
        %s1359 = scalar_lea.vmem %s5, %s1358
      $region72: #{basic_block_forward.3} parent=59 // pred_fallthru
        _
      // Predicated region
      $region73: #{basic_block_forward.3} parent=59 // pred_check
        %p1360 = pneg %p190
      $region74: #{basic_block_forward.3} parent=59 // pred_check_branch
        %1362 = sbr.rel (%p1360) target = $region76
      $region75: #{basic_block_forward.3} parent=59 // pred_region
        %p1363 = scmp.lt.s32.totalorder %s21, 1
        %s1364 = scalar_select %p1363, %s21, 1
        %s1365 = smul.addr %s1364, 8
        %s1366 = smul.addr %s1365, 4
        %s1367 = scalar_lea.vmem %s6, %s1366
      $region76: #{basic_block_forward.3} parent=59 // pred_fallthru
        _
      // Predicated region
      $region77: #{basic_block_forward.3} parent=59 // pred_check
        %p1368 = pneg %p216
      $region78: #{basic_block_forward.3} parent=59 // pred_check_branch
        %1370 = sbr.rel (%p1368) target = $region80
      $region79: #{basic_block_forward.3} parent=59 // pred_region
        %p1371 = scmp.lt.s32.totalorder %s21, 1
        %s1372 = scalar_select %p1371, %s21, 1
        %s1373 = scalar_lea.vmem %s7, %s1372
      $region80: #{basic_block_forward.3} parent=59 // pred_fallthru
        _
      // Predicated region
      $region81: #{basic_block_forward.3} parent=59 // pred_check
        %p1374 = pneg %p242
      $region82: #{basic_block_forward.3} parent=59 // pred_check_branch
        %1376 = sbr.rel (%p1374) target = $region84
      $region83: #{basic_block_forward.3} parent=59 // pred_region
        %p1377 = scmp.lt.s32.totalorder %s21, 1
        %s1378 = scalar_select %p1377, %s21, 1
        %s1379 = scalar_lea.vmem %s8, %s1378
      $region84: #{basic_block_forward.3} parent=59 // pred_fallthru
        _
    $region60: #{basic_block_forward.3} parent=5 // pred_fallthru
      _
  $region6: #{basic_block_forward.3} parent=0 // loop_footer
    %s19 = sadd.s32 1, %s15
  $region7: #{basic_block_forward.3} parent=0 // loop_footer_branch
    %14 = sbr.rel target = $region3
  $region8: #{basic_block_forward.3} parent=0 // loop_exit
    _

// kernel: basic_block_forward.4
$region0: #{basic_block_forward.4}
  #allocation0 [shape = 'u32[]', space=smem, size = 0x4, offset = 0x4, fixed_abs, tag = 'smem constant byte address 0x4 - core index']
  #allocation1 [shape = 'u32[72,128]{1,0:T(1,128)}', space=vmem, size = 0x9000, scoped, tag = 'internal scratch']
  #allocation2 [shape = 'bf16[10,10,128]{2,1,0:T(8,128)(2,1)}', space=vmem, size = 0xa000, scoped, tag = 'scratch operand']
  %s0 = inlined_call_operand.vmem [shape: bf16[2,8,8,128], index: 0, kind: input, shape index: {}]
  %s1 = inlined_call_operand.vmem [shape: f32[1,128], index: 1, kind: input, shape index: {}]
  %s2 = inlined_call_operand.vmem [shape: f32[1,128], index: 2, kind: input, shape index: {}]
  %s3 = inlined_call_operand.vmem [shape: bf16[9,128,128], index: 3, kind: input, shape index: {}]
  %s4 = inlined_call_operand.vmem [shape: bf16[2,8,8,128], index: 4, kind: output, shape index: {0}]
  %s5 = inlined_call_operand.vmem [shape: f32[2,1,128], index: 5, kind: output, shape index: {1}]
  %s6 = inlined_call_operand.vmem [shape: f32[2,1,128], index: 6, kind: output, shape index: {2}]
  %7 = xla_tuple %s4, %s5, %s6
  %s8 = sld [smem:[#allocation0]]
  $region65: #{basic_block_forward.4} parent=0
    _
  %s10 = ssub.s32 1, %s8
  %s11 = scalar_select 0, %s10, %s8
  loop: start=0, step=1, limit=4
  $region2: #{basic_block_forward.4} parent=0 // loop_pre_header
    _
  $region3: #{basic_block_forward.4} parent=0 // loop_header
    %s13 = sphi 0, %s17
    %p14 = scmp.ge.s32.totalorder %s13, 4
    %s23 = sphi 0, %s25
    %s26 = sphi 0, %s23
    %s27 = sphi 0, %s26
    %s43 = sphi 0, %s27
    %s47 = sphi 0, %s47
    %s49 = sphi 0, %s47
    %s50 = sphi 0, %s49
    %s64 = sphi 0, %s50
    %s68 = sphi 0, %s68
    %s70 = sphi 0, %s68
    %s71 = sphi 0, %s70
    %s85 = sphi 0, %s71
    %s89 = sphi 0, %s89
    %s91 = sphi 0, %s89
    %s92 = sphi 0, %s91
    %s106 = sphi 0, %s92
    %s112 = sphi 0, %s114
    %s115 = sphi 0, %s112
    %s116 = sphi 0, %s115
    %s132 = sphi 0, %s116
    %s138 = sphi 0, %s140
    %s141 = sphi 0, %s138
    %s142 = sphi 0, %s141
    %s158 = sphi 0, %s142
    %s164 = sphi 0, %s166
    %s167 = sphi 0, %s164
    %s168 = sphi 0, %s167
    %s184 = sphi 0, %s168
  $region4: #{basic_block_forward.4} parent=0 // loop_header_branch
    %16 = sbr.rel (%p14) target = $region8
  $region5: #{basic_block_forward.4} parent=0 // loop_body
    %s18 = ssub.s32 %s13, 1
    %s19 = ssub.s32 %s13, 2
    %s20 = sadd.s32 %s13, 1
    %s21 = ssub.s32 %s13, %s20
    %p22 = scmp.eq.s32.totalorder %s21, 0
    %s24 = sadd.s32 %s23, 1
    %s25 = scalar_select %p22, %s23, %s24
    %p28 = pneg %p22
    %p29 = scmp.eq.s32.totalorder %s13, 1
    %p30 = por %p28, %p29
    %p31 = scmp.ne.s32.totalorder %s23, %s26
    %p32 = scmp.eq.s32.totalorder %s13, 0
    %p33 = por %p31, %p32
    %p34 = scmp.ne.s32.totalorder %s23, %s26
    %p35 = scmp.eq.s32.totalorder %s18, 1
    %p36 = por %p34, %p35
    %p37 = scmp.ne.s32.totalorder %s26, %s27
    %p38 = scmp.eq.s32.totalorder %s18, 0
    %p39 = por %p37, %p38
    %p40 = scmp.ne.s32.totalorder %s26, %s27
    %p41 = scmp.eq.s32.totalorder %s19, 1
    %p42 = por %p40, %p41
    %p44 = scmp.ne.s32.totalorder %s27, %s43
    %p45 = scmp.eq.s32.totalorder %s19, 0
    %p46 = por %p44, %p45
    %s48 = sadd.s32 %s47, 1
    %p51 = scmp.eq.s32.totalorder %s13, 1
    %p52 = scmp.ne.s32.totalorder %s47, %s49
    %p53 = scmp.eq.s32.totalorder %s13, 0
    %p54 = por %p52, %p53
    %p55 = scmp.ne.s32.totalorder %s47, %s49
    %p56 = scmp.eq.s32.totalorder %s18, 1
    %p57 = por %p55, %p56
    %p58 = scmp.ne.s32.totalorder %s49, %s50
    %p59 = scmp.eq.s32.totalorder %s18, 0
    %p60 = por %p58, %p59
    %p61 = scmp.ne.s32.totalorder %s49, %s50
    %p62 = scmp.eq.s32.totalorder %s19, 1
    %p63 = por %p61, %p62
    %p65 = scmp.ne.s32.totalorder %s50, %s64
    %p66 = scmp.eq.s32.totalorder %s19, 0
    %p67 = por %p65, %p66
    %s69 = sadd.s32 %s68, 1
    %p72 = scmp.eq.s32.totalorder %s13, 1
    %p73 = scmp.ne.s32.totalorder %s68, %s70
    %p74 = scmp.eq.s32.totalorder %s13, 0
    %p75 = por %p73, %p74
    %p76 = scmp.ne.s32.totalorder %s68, %s70
    %p77 = scmp.eq.s32.totalorder %s18, 1
    %p78 = por %p76, %p77
    %p79 = scmp.ne.s32.totalorder %s70, %s71
    %p80 = scmp.eq.s32.totalorder %s18, 0
    %p81 = por %p79, %p80
    %p82 = scmp.ne.s32.totalorder %s70, %s71
    %p83 = scmp.eq.s32.totalorder %s19, 1
    %p84 = por %p82, %p83
    %p86 = scmp.ne.s32.totalorder %s71, %s85
    %p87 = scmp.eq.s32.totalorder %s19, 0
    %p88 = por %p86, %p87
    %s90 = sadd.s32 %s89, 1
    %p93 = scmp.eq.s32.totalorder %s13, 1
    %p94 = scmp.ne.s32.totalorder %s89, %s91
    %p95 = scmp.eq.s32.totalorder %s13, 0
    %p96 = por %p94, %p95
    %p97 = scmp.ne.s32.totalorder %s89, %s91
    %p98 = scmp.eq.s32.totalorder %s18, 1
    %p99 = por %p97, %p98
    %p100 = scmp.ne.s32.totalorder %s91, %s92
    %p101 = scmp.eq.s32.totalorder %s18, 0
    %p102 = por %p100, %p101
    %p103 = scmp.ne.s32.totalorder %s91, %s92
    %p104 = scmp.eq.s32.totalorder %s19, 1
    %p105 = por %p103, %p104
    %p107 = scmp.ne.s32.totalorder %s92, %s106
    %p108 = scmp.eq.s32.totalorder %s19, 0
    %p109 = por %p107, %p108
    %s110 = ssub.s32 %s13, %s20
    %p111 = scmp.eq.s32.totalorder %s110, 0
    %s113 = sadd.s32 %s112, 1
    %s114 = scalar_select %p111, %s112, %s113
    %p117 = pneg %p111
    %p118 = scmp.eq.s32.totalorder %s13, 1
    %p119 = por %p117, %p118
    %p120 = scmp.ne.s32.totalorder %s112, %s115
    %p121 = scmp.eq.s32.totalorder %s13, 0
    %p122 = por %p120, %p121
    %p123 = scmp.ne.s32.totalorder %s112, %s115
    %p124 = scmp.eq.s32.totalorder %s18, 1
    %p125 = por %p123, %p124
    %p126 = scmp.ne.s32.totalorder %s115, %s116
    %p127 = scmp.eq.s32.totalorder %s18, 0
    %p128 = por %p126, %p127
    %p129 = scmp.ne.s32.totalorder %s115, %s116
    %p130 = scmp.eq.s32.totalorder %s19, 1
    %p131 = por %p129, %p130
    %p133 = scmp.ne.s32.totalorder %s116, %s132
    %p134 = scmp.eq.s32.totalorder %s19, 0
    %p135 = por %p133, %p134
    %s136 = ssub.s32 %s13, %s20
    %p137 = scmp.eq.s32.totalorder %s136, 0
    %s139 = sadd.s32 %s138, 1
    %s140 = scalar_select %p137, %s138, %s139
    %p143 = pneg %p137
    %p144 = scmp.eq.s32.totalorder %s13, 1
    %p145 = por %p143, %p144
    %p146 = scmp.ne.s32.totalorder %s138, %s141
    %p147 = scmp.eq.s32.totalorder %s13, 0
    %p148 = por %p146, %p147
    %p149 = scmp.ne.s32.totalorder %s138, %s141
    %p150 = scmp.eq.s32.totalorder %s18, 1
    %p151 = por %p149, %p150
    %p152 = scmp.ne.s32.totalorder %s141, %s142
    %p153 = scmp.eq.s32.totalorder %s18, 0
    %p154 = por %p152, %p153
    %p155 = scmp.ne.s32.totalorder %s141, %s142
    %p156 = scmp.eq.s32.totalorder %s19, 1
    %p157 = por %p155, %p156
    %p159 = scmp.ne.s32.totalorder %s142, %s158
    %p160 = scmp.eq.s32.totalorder %s19, 0
    %p161 = por %p159, %p160
    %s162 = ssub.s32 %s13, %s20
    %p163 = scmp.eq.s32.totalorder %s162, 0
    %s165 = sadd.s32 %s164, 1
    %s166 = scalar_select %p163, %s164, %s165
    %p169 = pneg %p163
    %p170 = scmp.eq.s32.totalorder %s13, 1
    %p171 = por %p169, %p170
    %p172 = scmp.ne.s32.totalorder %s164, %s167
    %p173 = scmp.eq.s32.totalorder %s13, 0
    %p174 = por %p172, %p173
    %p175 = scmp.ne.s32.totalorder %s164, %s167
    %p176 = scmp.eq.s32.totalorder %s18, 1
    %p177 = por %p175, %p176
    %p178 = scmp.ne.s32.totalorder %s167, %s168
    %p179 = scmp.eq.s32.totalorder %s18, 0
    %p180 = por %p178, %p179
    %p181 = scmp.ne.s32.totalorder %s167, %s168
    %p182 = scmp.eq.s32.totalorder %s19, 1
    %p183 = por %p181, %p182
    %p185 = scmp.ne.s32.totalorder %s168, %s184
    %p186 = scmp.eq.s32.totalorder %s19, 0
    %p187 = por %p185, %p186
    %p188 = scmp.le.s32.totalorder 1, %s13
    %p189 = scmp.lt.s32.totalorder %s13, 3
    %p190 = pnand %p188, %p189
    %p191 = pneg %p190
    // Predicated region
    $region9: #{basic_block_forward.4} parent=5 // pred_check
      _
    $region10: #{basic_block_forward.4} parent=5 // pred_check_branch
      %193 = sbr.rel (%p190) target = $region12
    $region11: #{basic_block_forward.4} parent=5 // pred_region
      %s194 = ssub.s32 %s13, 1
      // Predicated region
      $region13: #{basic_block_forward.4} parent=11 // pred_check
        %p195 = pneg %p60
      $region14: #{basic_block_forward.4} parent=11 // pred_check_branch
        %197 = sbr.rel (%p195) target = $region16
      $region15: #{basic_block_forward.4} parent=11 // pred_region
        _
      $region16: #{basic_block_forward.4} parent=11 // pred_fallthru
        _
      // Predicated region
      $region17: #{basic_block_forward.4} parent=11 // pred_check
        %p198 = pneg %p81
      $region18: #{basic_block_forward.4} parent=11 // pred_check_branch
        %200 = sbr.rel (%p198) target = $region20
      $region19: #{basic_block_forward.4} parent=11 // pred_region
        _
      $region20: #{basic_block_forward.4} parent=11 // pred_fallthru
        _
      // Predicated region
      $region21: #{basic_block_forward.4} parent=11 // pred_check
        %p201 = pneg %p102
      $region22: #{basic_block_forward.4} parent=11 // pred_check_branch
        %203 = sbr.rel (%p201) target = $region24
      $region23: #{basic_block_forward.4} parent=11 // pred_region
        _
      $region24: #{basic_block_forward.4} parent=11 // pred_fallthru
        _
    $region12: #{basic_block_forward.4} parent=5 // pred_fallthru
      _
    %p204 = scmp.lt.s32.totalorder %s13, 2
    // Predicated region
    $region25: #{basic_block_forward.4} parent=5 // pred_check
      %p205 = pneg %p204
    $region26: #{basic_block_forward.4} parent=5 // pred_check_branch
      %207 = sbr.rel (%p205) target = $region28
    $region27: #{basic_block_forward.4} parent=5 // pred_region
      // Predicated region
      $region29: #{basic_block_forward.4} parent=27 // pred_check
        %p208 = pneg %p33
      $region30: #{basic_block_forward.4} parent=27 // pred_check_branch
        %210 = sbr.rel (%p208) target = $region32
      $region31: #{basic_block_forward.4} parent=27 // pred_region
        %p211 = scmp.lt.s32.totalorder %s13, 1
        %s212 = scalar_select %p211, %s13, 1
        %s213 = smul.addr %s212, 8
        %s214 = smul.addr %s213, 4
        %s215 = scalar_lea.vmem %s0, %s214
      $region32: #{basic_block_forward.4} parent=27 // pred_fallthru
        _
    $region28: #{basic_block_forward.4} parent=5 // pred_fallthru
      _
    %p216 = scmp.le.s32.totalorder 1, %s13
    %p217 = scmp.lt.s32.totalorder %s13, 3
    %p218 = pnand %p216, %p217
    %p219 = pneg %p218
    // Predicated region
    $region33: #{basic_block_forward.4} parent=5 // pred_check
      _
    $region34: #{basic_block_forward.4} parent=5 // pred_check_branch
      %221 = sbr.rel (%p218) target = $region36
    $region35: #{basic_block_forward.4} parent=5 // pred_region
      %s222 = ssub.s32 %s13, 1
      %p223 = scmp.lt.s32.totalorder %s18, 1
      %s224 = scalar_select %p223, %s18, 1
      %s225 = smul.addr %s224, 8
      %s226 = smul.addr %s225, 4
      %s227 = scalar_lea.vmem %s0, %s226
      %p228 = pneg %p39
      %p229 = pneg %p36
      %p230 = pneg %p60
      %p231 = pneg %p57
      %p232 = pneg %p81
      %p233 = pneg %p78
      %p234 = pneg %p102
      %p235 = pneg %p99
      %p236 = pneg %p128
      %p237 = pneg %p125
      %p238 = scmp.lt.s32.totalorder %s18, 1
      %s239 = scalar_select %p238, %s18, 1
      %s240 = smul.addr %s239, 8
      %s241 = smul.addr %s240, 4
      %s242 = scalar_lea.vmem %s4, %s241
      %p243 = pneg %p154
      %p244 = pneg %p151
      %p245 = scmp.lt.s32.totalorder %s18, 1
      %s246 = scalar_select %p245, %s18, 1
      %s247 = scalar_lea.vmem %s5, %s246
      %p248 = pneg %p180
      %p249 = pneg %p177
      %p250 = scmp.lt.s32.totalorder %s18, 1
      %s251 = scalar_select %p250, %s18, 1
      %s252 = scalar_lea.vmem %s6, %s251
      %p253 = scmp.lt.s32.totalorder %s18, 1
      %s254 = scalar_select %p253, %s18, 1
      %s255 = smul.addr %s254, 8
      %s256 = smul.addr %s255, 4
      %s257 = scalar_lea.vmem %s0, %s256
      %p258 = scmp.lt.s32.totalorder %s18, 1
      %s259 = scalar_select %p258, %s18, 1
      %s260 = smul.addr %s259, 8
      %s261 = smul.addr %s260, 4
      %s262 = scalar_lea.vmem %s4, %s261
      %p263 = scmp.lt.s32.totalorder %s18, 1
      %s264 = scalar_select %p263, %s18, 1
      %s265 = scalar_lea.vmem %s5, %s264
      %p266 = scmp.lt.s32.totalorder %s18, 1
      %s267 = scalar_select %p266, %s18, 1
      %s268 = scalar_lea.vmem %s6, %s267
      %270 = vst [vmem:[#allocation2] sm:$0xf] 0
      %271 = vst [vmem:[#allocation2 + $0x4] sm:$0x1] 0
      %272 = vst [vmem:[#allocation2 + $0x8] sm:$0xf] 0
      %273 = vst [vmem:[#allocation2 + $0xc] sm:$0x1] 0
      %274 = vst [vmem:[#allocation2 + $0x10] sm:$0xf] 0
      %275 = vst [vmem:[#allocation2 + $0x14] sm:$0x1] 0
      %276 = vst [vmem:[#allocation2 + $0x18] sm:$0xf] 0
      %277 = vst [vmem:[#allocation2 + $0x1c] sm:$0x1] 0
      %278 = vst [vmem:[#allocation2 + $0x20] sm:$0xf] 0
      %279 = vst [vmem:[#allocation2 + $0x24] sm:$0x1] 0
      %280 = vst [vmem:[#allocation2 + $0x28] sm:$0xf] 0
      %281 = vst [vmem:[#allocation2 + $0x2c] sm:$0x1] 0
      %282 = vst [vmem:[#allocation2 + $0x30] sm:$0xf] 0
      %283 = vst [vmem:[#allocation2 + $0x34] sm:$0x1] 0
      %284 = vst [vmem:[#allocation2 + $0x38] sm:$0xf] 0
      %285 = vst [vmem:[#allocation2 + $0x3c] sm:$0x1] 0
      %286 = vst [vmem:[#allocation2 + $0x40] sm:$0xf] 0
      %287 = vst [vmem:[#allocation2 + $0x44] sm:$0x1] 0
      %288 = vst [vmem:[#allocation2 + $0x48] sm:$0xf] 0
      %289 = vst [vmem:[#allocation2 + $0x4c] sm:$0x1] 0
      %v290 = vld [vmem:[%s257] sm:$0xf]
      %v291 = vld [vmem:[%s257 + $0x4] sm:$0xf]
      %v292 = vld [vmem:[%s257 + $0x8] sm:$0xf]
      %v293 = vld [vmem:[%s257 + $0xc] sm:$0xf]
      %v294 = vld [vmem:[%s257 + $0x10] sm:$0xf]
      %v295 = vld [vmem:[%s257 + $0x14] sm:$0xf]
      %v296 = vld [vmem:[%s257 + $0x18] sm:$0xf]
      %v297 = vld [vmem:[%s257 + $0x1c] sm:$0xf]
      %v298 = vld [vmem:[%s1] sm:$0x1]
      %v299 = vunpack.c.l.bf16 %v290
      %v300 = vunpack.c.l.bf16 %v291
      %v301 = vunpack.c.l.bf16 %v292
      %v302 = vunpack.c.l.bf16 %v293
      %v303 = vunpack.c.l.bf16 %v294
      %v304 = vunpack.c.l.bf16 %v295
      %v305 = vunpack.c.l.bf16 %v296
      %v306 = vunpack.c.l.bf16 %v297
      %v308 = vperm.slane %v298, 0
      %v310 = vmul.f32 %v299, %v308
      %v311 = vmul.f32 %v300, %v308
      %v312 = vmul.f32 %v301, %v308
      %v313 = vmul.f32 %v302, %v308
      %v314 = vmul.f32 %v303, %v308
      %v315 = vmul.f32 %v304, %v308
      %v316 = vmul.f32 %v305, %v308
      %v317 = vmul.f32 %v306, %v308
      %v318 = vld [vmem:[%s2] sm:$0x1]
      %v320 = vperm.slane %v318, 0
      %v322 = vadd.f32 %v310, %v320
      %v323 = vadd.f32 %v311, %v320
      %v324 = vadd.f32 %v312, %v320
      %v325 = vadd.f32 %v313, %v320
      %v326 = vadd.f32 %v314, %v320
      %v327 = vadd.f32 %v315, %v320
      %v328 = vadd.f32 %v316, %v320
      %v329 = vadd.f32 %v317, %v320
      %v330 = vmax.f32 %v322, 0.0
      %v331 = vmax.f32 %v323, 0.0
      %v332 = vmax.f32 %v324, 0.0
      %v333 = vmax.f32 %v325, 0.0
      %v334 = vmax.f32 %v326, 0.0
      %v335 = vmax.f32 %v327, 0.0
      %v336 = vmax.f32 %v328, 0.0
      %v337 = vmax.f32 %v329, 0.0
      %v338 = vpack.c.bf16 %v330, %v330
      %v339 = vpack.c.bf16 %v331, %v331
      %v340 = vpack.c.bf16 %v332, %v332
      %v341 = vpack.c.bf16 %v333, %v333
      %v342 = vpack.c.bf16 %v334, %v334
      %v343 = vpack.c.bf16 %v335, %v335
      %v344 = vpack.c.bf16 %v336, %v336
      %v345 = vpack.c.bf16 %v337, %v337
      %v347 = vshrl.u32 %v338, 16
      %v349 = vrot.slane %v347, 7
      %v350 = vshll.u32 %v338, 16
      %v352 = vor.u32 %v349, %v350
      %v353 = vrot.slane %v349, 4
      %v355 = vshrl.u32 %v339, 16
      %v357 = vrot.slane %v355, 7
      %v358 = vshll.u32 %v339, 16
      %v360 = vor.u32 %v357, %v358
      %v361 = vrot.slane %v357, 4
      %v363 = vshrl.u32 %v340, 16
      %v365 = vrot.slane %v363, 7
      %v366 = vshll.u32 %v340, 16
      %v368 = vor.u32 %v365, %v366
      %v369 = vrot.slane %v365, 4
      %v371 = vshrl.u32 %v341, 16
      %v373 = vrot.slane %v371, 7
      %v374 = vshll.u32 %v341, 16
      %v376 = vor.u32 %v373, %v374
      %v377 = vrot.slane %v373, 4
      %v379 = vshrl.u32 %v342, 16
      %v381 = vrot.slane %v379, 7
      %v382 = vshll.u32 %v342, 16
      %v384 = vor.u32 %v381, %v382
      %v385 = vrot.slane %v381, 4
      %v387 = vshrl.u32 %v343, 16
      %v389 = vrot.slane %v387, 7
      %v390 = vshll.u32 %v343, 16
      %v392 = vor.u32 %v389, %v390
      %v393 = vrot.slane %v389, 4
      %v395 = vshrl.u32 %v344, 16
      %v397 = vrot.slane %v395, 7
      %v398 = vshll.u32 %v344, 16
      %v400 = vor.u32 %v397, %v398
      %v401 = vrot.slane %v397, 4
      %v403 = vshrl.u32 %v345, 16
      %v405 = vrot.slane %v403, 7
      %v406 = vshll.u32 %v345, 16
      %v408 = vor.u32 %v405, %v406
      %v409 = vrot.slane %v405, 4
      %s426 = scalar_lea.vmem [#allocation2], 8
      %vm427 = vcmask 1043456
      %vm428 = vsmask.f32 7938
      %vm429 = vmand %vm427, %vm428
      %v430 = vld [vmem:[%s426] sm:$0xf]
      %v431 = vsel %vm429, %v352, %v430
      %432 = vst [vmem:[%s426] sm:$0xf] %v431
      %vm433 = vcmask 1040384
      %vm434 = vsmask.f32 256
      %vm435 = vmand %vm433, %vm434
      %v436 = vld [vmem:[%s426 + $0x4] sm:$0x1]
      %v437 = vsel %vm435, %v353, %v436
      %438 = vst [vmem:[%s426 + $0x4] sm:$0x1] %v437
      %v439 = vld [vmem:[%s426 + $0x8] sm:$0xf]
      %v440 = vsel %vm429, %v360, %v439
      %441 = vst [vmem:[%s426 + $0x8] sm:$0xf] %v440
      %v442 = vld [vmem:[%s426 + $0xc] sm:$0x1]
      %v443 = vsel %vm435, %v361, %v442
      %444 = vst [vmem:[%s426 + $0xc] sm:$0x1] %v443
      %v445 = vld [vmem:[%s426 + $0x10] sm:$0xf]
      %v446 = vsel %vm429, %v368, %v445
      %447 = vst [vmem:[%s426 + $0x10] sm:$0xf] %v446
      %v448 = vld [vmem:[%s426 + $0x14] sm:$0x1]
      %v449 = vsel %vm435, %v369, %v448
      %450 = vst [vmem:[%s426 + $0x14] sm:$0x1] %v449
      %v451 = vld [vmem:[%s426 + $0x18] sm:$0xf]
      %v452 = vsel %vm429, %v376, %v451
      %453 = vst [vmem:[%s426 + $0x18] sm:$0xf] %v452
      %v454 = vld [vmem:[%s426 + $0x1c] sm:$0x1]
      %v455 = vsel %vm435, %v377, %v454
      %456 = vst [vmem:[%s426 + $0x1c] sm:$0x1] %v455
      %v457 = vld [vmem:[%s426 + $0x20] sm:$0xf]
      %v458 = vsel %vm429, %v384, %v457
      %459 = vst [vmem:[%s426 + $0x20] sm:$0xf] %v458
      %v460 = vld [vmem:[%s426 + $0x24] sm:$0x1]
      %v461 = vsel %vm435, %v385, %v460
      %462 = vst [vmem:[%s426 + $0x24] sm:$0x1] %v461
      %v463 = vld [vmem:[%s426 + $0x28] sm:$0xf]
      %v464 = vsel %vm429, %v392, %v463
      %465 = vst [vmem:[%s426 + $0x28] sm:$0xf] %v464
      %v466 = vld [vmem:[%s426 + $0x2c] sm:$0x1]
      %v467 = vsel %vm435, %v393, %v466
      %468 = vst [vmem:[%s426 + $0x2c] sm:$0x1] %v467
      %v469 = vld [vmem:[%s426 + $0x30] sm:$0xf]
      %v470 = vsel %vm429, %v400, %v469
      %471 = vst [vmem:[%s426 + $0x30] sm:$0xf] %v470
      %v472 = vld [vmem:[%s426 + $0x34] sm:$0x1]
      %v473 = vsel %vm435, %v401, %v472
      %474 = vst [vmem:[%s426 + $0x34] sm:$0x1] %v473
      %v475 = vld [vmem:[%s426 + $0x38] sm:$0xf]
      %v476 = vsel %vm429, %v408, %v475
      %477 = vst [vmem:[%s426 + $0x38] sm:$0xf] %v476
      %v478 = vld [vmem:[%s426 + $0x3c] sm:$0x1]
      %v479 = vsel %vm435, %v409, %v478
      %480 = vst [vmem:[%s426 + $0x3c] sm:$0x1] %v479
      %v481 = vld [vmem:[#allocation2] sm:$0xf]
      %v482 = vld [vmem:[#allocation2 + $0x8] sm:$0xf]
      %v483 = vld [vmem:[#allocation2 + $0x10] sm:$0xf]
      %v484 = vld [vmem:[#allocation2 + $0x18] sm:$0xf]
      %v485 = vld [vmem:[#allocation2 + $0x20] sm:$0xf]
      %v486 = vld [vmem:[#allocation2 + $0x28] sm:$0xf]
      %v487 = vld [vmem:[#allocation2 + $0x30] sm:$0xf]
      %v488 = vld [vmem:[#allocation2 + $0x38] sm:$0xf]
      %v489 = vld [vmem:[%s3] sm:$0xf]
      %v490 = vld [vmem:[%s3 + $0x4] sm:$0xf]
      %v491 = vld [vmem:[%s3 + $0x8] sm:$0xf]
      %v492 = vld [vmem:[%s3 + $0xc] sm:$0xf]
      %v493 = vld [vmem:[%s3 + $0x10] sm:$0xf]
      %v494 = vld [vmem:[%s3 + $0x14] sm:$0xf]
      %v495 = vld [vmem:[%s3 + $0x18] sm:$0xf]
      %v496 = vld [vmem:[%s3 + $0x1c] sm:$0xf]
      %v497 = vld [vmem:[%s3 + $0x20] sm:$0xf]
      %v498 = vld [vmem:[%s3 + $0x24] sm:$0xf]
      %v499 = vld [vmem:[%s3 + $0x28] sm:$0xf]
      %v500 = vld [vmem:[%s3 + $0x2c] sm:$0xf]
      %v501 = vld [vmem:[%s3 + $0x30] sm:$0xf]
      %v502 = vld [vmem:[%s3 + $0x34] sm:$0xf]
      %v503 = vld [vmem:[%s3 + $0x38] sm:$0xf]
      %v504 = vld [vmem:[%s3 + $0x3c] sm:$0xf]
      %v505 = vld [vmem:[#allocation2 + $0x4] sm:$0x1]
      %v506 = vld [vmem:[#allocation2 + $0xc] sm:$0x1]
      %v507 = vld [vmem:[#allocation2 + $0x14] sm:$0x1]
      %v508 = vld [vmem:[#allocation2 + $0x1c] sm:$0x1]
      %v509 = vld [vmem:[#allocation2 + $0x24] sm:$0x1]
      %v510 = vld [vmem:[#allocation2 + $0x2c] sm:$0x1]
      %v511 = vld [vmem:[#allocation2 + $0x34] sm:$0x1]
      %v512 = vld [vmem:[#allocation2 + $0x3c] sm:$0x1]
      %vm513 = vsmask.f32 3328
      %vm514 = vsmask.f32 7440
      %vm515 = vmor %vm513, %vm514
      %v517 = vshrl.u32 %v481, 16
      %v519 = vrot.slane %v517, 4
      %v520 = vshll.u32 %v481, 16
      %v522 = vrot.slane %v520, 5
      %v523 = vor.u32 %v519, %v522
      %v524 = vrot.slane %v523, 4
      %v526 = vshll.u32 %v505, 16
      %v528 = vrot.slane %v526, 5
      %v529 = vsel %vm515, %v524, %v528
      %v531 = vshrl.u32 %v482, 16
      %v533 = vrot.slane %v531, 4
      %v534 = vshll.u32 %v482, 16
      %v536 = vrot.slane %v534, 5
      %v537 = vor.u32 %v533, %v536
      %v538 = vrot.slane %v537, 4
      %v540 = vshll.u32 %v506, 16
      %v542 = vrot.slane %v540, 5
      %v543 = vsel %vm515, %v538, %v542
      %v545 = vshrl.u32 %v483, 16
      %v547 = vrot.slane %v545, 4
      %v548 = vshll.u32 %v483, 16
      %v550 = vrot.slane %v548, 5
      %v551 = vor.u32 %v547, %v550
      %v552 = vrot.slane %v551, 4
      %v554 = vshll.u32 %v507, 16
      %v556 = vrot.slane %v554, 5
      %v557 = vsel %vm515, %v552, %v556
      %v559 = vshrl.u32 %v484, 16
      %v561 = vrot.slane %v559, 4
      %v562 = vshll.u32 %v484, 16
      %v564 = vrot.slane %v562, 5
      %v565 = vor.u32 %v561, %v564
      %v566 = vrot.slane %v565, 4
      %v568 = vshll.u32 %v508, 16
      %v570 = vrot.slane %v568, 5
      %v571 = vsel %vm515, %v566, %v570
      %v573 = vshrl.u32 %v485, 16
      %v575 = vrot.slane %v573, 4
      %v576 = vshll.u32 %v485, 16
      %v578 = vrot.slane %v576, 5
      %v579 = vor.u32 %v575, %v578
      %v580 = vrot.slane %v579, 4
      %v582 = vshll.u32 %v509, 16
      %v584 = vrot.slane %v582, 5
      %v585 = vsel %vm515, %v580, %v584
      %v587 = vshrl.u32 %v486, 16
      %v589 = vrot.slane %v587, 4
      %v590 = vshll.u32 %v486, 16
      %v592 = vrot.slane %v590, 5
      %v593 = vor.u32 %v589, %v592
      %v594 = vrot.slane %v593, 4
      %v596 = vshll.u32 %v510, 16
      %v598 = vrot.slane %v596, 5
      %v599 = vsel %vm515, %v594, %v598
      %v601 = vshrl.u32 %v487, 16
      %v603 = vrot.slane %v601, 4
      %v604 = vshll.u32 %v487, 16
      %v606 = vrot.slane %v604, 5
      %v607 = vor.u32 %v603, %v606
      %v608 = vrot.slane %v607, 4
      %v610 = vshll.u32 %v511, 16
      %v612 = vrot.slane %v610, 5
      %v613 = vsel %vm515, %v608, %v612
      %v615 = vshrl.u32 %v488, 16
      %v617 = vrot.slane %v615, 4
      %v618 = vshll.u32 %v488, 16
      %v620 = vrot.slane %v618, 5
      %v621 = vor.u32 %v617, %v620
      %v622 = vrot.slane %v621, 4
      %v624 = vshll.u32 %v512, 16
      %v626 = vrot.slane %v624, 5
      %v627 = vsel %vm515, %v622, %v626
      %s628 = scalar_lea.vmem %s3, 64
      %v629 = vld [vmem:[%s628] sm:$0xf]
      %v630 = vld [vmem:[%s628 + $0x4] sm:$0xf]
      %v631 = vld [vmem:[%s628 + $0x8] sm:$0xf]
      %v632 = vld [vmem:[%s628 + $0xc] sm:$0xf]
      %v633 = vld [vmem:[%s628 + $0x10] sm:$0xf]
      %v634 = vld [vmem:[%s628 + $0x14] sm:$0xf]
      %v635 = vld [vmem:[%s628 + $0x18] sm:$0xf]
      %v636 = vld [vmem:[%s628 + $0x1c] sm:$0xf]
      %v637 = vld [vmem:[%s628 + $0x20] sm:$0xf]
      %v638 = vld [vmem:[%s628 + $0x24] sm:$0xf]
      %v639 = vld [vmem:[%s628 + $0x28] sm:$0xf]
      %v640 = vld [vmem:[%s628 + $0x2c] sm:$0xf]
      %v641 = vld [vmem:[%s628 + $0x30] sm:$0xf]
      %v642 = vld [vmem:[%s628 + $0x34] sm:$0xf]
      %v643 = vld [vmem:[%s628 + $0x38] sm:$0xf]
      %v644 = vld [vmem:[%s628 + $0x3c] sm:$0xf]
      %v645 = vunpack.c.l.b16 %v529
      %v646 = vunpack.c.l.b16 %v543
      %v647 = vunpack.c.l.b16 %v557
      %v648 = vunpack.c.l.b16 %v571
      %v649 = vunpack.c.l.b16 %v585
      %v650 = vunpack.c.l.b16 %v599
      %v651 = vunpack.c.l.b16 %v613
      %v652 = vunpack.c.l.b16 %v627
      %v653 = vpack.c.b16 %v646, %v645
      %v654 = vpack.c.b16 %v648, %v647
      %v655 = vpack.c.b16 %v650, %v649
      %v656 = vpack.c.b16 %v652, %v651
      %v677 = vunpack.c.l.b16 %v629
      %v678 = vunpack.c.l.b16 %v630
      %v679 = vunpack.c.l.b16 %v631
      %v680 = vunpack.c.l.b16 %v632
      %v681 = vunpack.c.l.b16 %v633
      %v682 = vunpack.c.l.b16 %v634
      %v683 = vunpack.c.l.b16 %v635
      %v684 = vunpack.c.l.b16 %v636
      %v685 = vunpack.c.l.b16 %v637
      %v686 = vunpack.c.l.b16 %v638
      %v687 = vunpack.c.l.b16 %v639
      %v688 = vunpack.c.l.b16 %v640
      %v689 = vunpack.c.l.b16 %v641
      %v690 = vunpack.c.l.b16 %v642
      %v691 = vunpack.c.l.b16 %v643
      %v692 = vunpack.c.l.b16 %v644
      %v693 = vpack.c.b16 %v678, %v677
      %v694 = vpack.c.b16 %v680, %v679
      %v695 = vpack.c.b16 %v682, %v681
      %v696 = vpack.c.b16 %v684, %v683
      %v697 = vpack.c.b16 %v686, %v685
      %v698 = vpack.c.b16 %v688, %v687
      %v699 = vpack.c.b16 %v690, %v689
      %v700 = vpack.c.b16 %v692, %v691
      %709 = vmatpush.bf16.msra.mxu0 %v700
      %710 = vmatpush.bf16.msra.mxu0 %v699
      %711 = vmatpush.bf16.msra.mxu0 %v698
      %712 = vmatpush.bf16.msra.mxu0 %v697
      %713 = vmatpush.bf16.msra.mxu0 %v696
      %714 = vmatpush.bf16.msra.mxu0 %v695
      %715 = vmatpush.bf16.msra.mxu0 %v694
      %716 = vmatpush.bf16.msra.mxu0 %v693
      %717 = vmatmul.bf16.gmra.mxu0 %v653
      %v718 = vpop.f32.mrf.mxu0
      %v719 = vadd.f32 0.0, %v718
      %v720 = vpop.f32.mrf.mxu0
      %v721 = vadd.f32 0.0, %v720
      %722 = vmatmul.bf16.gmra.mxu0 %v654
      %v723 = vpop.f32.mrf.mxu0
      %v724 = vadd.f32 0.0, %v723
      %v725 = vpop.f32.mrf.mxu0
      %v726 = vadd.f32 0.0, %v725
      %727 = vmatmul.bf16.gmra.mxu0 %v655
      %v728 = vpop.f32.mrf.mxu0
      %v729 = vadd.f32 0.0, %v728
      %v730 = vpop.f32.mrf.mxu0
      %v731 = vadd.f32 0.0, %v730
      %732 = vmatmul.bf16.gmra.mxu0 %v656
      %v733 = vpop.f32.mrf.mxu0
      %v734 = vadd.f32 0.0, %v733
      %v735 = vpop.f32.mrf.mxu0
      %v736 = vadd.f32 0.0, %v735
      %737 = vdwg.mxu0
      %v746 = vunpack.c.l.b16 %v481
      %v747 = vunpack.c.l.b16 %v482
      %v748 = vunpack.c.l.b16 %v483
      %v749 = vunpack.c.l.b16 %v484
      %v750 = vunpack.c.l.b16 %v485
      %v751 = vunpack.c.l.b16 %v486
      %v752 = vunpack.c.l.b16 %v487
      %v753 = vunpack.c.l.b16 %v488
      %v754 = vpack.c.b16 %v747, %v746
      %v755 = vpack.c.b16 %v749, %v748
      %v756 = vpack.c.b16 %v751, %v750
      %v757 = vpack.c.b16 %v753, %v752
      %v778 = vunpack.c.l.b16 %v489
      %v779 = vunpack.c.l.b16 %v490
      %v780 = vunpack.c.l.b16 %v491
      %v781 = vunpack.c.l.b16 %v492
      %v782 = vunpack.c.l.b16 %v493
      %v783 = vunpack.c.l.b16 %v494
      %v784 = vunpack.c.l.b16 %v495
      %v785 = vunpack.c.l.b16 %v496
      %v786 = vunpack.c.l.b16 %v497
      %v787 = vunpack.c.l.b16 %v498
      %v788 = vunpack.c.l.b16 %v499
      %v789 = vunpack.c.l.b16 %v500
      %v790 = vunpack.c.l.b16 %v501
      %v791 = vunpack.c.l.b16 %v502
      %v792 = vunpack.c.l.b16 %v503
      %v793 = vunpack.c.l.b16 %v504
      %v794 = vpack.c.b16 %v779, %v778
      %v795 = vpack.c.b16 %v781, %v780
      %v796 = vpack.c.b16 %v783, %v782
      %v797 = vpack.c.b16 %v785, %v784
      %v798 = vpack.c.b16 %v787, %v786
      %v799 = vpack.c.b16 %v789, %v788
      %v800 = vpack.c.b16 %v791, %v790
      %v801 = vpack.c.b16 %v793, %v792
      %810 = vmatpush.bf16.msra.mxu0 %v801
      %811 = vmatpush.bf16.msra.mxu0 %v800
      %812 = vmatpush.bf16.msra.mxu0 %v799
      %813 = vmatpush.bf16.msra.mxu0 %v798
      %814 = vmatpush.bf16.msra.mxu0 %v797
      %815 = vmatpush.bf16.msra.mxu0 %v796
      %816 = vmatpush.bf16.msra.mxu0 %v795
      %817 = vmatpush.bf16.msra.mxu0 %v794
      %818 = vmatmul.bf16.gmra.mxu0 %v754
      %v819 = vpop.f32.mrf.mxu0
      %v820 = vadd.f32 %v719, %v819
      %v821 = vpop.f32.mrf.mxu0
      %v822 = vadd.f32 %v721, %v821
      %823 = vmatmul.bf16.gmra.mxu0 %v755
      %v824 = vpop.f32.mrf.mxu0
      %v825 = vadd.f32 %v724, %v824
      %v826 = vpop.f32.mrf.mxu0
      %v827 = vadd.f32 %v726, %v826
      %828 = vmatmul.bf16.gmra.mxu0 %v756
      %v829 = vpop.f32.mrf.mxu0
      %v830 = vadd.f32 %v729, %v829
      %v831 = vpop.f32.mrf.mxu0
      %v832 = vadd.f32 %v731, %v831
      %833 = vmatmul.bf16.gmra.mxu0 %v757
      %v834 = vpop.f32.mrf.mxu0
      %v835 = vadd.f32 %v734, %v834
      %v836 = vpop.f32.mrf.mxu0
      %v837 = vadd.f32 %v736, %v836
      %838 = vdwg.mxu0
      %v839 = vld [vmem:[#allocation2] sm:$0xe]
      %v840 = vld [vmem:[#allocation2 + $0x8] sm:$0xe]
      %v841 = vld [vmem:[#allocation2 + $0x10] sm:$0xe]
      %v842 = vld [vmem:[#allocation2 + $0x18] sm:$0xe]
      %v843 = vld [vmem:[#allocation2 + $0x20] sm:$0xe]
      %v844 = vld [vmem:[#allocation2 + $0x28] sm:$0xe]
      %v845 = vld [vmem:[#allocation2 + $0x30] sm:$0xe]
      %v846 = vld [vmem:[#allocation2 + $0x38] sm:$0xe]
      %vm863 = vcmask 1042432
      %vm864 = vcmask 1046532
      %vm865 = vmor %vm863, %vm864
      %v866 = vrot.slane %v839, 5
      %v867 = vrot.slane %v866, 4
      %v868 = vrot.slane %v505, 5
      %v869 = vsel %vm865, %v867, %v868
      %v870 = vrot.slane %v840, 5
      %v871 = vrot.slane %v870, 4
      %v872 = vrot.slane %v506, 5
      %v873 = vsel %vm865, %v871, %v872
      %v874 = vrot.slane %v841, 5
      %v875 = vrot.slane %v874, 4
      %v876 = vrot.slane %v507, 5
      %v877 = vsel %vm865, %v875, %v876
      %v878 = vrot.slane %v842, 5
      %v879 = vrot.slane %v878, 4
      %v880 = vrot.slane %v508, 5
      %v881 = vsel %vm865, %v879, %v880
      %v882 = vrot.slane %v843, 5
      %v883 = vrot.slane %v882, 4
      %v884 = vrot.slane %v509, 5
      %v885 = vsel %vm865, %v883, %v884
      %v886 = vrot.slane %v844, 5
      %v887 = vrot.slane %v886, 4
      %v888 = vrot.slane %v510, 5
      %v889 = vsel %vm865, %v887, %v888
      %v890 = vrot.slane %v845, 5
      %v891 = vrot.slane %v890, 4
      %v892 = vrot.slane %v511, 5
      %v893 = vsel %vm865, %v891, %v892
      %v894 = vrot.slane %v846, 5
      %v895 = vrot.slane %v894, 4
      %v896 = vrot.slane %v512, 5
      %v897 = vsel %vm865, %v895, %v896
      %s898 = scalar_lea.vmem %s3, 128
      %v899 = vld [vmem:[%s898] sm:$0xf]
      %v900 = vld [vmem:[%s898 + $0x4] sm:$0xf]
      %v901 = vld [vmem:[%s898 + $0x8] sm:$0xf]
      %v902 = vld [vmem:[%s898 + $0xc] sm:$0xf]
      %v903 = vld [vmem:[%s898 + $0x10] sm:$0xf]
      %v904 = vld [vmem:[%s898 + $0x14] sm:$0xf]
      %v905 = vld [vmem:[%s898 + $0x18] sm:$0xf]
      %v906 = vld [vmem:[%s898 + $0x1c] sm:$0xf]
      %v907 = vld [vmem:[%s898 + $0x20] sm:$0xf]
      %v908 = vld [vmem:[%s898 + $0x24] sm:$0xf]
      %v909 = vld [vmem:[%s898 + $0x28] sm:$0xf]
      %v910 = vld [vmem:[%s898 + $0x2c] sm:$0xf]
      %v911 = vld [vmem:[%s898 + $0x30] sm:$0xf]
      %v912 = vld [vmem:[%s898 + $0x34] sm:$0xf]
      %v913 = vld [vmem:[%s898 + $0x38] sm:$0xf]
      %v914 = vld [vmem:[%s898 + $0x3c] sm:$0xf]
      %v915 = vunpack.c.l.b16 %v869
      %v916 = vunpack.c.l.b16 %v873
      %v917 = vunpack.c.l.b16 %v877
      %v918 = vunpack.c.l.b16 %v881
      %v919 = vunpack.c.l.b16 %v885
      %v920 = vunpack.c.l.b16 %v889
      %v921 = vunpack.c.l.b16 %v893
      %v922 = vunpack.c.l.b16 %v897
      %v923 = vpack.c.b16 %v916, %v915
      %v924 = vpack.c.b16 %v918, %v917
      %v925 = vpack.c.b16 %v920, %v919
      %v926 = vpack.c.b16 %v922, %v921
      %v947 = vunpack.c.l.b16 %v899
      %v948 = vunpack.c.l.b16 %v900
      %v949 = vunpack.c.l.b16 %v901
      %v950 = vunpack.c.l.b16 %v902
      %v951 = vunpack.c.l.b16 %v903
      %v952 = vunpack.c.l.b16 %v904
      %v953 = vunpack.c.l.b16 %v905
      %v954 = vunpack.c.l.b16 %v906
      %v955 = vunpack.c.l.b16 %v907
      %v956 = vunpack.c.l.b16 %v908
      %v957 = vunpack.c.l.b16 %v909
      %v958 = vunpack.c.l.b16 %v910
      %v959 = vunpack.c.l.b16 %v911
      %v960 = vunpack.c.l.b16 %v912
      %v961 = vunpack.c.l.b16 %v913
      %v962 = vunpack.c.l.b16 %v914
      %v963 = vpack.c.b16 %v948, %v947
      %v964 = vpack.c.b16 %v950, %v949
      %v965 = vpack.c.b16 %v952, %v951
      %v966 = vpack.c.b16 %v954, %v953
      %v967 = vpack.c.b16 %v956, %v955
      %v968 = vpack.c.b16 %v958, %v957
      %v969 = vpack.c.b16 %v960, %v959
      %v970 = vpack.c.b16 %v962, %v961
      %979 = vmatpush.bf16.msra.mxu0 %v970
      %980 = vmatpush.bf16.msra.mxu0 %v969
      %981 = vmatpush.bf16.msra.mxu0 %v968
      %982 = vmatpush.bf16.msra.mxu0 %v967
      %983 = vmatpush.bf16.msra.mxu0 %v966
      %984 = vmatpush.bf16.msra.mxu0 %v965
      %985 = vmatpush.bf16.msra.mxu0 %v964
      %986 = vmatpush.bf16.msra.mxu0 %v963
      %987 = vmatmul.bf16.gmra.mxu0 %v923
      %v988 = vpop.f32.mrf.mxu0
      %v989 = vadd.f32 0.0, %v988
      %v990 = vpop.f32.mrf.mxu0
      %v991 = vadd.f32 0.0, %v990
      %992 = vmatmul.bf16.gmra.mxu0 %v924
      %v993 = vpop.f32.mrf.mxu0
      %v994 = vadd.f32 0.0, %v993
      %v995 = vpop.f32.mrf.mxu0
      %v996 = vadd.f32 0.0, %v995
      %997 = vmatmul.bf16.gmra.mxu0 %v925
      %v998 = vpop.f32.mrf.mxu0
      %v999 = vadd.f32 0.0, %v998
      %v1000 = vpop.f32.mrf.mxu0
      %v1001 = vadd.f32 0.0, %v1000
      %1002 = vmatmul.bf16.gmra.mxu0 %v926
      %v1003 = vpop.f32.mrf.mxu0
      %v1004 = vadd.f32 0.0, %v1003
      %v1005 = vpop.f32.mrf.mxu0
      %v1006 = vadd.f32 0.0, %v1005
      %1007 = vdwg.mxu0
      %v1008 = vadd.f32 %v820, %v989
      %v1009 = vadd.f32 %v822, %v991
      %v1010 = vadd.f32 %v825, %v994
      %v1011 = vadd.f32 %v827, %v996
      %v1012 = vadd.f32 %v830, %v999
      %v1013 = vadd.f32 %v832, %v1001
      %v1014 = vadd.f32 %v835, %v1004
      %v1015 = vadd.f32 %v837, %v1006
      %v1016 = vld [vmem:[%s426] sm:$0xf]
      %v1017 = vld [vmem:[%s426 + $0x8] sm:$0xf]
      %v1018 = vld [vmem:[%s426 + $0x10] sm:$0xf]
      %v1019 = vld [vmem:[%s426 + $0x18] sm:$0xf]
      %v1020 = vld [vmem:[%s426 + $0x20] sm:$0xf]
      %v1021 = vld [vmem:[%s426 + $0x28] sm:$0xf]
      %v1022 = vld [vmem:[%s426 + $0x30] sm:$0xf]
      %v1023 = vld [vmem:[%s426 + $0x38] sm:$0xf]
      %s1024 = scalar_lea.vmem %s3, 192
      %v1025 = vld [vmem:[%s1024] sm:$0xf]
      %v1026 = vld [vmem:[%s1024 + $0x4] sm:$0xf]
      %v1027 = vld [vmem:[%s1024 + $0x8] sm:$0xf]
      %v1028 = vld [vmem:[%s1024 + $0xc] sm:$0xf]
      %v1029 = vld [vmem:[%s1024 + $0x10] sm:$0xf]
      %v1030 = vld [vmem:[%s1024 + $0x14] sm:$0xf]
      %v1031 = vld [vmem:[%s1024 + $0x18] sm:$0xf]
      %v1032 = vld [vmem:[%s1024 + $0x1c] sm:$0xf]
      %v1033 = vld [vmem:[%s1024 + $0x20] sm:$0xf]
      %v1034 = vld [vmem:[%s1024 + $0x24] sm:$0xf]
      %v1035 = vld [vmem:[%s1024 + $0x28] sm:$0xf]
      %v1036 = vld [vmem:[%s1024 + $0x2c] sm:$0xf]
      %v1037 = vld [vmem:[%s1024 + $0x30] sm:$0xf]
      %v1038 = vld [vmem:[%s1024 + $0x34] sm:$0xf]
      %v1039 = vld [vmem:[%s1024 + $0x38] sm:$0xf]
      %v1040 = vld [vmem:[%s1024 + $0x3c] sm:$0xf]
      %v1049 = vunpack.c.l.b16 %v1016
      %v1050 = vunpack.c.l.b16 %v1017
      %v1051 = vunpack.c.l.b16 %v1018
      %v1052 = vunpack.c.l.b16 %v1019
      %v1053 = vunpack.c.l.b16 %v1020
      %v1054 = vunpack.c.l.b16 %v1021
      %v1055 = vunpack.c.l.b16 %v1022
      %v1056 = vunpack.c.l.b16 %v1023
      %v1057 = vpack.c.b16 %v1050, %v1049
      %v1058 = vpack.c.b16 %v1052, %v1051
      %v1059 = vpack.c.b16 %v1054, %v1053
      %v1060 = vpack.c.b16 %v1056, %v1055
      %v1081 = vunpack.c.l.b16 %v1025
      %v1082 = vunpack.c.l.b16 %v1026
      %v1083 = vunpack.c.l.b16 %v1027
      %v1084 = vunpack.c.l.b16 %v1028
      %v1085 = vunpack.c.l.b16 %v1029
      %v1086 = vunpack.c.l.b16 %v1030
      %v1087 = vunpack.c.l.b16 %v1031
      %v1088 = vunpack.c.l.b16 %v1032
      %v1089 = vunpack.c.l.b16 %v1033
      %v1090 = vunpack.c.l.b16 %v1034
      %v1091 = vunpack.c.l.b16 %v1035
      %v1092 = vunpack.c.l.b16 %v1036
      %v1093 = vunpack.c.l.b16 %v1037
      %v1094 = vunpack.c.l.b16 %v1038
      %v1095 = vunpack.c.l.b16 %v1039
      %v1096 = vunpack.c.l.b16 %v1040
      %v1097 = vpack.c.b16 %v1082, %v1081
      %v1098 = vpack.c.b16 %v1084, %v1083
      %v1099 = vpack.c.b16 %v1086, %v1085
      %v1100 = vpack.c.b16 %v1088, %v1087
      %v1101 = vpack.c.b16 %v1090, %v1089
      %v1102 = vpack.c.b16 %v1092, %v1091
      %v1103 = vpack.c.b16 %v1094, %v1093
      %v1104 = vpack.c.b16 %v1096, %v1095
      %1113 = vmatpush.bf16.msra.mxu0 %v1104
      %1114 = vmatpush.bf16.msra.mxu0 %v1103
      %1115 = vmatpush.bf16.msra.mxu0 %v1102
      %1116 = vmatpush.bf16.msra.mxu0 %v1101
      %1117 = vmatpush.bf16.msra.mxu0 %v1100
      %1118 = vmatpush.bf16.msra.mxu0 %v1099
      %1119 = vmatpush.bf16.msra.mxu0 %v1098
      %1120 = vmatpush.bf16.msra.mxu0 %v1097
      %1121 = vmatmul.bf16.gmra.mxu0 %v1057
      %v1122 = vpop.f32.mrf.mxu0
      %v1123 = vadd.f32 0.0, %v1122
      %v1124 = vpop.f32.mrf.mxu0
      %v1125 = vadd.f32 0.0, %v1124
      %1126 = vmatmul.bf16.gmra.mxu0 %v1058
      %v1127 = vpop.f32.mrf.mxu0
      %v1128 = vadd.f32 0.0, %v1127
      %v1129 = vpop.f32.mrf.mxu0
      %v1130 = vadd.f32 0.0, %v1129
      %1131 = vmatmul.bf16.gmra.mxu0 %v1059
      %v1132 = vpop.f32.mrf.mxu0
      %v1133 = vadd.f32 0.0, %v1132
      %v1134 = vpop.f32.mrf.mxu0
      %v1135 = vadd.f32 0.0, %v1134
      %1136 = vmatmul.bf16.gmra.mxu0 %v1060
      %v1137 = vpop.f32.mrf.mxu0
      %v1138 = vadd.f32 0.0, %v1137
      %v1139 = vpop.f32.mrf.mxu0
      %v1140 = vadd.f32 0.0, %v1139
      %1141 = vdwg.mxu0
      %v1142 = vadd.f32 %v1008, %v1123
      %v1143 = vadd.f32 %v1009, %v1125
      %v1144 = vadd.f32 %v1010, %v1128
      %v1145 = vadd.f32 %v1011, %v1130
      %v1146 = vadd.f32 %v1012, %v1133
      %v1147 = vadd.f32 %v1013, %v1135
      %v1148 = vadd.f32 %v1014, %v1138
      %v1149 = vadd.f32 %v1015, %v1140
      %v1150 = vld [vmem:[%s426] sm:$0xf]
      %v1151 = vld [vmem:[%s426 + $0x4] sm:$0x1]
      %v1152 = vld [vmem:[%s426 + $0x8] sm:$0xf]
      %v1153 = vld [vmem:[%s426 + $0xc] sm:$0x1]
      %v1154 = vld [vmem:[%s426 + $0x10] sm:$0xf]
      %v1155 = vld [vmem:[%s426 + $0x14] sm:$0x1]
      %v1156 = vld [vmem:[%s426 + $0x18] sm:$0xf]
      %v1157 = vld [vmem:[%s426 + $0x1c] sm:$0x1]
      %v1158 = vld [vmem:[%s426 + $0x20] sm:$0xf]
      %v1159 = vld [vmem:[%s426 + $0x24] sm:$0x1]
      %v1160 = vld [vmem:[%s426 + $0x28] sm:$0xf]
      %v1161 = vld [vmem:[%s426 + $0x2c] sm:$0x1]
      %v1162 = vld [vmem:[%s426 + $0x30] sm:$0xf]
      %v1163 = vld [vmem:[%s426 + $0x34] sm:$0x1]
      %v1164 = vld [vmem:[%s426 + $0x38] sm:$0xf]
      %v1165 = vld [vmem:[%s426 + $0x3c] sm:$0x1]
      %v1167 = vshrl.u32 %v1150, 16
      %v1169 = vrot.slane %v1167, 4
      %v1170 = vshll.u32 %v1150, 16
      %v1172 = vrot.slane %v1170, 5
      %v1173 = vor.u32 %v1169, %v1172
      %v1174 = vrot.slane %v1173, 4
      %v1176 = vshll.u32 %v1151, 16
      %v1178 = vrot.slane %v1176, 5
      %v1179 = vsel %vm515, %v1174, %v1178
      %v1181 = vshrl.u32 %v1152, 16
      %v1183 = vrot.slane %v1181, 4
      %v1184 = vshll.u32 %v1152, 16
      %v1186 = vrot.slane %v1184, 5
      %v1187 = vor.u32 %v1183, %v1186
      %v1188 = vrot.slane %v1187, 4
      %v1190 = vshll.u32 %v1153, 16
      %v1192 = vrot.slane %v1190, 5
      %v1193 = vsel %vm515, %v1188, %v1192
      %v1195 = vshrl.u32 %v1154, 16
      %v1197 = vrot.slane %v1195, 4
      %v1198 = vshll.u32 %v1154, 16
      %v1200 = vrot.slane %v1198, 5
      %v1201 = vor.u32 %v1197, %v1200
      %v1202 = vrot.slane %v1201, 4
      %v1204 = vshll.u32 %v1155, 16
      %v1206 = vrot.slane %v1204, 5
      %v1207 = vsel %vm515, %v1202, %v1206
      %v1209 = vshrl.u32 %v1156, 16
      %v1211 = vrot.slane %v1209, 4
      %v1212 = vshll.u32 %v1156, 16
      %v1214 = vrot.slane %v1212, 5
      %v1215 = vor.u32 %v1211, %v1214
      %v1216 = vrot.slane %v1215, 4
      %v1218 = vshll.u32 %v1157, 16
      %v1220 = vrot.slane %v1218, 5
      %v1221 = vsel %vm515, %v1216, %v1220
      %v1223 = vshrl.u32 %v1158, 16
      %v1225 = vrot.slane %v1223, 4
      %v1226 = vshll.u32 %v1158, 16
      %v1228 = vrot.slane %v1226, 5
      %v1229 = vor.u32 %v1225, %v1228
      %v1230 = vrot.slane %v1229, 4
      %v1232 = vshll.u32 %v1159, 16
      %v1234 = vrot.slane %v1232, 5
      %v1235 = vsel %vm515, %v1230, %v1234
      %v1237 = vshrl.u32 %v1160, 16
      %v1239 = vrot.slane %v1237, 4
      %v1240 = vshll.u32 %v1160, 16
      %v1242 = vrot.slane %v1240, 5
      %v1243 = vor.u32 %v1239, %v1242
      %v1244 = vrot.slane %v1243, 4
      %v1246 = vshll.u32 %v1161, 16
      %v1248 = vrot.slane %v1246, 5
      %v1249 = vsel %vm515, %v1244, %v1248
      %v1251 = vshrl.u32 %v1162, 16
      %v1253 = vrot.slane %v1251, 4
      %v1254 = vshll.u32 %v1162, 16
      %v1256 = vrot.slane %v1254, 5
      %v1257 = vor.u32 %v1253, %v1256
      %v1258 = vrot.slane %v1257, 4
      %v1260 = vshll.u32 %v1163, 16
      %v1262 = vrot.slane %v1260, 5
      %v1263 = vsel %vm515, %v1258, %v1262
      %v1265 = vshrl.u32 %v1164, 16
      %v1267 = vrot.slane %v1265, 4
      %v1268 = vshll.u32 %v1164, 16
      %v1270 = vrot.slane %v1268, 5
      %v1271 = vor.u32 %v1267, %v1270
      %v1272 = vrot.slane %v1271, 4
      %v1274 = vshll.u32 %v1165, 16
      %v1276 = vrot.slane %v1274, 5
      %v1277 = vsel %vm515, %v1272, %v1276
      %s1278 = scalar_lea.vmem %s3, 256
      %v1279 = vld [vmem:[%s1278] sm:$0xf]
      %v1280 = vld [vmem:[%s1278 + $0x4] sm:$0xf]
      %v1281 = vld [vmem:[%s1278 + $0x8] sm:$0xf]
      %v1282 = vld [vmem:[%s1278 + $0xc] sm:$0xf]
      %v1283 = vld [vmem:[%s1278 + $0x10] sm:$0xf]
      %v1284 = vld [vmem:[%s1278 + $0x14] sm:$0xf]
      %v1285 = vld [vmem:[%s1278 + $0x18] sm:$0xf]
      %v1286 = vld [vmem:[%s1278 + $0x1c] sm:$0xf]
      %v1287 = vld [vmem:[%s1278 + $0x20] sm:$0xf]
      %v1288 = vld [vmem:[%s1278 + $0x24] sm:$0xf]
      %v1289 = vld [vmem:[%s1278 + $0x28] sm:$0xf]
      %v1290 = vld [vmem:[%s1278 + $0x2c] sm:$0xf]
      %v1291 = vld [vmem:[%s1278 + $0x30] sm:$0xf]
      %v1292 = vld [vmem:[%s1278 + $0x34] sm:$0xf]
      %v1293 = vld [vmem:[%s1278 + $0x38] sm:$0xf]
      %v1294 = vld [vmem:[%s1278 + $0x3c] sm:$0xf]
      %v1295 = vunpack.c.l.b16 %v1179
      %v1296 = vunpack.c.l.b16 %v1193
      %v1297 = vunpack.c.l.b16 %v1207
      %v1298 = vunpack.c.l.b16 %v1221
      %v1299 = vunpack.c.l.b16 %v1235
      %v1300 = vunpack.c.l.b16 %v1249
      %v1301 = vunpack.c.l.b16 %v1263
      %v1302 = vunpack.c.l.b16 %v1277
      %v1303 = vpack.c.b16 %v1296, %v1295
      %v1304 = vpack.c.b16 %v1298, %v1297
      %v1305 = vpack.c.b16 %v1300, %v1299
      %v1306 = vpack.c.b16 %v1302, %v1301
      %v1327 = vunpack.c.l.b16 %v1279
      %v1328 = vunpack.c.l.b16 %v1280
      %v1329 = vunpack.c.l.b16 %v1281
      %v1330 = vunpack.c.l.b16 %v1282
      %v1331 = vunpack.c.l.b16 %v1283
      %v1332 = vunpack.c.l.b16 %v1284
      %v1333 = vunpack.c.l.b16 %v1285
      %v1334 = vunpack.c.l.b16 %v1286
      %v1335 = vunpack.c.l.b16 %v1287
      %v1336 = vunpack.c.l.b16 %v1288
      %v1337 = vunpack.c.l.b16 %v1289
      %v1338 = vunpack.c.l.b16 %v1290
      %v1339 = vunpack.c.l.b16 %v1291
      %v1340 = vunpack.c.l.b16 %v1292
      %v1341 = vunpack.c.l.b16 %v1293
      %v1342 = vunpack.c.l.b16 %v1294
      %v1343 = vpack.c.b16 %v1328, %v1327
      %v1344 = vpack.c.b16 %v1330, %v1329
      %v1345 = vpack.c.b16 %v1332, %v1331
      %v1346 = vpack.c.b16 %v1334, %v1333
      %v1347 = vpack.c.b16 %v1336, %v1335
      %v1348 = vpack.c.b16 %v1338, %v1337
      %v1349 = vpack.c.b16 %v1340, %v1339
      %v1350 = vpack.c.b16 %v1342, %v1341
      %1359 = vmatpush.bf16.msra.mxu0 %v1350
      %1360 = vmatpush.bf16.msra.mxu0 %v1349
      %1361 = vmatpush.bf16.msra.mxu0 %v1348
      %1362 = vmatpush.bf16.msra.mxu0 %v1347
      %1363 = vmatpush.bf16.msra.mxu0 %v1346
      %1364 = vmatpush.bf16.msra.mxu0 %v1345
      %1365 = vmatpush.bf16.msra.mxu0 %v1344
      %1366 = vmatpush.bf16.msra.mxu0 %v1343
      %1367 = vmatmul.bf16.gmra.mxu0 %v1303
      %v1368 = vpop.f32.mrf.mxu0
      %v1369 = vadd.f32 0.0, %v1368
      %v1370 = vpop.f32.mrf.mxu0
      %v1371 = vadd.f32 0.0, %v1370
      %1372 = vmatmul.bf16.gmra.mxu0 %v1304
      %v1373 = vpop.f32.mrf.mxu0
      %v1374 = vadd.f32 0.0, %v1373
      %v1375 = vpop.f32.mrf.mxu0
      %v1376 = vadd.f32 0.0, %v1375
      %1377 = vmatmul.bf16.gmra.mxu0 %v1305
      %v1378 = vpop.f32.mrf.mxu0
      %v1379 = vadd.f32 0.0, %v1378
      %v1380 = vpop.f32.mrf.mxu0
      %v1381 = vadd.f32 0.0, %v1380
      %1382 = vmatmul.bf16.gmra.mxu0 %v1306
      %v1383 = vpop.f32.mrf.mxu0
      %v1384 = vadd.f32 0.0, %v1383
      %v1385 = vpop.f32.mrf.mxu0
      %v1386 = vadd.f32 0.0, %v1385
      %1387 = vdwg.mxu0
      %v1388 = vadd.f32 %v1142, %v1369
      %v1389 = vadd.f32 %v1143, %v1371
      %v1390 = vadd.f32 %v1144, %v1374
      %v1391 = vadd.f32 %v1145, %v1376
      %v1392 = vadd.f32 %v1146, %v1379
      %v1393 = vadd.f32 %v1147, %v1381
      %v1394 = vadd.f32 %v1148, %v1384
      %v1395 = vadd.f32 %v1149, %v1386
      %v1396 = vld [vmem:[%s426] sm:$0xe]
      %v1397 = vld [vmem:[%s426 + $0x8] sm:$0xe]
      %v1398 = vld [vmem:[%s426 + $0x10] sm:$0xe]
      %v1399 = vld [vmem:[%s426 + $0x18] sm:$0xe]
      %v1400 = vld [vmem:[%s426 + $0x20] sm:$0xe]
      %v1401 = vld [vmem:[%s426 + $0x28] sm:$0xe]
      %v1402 = vld [vmem:[%s426 + $0x30] sm:$0xe]
      %v1403 = vld [vmem:[%s426 + $0x38] sm:$0xe]
      %v1420 = vrot.slane %v1396, 5
      %v1421 = vrot.slane %v1420, 4
      %v1422 = vrot.slane %v1151, 5
      %v1423 = vsel %vm865, %v1421, %v1422
      %v1424 = vrot.slane %v1397, 5
      %v1425 = vrot.slane %v1424, 4
      %v1426 = vrot.slane %v1153, 5
      %v1427 = vsel %vm865, %v1425, %v1426
      %v1428 = vrot.slane %v1398, 5
      %v1429 = vrot.slane %v1428, 4
      %v1430 = vrot.slane %v1155, 5
      %v1431 = vsel %vm865, %v1429, %v1430
      %v1432 = vrot.slane %v1399, 5
      %v1433 = vrot.slane %v1432, 4
      %v1434 = vrot.slane %v1157, 5
      %v1435 = vsel %vm865, %v1433, %v1434
      %v1436 = vrot.slane %v1400, 5
      %v1437 = vrot.slane %v1436, 4
      %v1438 = vrot.slane %v1159, 5
      %v1439 = vsel %vm865, %v1437, %v1438
      %v1440 = vrot.slane %v1401, 5
      %v1441 = vrot.slane %v1440, 4
      %v1442 = vrot.slane %v1161, 5
      %v1443 = vsel %vm865, %v1441, %v1442
      %v1444 = vrot.slane %v1402, 5
      %v1445 = vrot.slane %v1444, 4
      %v1446 = vrot.slane %v1163, 5
      %v1447 = vsel %vm865, %v1445, %v1446
      %v1448 = vrot.slane %v1403, 5
      %v1449 = vrot.slane %v1448, 4
      %v1450 = vrot.slane %v1165, 5
      %v1451 = vsel %vm865, %v1449, %v1450
      %s1452 = scalar_lea.vmem %s3, 320
      %v1453 = vld [vmem:[%s1452] sm:$0xf]
      %v1454 = vld [vmem:[%s1452 + $0x4] sm:$0xf]
      %v1455 = vld [vmem:[%s1452 + $0x8] sm:$0xf]
      %v1456 = vld [vmem:[%s1452 + $0xc] sm:$0xf]
      %v1457 = vld [vmem:[%s1452 + $0x10] sm:$0xf]
      %v1458 = vld [vmem:[%s1452 + $0x14] sm:$0xf]
      %v1459 = vld [vmem:[%s1452 + $0x18] sm:$0xf]
      %v1460 = vld [vmem:[%s1452 + $0x1c] sm:$0xf]
      %v1461 = vld [vmem:[%s1452 + $0x20] sm:$0xf]
      %v1462 = vld [vmem:[%s1452 + $0x24] sm:$0xf]
      %v1463 = vld [vmem:[%s1452 + $0x28] sm:$0xf]
      %v1464 = vld [vmem:[%s1452 + $0x2c] sm:$0xf]
      %v1465 = vld [vmem:[%s1452 + $0x30] sm:$0xf]
      %v1466 = vld [vmem:[%s1452 + $0x34] sm:$0xf]
      %v1467 = vld [vmem:[%s1452 + $0x38] sm:$0xf]
      %v1468 = vld [vmem:[%s1452 + $0x3c] sm:$0xf]
      %v1469 = vunpack.c.l.b16 %v1423
      %v1470 = vunpack.c.l.b16 %v1427
      %v1471 = vunpack.c.l.b16 %v1431
      %v1472 = vunpack.c.l.b16 %v1435
      %v1473 = vunpack.c.l.b16 %v1439
      %v1474 = vunpack.c.l.b16 %v1443
      %v1475 = vunpack.c.l.b16 %v1447
      %v1476 = vunpack.c.l.b16 %v1451
      %v1477 = vpack.c.b16 %v1470, %v1469
      %v1478 = vpack.c.b16 %v1472, %v1471
      %v1479 = vpack.c.b16 %v1474, %v1473
      %v1480 = vpack.c.b16 %v1476, %v1475
      %v1501 = vunpack.c.l.b16 %v1453
      %v1502 = vunpack.c.l.b16 %v1454
      %v1503 = vunpack.c.l.b16 %v1455
      %v1504 = vunpack.c.l.b16 %v1456
      %v1505 = vunpack.c.l.b16 %v1457
      %v1506 = vunpack.c.l.b16 %v1458
      %v1507 = vunpack.c.l.b16 %v1459
      %v1508 = vunpack.c.l.b16 %v1460
      %v1509 = vunpack.c.l.b16 %v1461
      %v1510 = vunpack.c.l.b16 %v1462
      %v1511 = vunpack.c.l.b16 %v1463
      %v1512 = vunpack.c.l.b16 %v1464
      %v1513 = vunpack.c.l.b16 %v1465
      %v1514 = vunpack.c.l.b16 %v1466
      %v1515 = vunpack.c.l.b16 %v1467
      %v1516 = vunpack.c.l.b16 %v1468
      %v1517 = vpack.c.b16 %v1502, %v1501
      %v1518 = vpack.c.b16 %v1504, %v1503
      %v1519 = vpack.c.b16 %v1506, %v1505
      %v1520 = vpack.c.b16 %v1508, %v1507
      %v1521 = vpack.c.b16 %v1510, %v1509
      %v1522 = vpack.c.b16 %v1512, %v1511
      %v1523 = vpack.c.b16 %v1514, %v1513
      %v1524 = vpack.c.b16 %v1516, %v1515
      %1533 = vmatpush.bf16.msra.mxu0 %v1524
      %1534 = vmatpush.bf16.msra.mxu0 %v1523
      %1535 = vmatpush.bf16.msra.mxu0 %v1522
      %1536 = vmatpush.bf16.msra.mxu0 %v1521
      %1537 = vmatpush.bf16.msra.mxu0 %v1520
      %1538 = vmatpush.bf16.msra.mxu0 %v1519
      %1539 = vmatpush.bf16.msra.mxu0 %v1518
      %1540 = vmatpush.bf16.msra.mxu0 %v1517
      %1541 = vmatmul.bf16.gmra.mxu0 %v1477
      %v1542 = vpop.f32.mrf.mxu0
      %v1543 = vadd.f32 0.0, %v1542
      %v1544 = vpop.f32.mrf.mxu0
      %v1545 = vadd.f32 0.0, %v1544
      %1546 = vmatmul.bf16.gmra.mxu0 %v1478
      %v1547 = vpop.f32.mrf.mxu0
      %v1548 = vadd.f32 0.0, %v1547
      %v1549 = vpop.f32.mrf.mxu0
      %v1550 = vadd.f32 0.0, %v1549
      %1551 = vmatmul.bf16.gmra.mxu0 %v1479
      %v1552 = vpop.f32.mrf.mxu0
      %v1553 = vadd.f32 0.0, %v1552
      %v1554 = vpop.f32.mrf.mxu0
      %v1555 = vadd.f32 0.0, %v1554
      %1556 = vmatmul.bf16.gmra.mxu0 %v1480
      %v1557 = vpop.f32.mrf.mxu0
      %v1558 = vadd.f32 0.0, %v1557
      %v1559 = vpop.f32.mrf.mxu0
      %v1560 = vadd.f32 0.0, %v1559
      %1561 = vdwg.mxu0
      %v1562 = vadd.f32 %v1388, %v1543
      %v1563 = vadd.f32 %v1389, %v1545
      %v1564 = vadd.f32 %v1390, %v1548
      %v1565 = vadd.f32 %v1391, %v1550
      %v1566 = vadd.f32 %v1392, %v1553
      %v1567 = vadd.f32 %v1393, %v1555
      %v1568 = vadd.f32 %v1394, %v1558
      %v1569 = vadd.f32 %v1395, %v1560
      %s1570 = scalar_lea.vmem [#allocation2], 16
      %v1571 = vld [vmem:[%s1570] sm:$0xf]
      %v1572 = vld [vmem:[%s1570 + $0x8] sm:$0xf]
      %v1573 = vld [vmem:[%s1570 + $0x10] sm:$0xf]
      %v1574 = vld [vmem:[%s1570 + $0x18] sm:$0xf]
      %v1575 = vld [vmem:[%s1570 + $0x20] sm:$0xf]
      %v1576 = vld [vmem:[%s1570 + $0x28] sm:$0xf]
      %v1577 = vld [vmem:[%s1570 + $0x30] sm:$0xf]
      %v1578 = vld [vmem:[%s1570 + $0x38] sm:$0xf]
      %s1579 = scalar_lea.vmem %s3, 384
      %v1580 = vld [vmem:[%s1579] sm:$0xf]
      %v1581 = vld [vmem:[%s1579 + $0x4] sm:$0xf]
      %v1582 = vld [vmem:[%s1579 + $0x8] sm:$0xf]
      %v1583 = vld [vmem:[%s1579 + $0xc] sm:$0xf]
      %v1584 = vld [vmem:[%s1579 + $0x10] sm:$0xf]
      %v1585 = vld [vmem:[%s1579 + $0x14] sm:$0xf]
      %v1586 = vld [vmem:[%s1579 + $0x18] sm:$0xf]
      %v1587 = vld [vmem:[%s1579 + $0x1c] sm:$0xf]
      %v1588 = vld [vmem:[%s1579 + $0x20] sm:$0xf]
      %v1589 = vld [vmem:[%s1579 + $0x24] sm:$0xf]
      %v1590 = vld [vmem:[%s1579 + $0x28] sm:$0xf]
      %v1591 = vld [vmem:[%s1579 + $0x2c] sm:$0xf]
      %v1592 = vld [vmem:[%s1579 + $0x30] sm:$0xf]
      %v1593 = vld [vmem:[%s1579 + $0x34] sm:$0xf]
      %v1594 = vld [vmem:[%s1579 + $0x38] sm:$0xf]
      %v1595 = vld [vmem:[%s1579 + $0x3c] sm:$0xf]
      %v1604 = vunpack.c.l.b16 %v1571
      %v1605 = vunpack.c.l.b16 %v1572
      %v1606 = vunpack.c.l.b16 %v1573
      %v1607 = vunpack.c.l.b16 %v1574
      %v1608 = vunpack.c.l.b16 %v1575
      %v1609 = vunpack.c.l.b16 %v1576
      %v1610 = vunpack.c.l.b16 %v1577
      %v1611 = vunpack.c.l.b16 %v1578
      %v1612 = vpack.c.b16 %v1605, %v1604
      %v1613 = vpack.c.b16 %v1607, %v1606
      %v1614 = vpack.c.b16 %v1609, %v1608
      %v1615 = vpack.c.b16 %v1611, %v1610
      %v1636 = vunpack.c.l.b16 %v1580
      %v1637 = vunpack.c.l.b16 %v1581
      %v1638 = vunpack.c.l.b16 %v1582
      %v1639 = vunpack.c.l.b16 %v1583
      %v1640 = vunpack.c.l.b16 %v1584
      %v1641 = vunpack.c.l.b16 %v1585
      %v1642 = vunpack.c.l.b16 %v1586
      %v1643 = vunpack.c.l.b16 %v1587
      %v1644 = vunpack.c.l.b16 %v1588
      %v1645 = vunpack.c.l.b16 %v1589
      %v1646 = vunpack.c.l.b16 %v1590
      %v1647 = vunpack.c.l.b16 %v1591
      %v1648 = vunpack.c.l.b16 %v1592
      %v1649 = vunpack.c.l.b16 %v1593
      %v1650 = vunpack.c.l.b16 %v1594
      %v1651 = vunpack.c.l.b16 %v1595
      %v1652 = vpack.c.b16 %v1637, %v1636
      %v1653 = vpack.c.b16 %v1639, %v1638
      %v1654 = vpack.c.b16 %v1641, %v1640
      %v1655 = vpack.c.b16 %v1643, %v1642
      %v1656 = vpack.c.b16 %v1645, %v1644
      %v1657 = vpack.c.b16 %v1647, %v1646
      %v1658 = vpack.c.b16 %v1649, %v1648
      %v1659 = vpack.c.b16 %v1651, %v1650
      %1668 = vmatpush.bf16.msra.mxu0 %v1659
      %1669 = vmatpush.bf16.msra.mxu0 %v1658
      %1670 = vmatpush.bf16.msra.mxu0 %v1657
      %1671 = vmatpush.bf16.msra.mxu0 %v1656
      %1672 = vmatpush.bf16.msra.mxu0 %v1655
      %1673 = vmatpush.bf16.msra.mxu0 %v1654
      %1674 = vmatpush.bf16.msra.mxu0 %v1653
      %1675 = vmatpush.bf16.msra.mxu0 %v1652
      %1676 = vmatmul.bf16.gmra.mxu0 %v1612
      %v1677 = vpop.f32.mrf.mxu0
      %v1678 = vadd.f32 0.0, %v1677
      %v1679 = vpop.f32.mrf.mxu0
      %v1680 = vadd.f32 0.0, %v1679
      %1681 = vmatmul.bf16.gmra.mxu0 %v1613
      %v1682 = vpop.f32.mrf.mxu0
      %v1683 = vadd.f32 0.0, %v1682
      %v1684 = vpop.f32.mrf.mxu0
      %v1685 = vadd.f32 0.0, %v1684
      %1686 = vmatmul.bf16.gmra.mxu0 %v1614
      %v1687 = vpop.f32.mrf.mxu0
      %v1688 = vadd.f32 0.0, %v1687
      %v1689 = vpop.f32.mrf.mxu0
      %v1690 = vadd.f32 0.0, %v1689
      %1691 = vmatmul.bf16.gmra.mxu0 %v1615
      %v1692 = vpop.f32.mrf.mxu0
      %v1693 = vadd.f32 0.0, %v1692
      %v1694 = vpop.f32.mrf.mxu0
      %v1695 = vadd.f32 0.0, %v1694
      %1696 = vdwg.mxu0
      %v1697 = vadd.f32 %v1562, %v1678
      %v1698 = vadd.f32 %v1563, %v1680
      %v1699 = vadd.f32 %v1564, %v1683
      %v1700 = vadd.f32 %v1565, %v1685
      %v1701 = vadd.f32 %v1566, %v1688
      %v1702 = vadd.f32 %v1567, %v1690
      %v1703 = vadd.f32 %v1568, %v1693
      %v1704 = vadd.f32 %v1569, %v1695
      %v1705 = vld [vmem:[%s1570] sm:$0xf]
      %v1706 = vld [vmem:[%s1570 + $0x4] sm:$0x1]
      %v1707 = vld [vmem:[%s1570 + $0x8] sm:$0xf]
      %v1708 = vld [vmem:[%s1570 + $0xc] sm:$0x1]
      %v1709 = vld [vmem:[%s1570 + $0x10] sm:$0xf]
      %v1710 = vld [vmem:[%s1570 + $0x14] sm:$0x1]
      %v1711 = vld [vmem:[%s1570 + $0x18] sm:$0xf]
      %v1712 = vld [vmem:[%s1570 + $0x1c] sm:$0x1]
      %v1713 = vld [vmem:[%s1570 + $0x20] sm:$0xf]
      %v1714 = vld [vmem:[%s1570 + $0x24] sm:$0x1]
      %v1715 = vld [vmem:[%s1570 + $0x28] sm:$0xf]
      %v1716 = vld [vmem:[%s1570 + $0x2c] sm:$0x1]
      %v1717 = vld [vmem:[%s1570 + $0x30] sm:$0xf]
      %v1718 = vld [vmem:[%s1570 + $0x34] sm:$0x1]
      %v1719 = vld [vmem:[%s1570 + $0x38] sm:$0xf]
      %v1720 = vld [vmem:[%s1570 + $0x3c] sm:$0x1]
      %v1722 = vshrl.u32 %v1705, 16
      %v1724 = vrot.slane %v1722, 4
      %v1725 = vshll.u32 %v1705, 16
      %v1727 = vrot.slane %v1725, 5
      %v1728 = vor.u32 %v1724, %v1727
      %v1729 = vrot.slane %v1728, 4
      %v1731 = vshll.u32 %v1706, 16
      %v1733 = vrot.slane %v1731, 5
      %v1734 = vsel %vm515, %v1729, %v1733
      %v1736 = vshrl.u32 %v1707, 16
      %v1738 = vrot.slane %v1736, 4
      %v1739 = vshll.u32 %v1707, 16
      %v1741 = vrot.slane %v1739, 5
      %v1742 = vor.u32 %v1738, %v1741
      %v1743 = vrot.slane %v1742, 4
      %v1745 = vshll.u32 %v1708, 16
      %v1747 = vrot.slane %v1745, 5
      %v1748 = vsel %vm515, %v1743, %v1747
      %v1750 = vshrl.u32 %v1709, 16
      %v1752 = vrot.slane %v1750, 4
      %v1753 = vshll.u32 %v1709, 16
      %v1755 = vrot.slane %v1753, 5
      %v1756 = vor.u32 %v1752, %v1755
      %v1757 = vrot.slane %v1756, 4
      %v1759 = vshll.u32 %v1710, 16
      %v1761 = vrot.slane %v1759, 5
      %v1762 = vsel %vm515, %v1757, %v1761
      %v1764 = vshrl.u32 %v1711, 16
      %v1766 = vrot.slane %v1764, 4
      %v1767 = vshll.u32 %v1711, 16
      %v1769 = vrot.slane %v1767, 5
      %v1770 = vor.u32 %v1766, %v1769
      %v1771 = vrot.slane %v1770, 4
      %v1773 = vshll.u32 %v1712, 16
      %v1775 = vrot.slane %v1773, 5
      %v1776 = vsel %vm515, %v1771, %v1775
      %v1778 = vshrl.u32 %v1713, 16
      %v1780 = vrot.slane %v1778, 4
      %v1781 = vshll.u32 %v1713, 16
      %v1783 = vrot.slane %v1781, 5
      %v1784 = vor.u32 %v1780, %v1783
      %v1785 = vrot.slane %v1784, 4
      %v1787 = vshll.u32 %v1714, 16
      %v1789 = vrot.slane %v1787, 5
      %v1790 = vsel %vm515, %v1785, %v1789
      %v1792 = vshrl.u32 %v1715, 16
      %v1794 = vrot.slane %v1792, 4
      %v1795 = vshll.u32 %v1715, 16
      %v1797 = vrot.slane %v1795, 5
      %v1798 = vor.u32 %v1794, %v1797
      %v1799 = vrot.slane %v1798, 4
      %v1801 = vshll.u32 %v1716, 16
      %v1803 = vrot.slane %v1801, 5
      %v1804 = vsel %vm515, %v1799, %v1803
      %v1806 = vshrl.u32 %v1717, 16
      %v1808 = vrot.slane %v1806, 4
      %v1809 = vshll.u32 %v1717, 16
      %v1811 = vrot.slane %v1809, 5
      %v1812 = vor.u32 %v1808, %v1811
      %v1813 = vrot.slane %v1812, 4
      %v1815 = vshll.u32 %v1718, 16
      %v1817 = vrot.slane %v1815, 5
      %v1818 = vsel %vm515, %v1813, %v1817
      %v1820 = vshrl.u32 %v1719, 16
      %v1822 = vrot.slane %v1820, 4
      %v1823 = vshll.u32 %v1719, 16
      %v1825 = vrot.slane %v1823, 5
      %v1826 = vor.u32 %v1822, %v1825
      %v1827 = vrot.slane %v1826, 4
      %v1829 = vshll.u32 %v1720, 16
      %v1831 = vrot.slane %v1829, 5
      %v1832 = vsel %vm515, %v1827, %v1831
      %s1833 = scalar_lea.vmem %s3, 448
      %v1834 = vld [vmem:[%s1833] sm:$0xf]
      %v1835 = vld [vmem:[%s1833 + $0x4] sm:$0xf]
      %v1836 = vld [vmem:[%s1833 + $0x8] sm:$0xf]
      %v1837 = vld [vmem:[%s1833 + $0xc] sm:$0xf]
      %v1838 = vld [vmem:[%s1833 + $0x10] sm:$0xf]
      %v1839 = vld [vmem:[%s1833 + $0x14] sm:$0xf]
      %v1840 = vld [vmem:[%s1833 + $0x18] sm:$0xf]
      %v1841 = vld [vmem:[%s1833 + $0x1c] sm:$0xf]
      %v1842 = vld [vmem:[%s1833 + $0x20] sm:$0xf]
      %v1843 = vld [vmem:[%s1833 + $0x24] sm:$0xf]
      %v1844 = vld [vmem:[%s1833 + $0x28] sm:$0xf]
      %v1845 = vld [vmem:[%s1833 + $0x2c] sm:$0xf]
      %v1846 = vld [vmem:[%s1833 + $0x30] sm:$0xf]
      %v1847 = vld [vmem:[%s1833 + $0x34] sm:$0xf]
      %v1848 = vld [vmem:[%s1833 + $0x38] sm:$0xf]
      %v1849 = vld [vmem:[%s1833 + $0x3c] sm:$0xf]
      %v1850 = vunpack.c.l.b16 %v1734
      %v1851 = vunpack.c.l.b16 %v1748
      %v1852 = vunpack.c.l.b16 %v1762
      %v1853 = vunpack.c.l.b16 %v1776
      %v1854 = vunpack.c.l.b16 %v1790
      %v1855 = vunpack.c.l.b16 %v1804
      %v1856 = vunpack.c.l.b16 %v1818
      %v1857 = vunpack.c.l.b16 %v1832
      %v1858 = vpack.c.b16 %v1851, %v1850
      %v1859 = vpack.c.b16 %v1853, %v1852
      %v1860 = vpack.c.b16 %v1855, %v1854
      %v1861 = vpack.c.b16 %v1857, %v1856
      %v1882 = vunpack.c.l.b16 %v1834
      %v1883 = vunpack.c.l.b16 %v1835
      %v1884 = vunpack.c.l.b16 %v1836
      %v1885 = vunpack.c.l.b16 %v1837
      %v1886 = vunpack.c.l.b16 %v1838
      %v1887 = vunpack.c.l.b16 %v1839
      %v1888 = vunpack.c.l.b16 %v1840
      %v1889 = vunpack.c.l.b16 %v1841
      %v1890 = vunpack.c.l.b16 %v1842
      %v1891 = vunpack.c.l.b16 %v1843
      %v1892 = vunpack.c.l.b16 %v1844
      %v1893 = vunpack.c.l.b16 %v1845
      %v1894 = vunpack.c.l.b16 %v1846
      %v1895 = vunpack.c.l.b16 %v1847
      %v1896 = vunpack.c.l.b16 %v1848
      %v1897 = vunpack.c.l.b16 %v1849
      %v1898 = vpack.c.b16 %v1883, %v1882
      %v1899 = vpack.c.b16 %v1885, %v1884
      %v1900 = vpack.c.b16 %v1887, %v1886
      %v1901 = vpack.c.b16 %v1889, %v1888
      %v1902 = vpack.c.b16 %v1891, %v1890
      %v1903 = vpack.c.b16 %v1893, %v1892
      %v1904 = vpack.c.b16 %v1895, %v1894
      %v1905 = vpack.c.b16 %v1897, %v1896
      %1914 = vmatpush.bf16.msra.mxu0 %v1905
      %1915 = vmatpush.bf16.msra.mxu0 %v1904
      %1916 = vmatpush.bf16.msra.mxu0 %v1903
      %1917 = vmatpush.bf16.msra.mxu0 %v1902
      %1918 = vmatpush.bf16.msra.mxu0 %v1901
      %1919 = vmatpush.bf16.msra.mxu0 %v1900
      %1920 = vmatpush.bf16.msra.mxu0 %v1899
      %1921 = vmatpush.bf16.msra.mxu0 %v1898
      %1922 = vmatmul.bf16.gmra.mxu0 %v1858
      %v1923 = vpop.f32.mrf.mxu0
      %v1924 = vadd.f32 0.0, %v1923
      %v1925 = vpop.f32.mrf.mxu0
      %v1926 = vadd.f32 0.0, %v1925
      %1927 = vmatmul.bf16.gmra.mxu0 %v1859
      %v1928 = vpop.f32.mrf.mxu0
      %v1929 = vadd.f32 0.0, %v1928
      %v1930 = vpop.f32.mrf.mxu0
      %v1931 = vadd.f32 0.0, %v1930
      %1932 = vmatmul.bf16.gmra.mxu0 %v1860
      %v1933 = vpop.f32.mrf.mxu0
      %v1934 = vadd.f32 0.0, %v1933
      %v1935 = vpop.f32.mrf.mxu0
      %v1936 = vadd.f32 0.0, %v1935
      %1937 = vmatmul.bf16.gmra.mxu0 %v1861
      %v1938 = vpop.f32.mrf.mxu0
      %v1939 = vadd.f32 0.0, %v1938
      %v1940 = vpop.f32.mrf.mxu0
      %v1941 = vadd.f32 0.0, %v1940
      %1942 = vdwg.mxu0
      %v1943 = vadd.f32 %v1697, %v1924
      %v1944 = vadd.f32 %v1698, %v1926
      %v1945 = vadd.f32 %v1699, %v1929
      %v1946 = vadd.f32 %v1700, %v1931
      %v1947 = vadd.f32 %v1701, %v1934
      %v1948 = vadd.f32 %v1702, %v1936
      %v1949 = vadd.f32 %v1703, %v1939
      %v1950 = vadd.f32 %v1704, %v1941
      %v1951 = vld [vmem:[%s1570] sm:$0xe]
      %v1952 = vld [vmem:[%s1570 + $0x8] sm:$0xe]
      %v1953 = vld [vmem:[%s1570 + $0x10] sm:$0xe]
      %v1954 = vld [vmem:[%s1570 + $0x18] sm:$0xe]
      %v1955 = vld [vmem:[%s1570 + $0x20] sm:$0xe]
      %v1956 = vld [vmem:[%s1570 + $0x28] sm:$0xe]
      %v1957 = vld [vmem:[%s1570 + $0x30] sm:$0xe]
      %v1958 = vld [vmem:[%s1570 + $0x38] sm:$0xe]
      %v1975 = vrot.slane %v1951, 5
      %v1976 = vrot.slane %v1975, 4
      %v1977 = vrot.slane %v1706, 5
      %v1978 = vsel %vm865, %v1976, %v1977
      %v1979 = vrot.slane %v1952, 5
      %v1980 = vrot.slane %v1979, 4
      %v1981 = vrot.slane %v1708, 5
      %v1982 = vsel %vm865, %v1980, %v1981
      %v1983 = vrot.slane %v1953, 5
      %v1984 = vrot.slane %v1983, 4
      %v1985 = vrot.slane %v1710, 5
      %v1986 = vsel %vm865, %v1984, %v1985
      %v1987 = vrot.slane %v1954, 5
      %v1988 = vrot.slane %v1987, 4
      %v1989 = vrot.slane %v1712, 5
      %v1990 = vsel %vm865, %v1988, %v1989
      %v1991 = vrot.slane %v1955, 5
      %v1992 = vrot.slane %v1991, 4
      %v1993 = vrot.slane %v1714, 5
      %v1994 = vsel %vm865, %v1992, %v1993
      %v1995 = vrot.slane %v1956, 5
      %v1996 = vrot.slane %v1995, 4
      %v1997 = vrot.slane %v1716, 5
      %v1998 = vsel %vm865, %v1996, %v1997
      %v1999 = vrot.slane %v1957, 5
      %v2000 = vrot.slane %v1999, 4
      %v2001 = vrot.slane %v1718, 5
      %v2002 = vsel %vm865, %v2000, %v2001
      %v2003 = vrot.slane %v1958, 5
      %v2004 = vrot.slane %v2003, 4
      %v2005 = vrot.slane %v1720, 5
      %v2006 = vsel %vm865, %v2004, %v2005
      %s2007 = scalar_lea.vmem %s3, 512
      %v2008 = vld [vmem:[%s2007] sm:$0xf]
      %v2009 = vld [vmem:[%s2007 + $0x4] sm:$0xf]
      %v2010 = vld [vmem:[%s2007 + $0x8] sm:$0xf]
      %v2011 = vld [vmem:[%s2007 + $0xc] sm:$0xf]
      %v2012 = vld [vmem:[%s2007 + $0x10] sm:$0xf]
      %v2013 = vld [vmem:[%s2007 + $0x14] sm:$0xf]
      %v2014 = vld [vmem:[%s2007 + $0x18] sm:$0xf]
      %v2015 = vld [vmem:[%s2007 + $0x1c] sm:$0xf]
      %v2016 = vld [vmem:[%s2007 + $0x20] sm:$0xf]
      %v2017 = vld [vmem:[%s2007 + $0x24] sm:$0xf]
      %v2018 = vld [vmem:[%s2007 + $0x28] sm:$0xf]
      %v2019 = vld [vmem:[%s2007 + $0x2c] sm:$0xf]
      %v2020 = vld [vmem:[%s2007 + $0x30] sm:$0xf]
      %v2021 = vld [vmem:[%s2007 + $0x34] sm:$0xf]
      %v2022 = vld [vmem:[%s2007 + $0x38] sm:$0xf]
      %v2023 = vld [vmem:[%s2007 + $0x3c] sm:$0xf]
      %v2024 = vunpack.c.l.b16 %v1978
      %v2025 = vunpack.c.l.b16 %v1982
      %v2026 = vunpack.c.l.b16 %v1986
      %v2027 = vunpack.c.l.b16 %v1990
      %v2028 = vunpack.c.l.b16 %v1994
      %v2029 = vunpack.c.l.b16 %v1998
      %v2030 = vunpack.c.l.b16 %v2002
      %v2031 = vunpack.c.l.b16 %v2006
      %v2032 = vpack.c.b16 %v2025, %v2024
      %v2033 = vpack.c.b16 %v2027, %v2026
      %v2034 = vpack.c.b16 %v2029, %v2028
      %v2035 = vpack.c.b16 %v2031, %v2030
      %v2056 = vunpack.c.l.b16 %v2008
      %v2057 = vunpack.c.l.b16 %v2009
      %v2058 = vunpack.c.l.b16 %v2010
      %v2059 = vunpack.c.l.b16 %v2011
      %v2060 = vunpack.c.l.b16 %v2012
      %v2061 = vunpack.c.l.b16 %v2013
      %v2062 = vunpack.c.l.b16 %v2014
      %v2063 = vunpack.c.l.b16 %v2015
      %v2064 = vunpack.c.l.b16 %v2016
      %v2065 = vunpack.c.l.b16 %v2017
      %v2066 = vunpack.c.l.b16 %v2018
      %v2067 = vunpack.c.l.b16 %v2019
      %v2068 = vunpack.c.l.b16 %v2020
      %v2069 = vunpack.c.l.b16 %v2021
      %v2070 = vunpack.c.l.b16 %v2022
      %v2071 = vunpack.c.l.b16 %v2023
      %v2072 = vpack.c.b16 %v2057, %v2056
      %v2073 = vpack.c.b16 %v2059, %v2058
      %v2074 = vpack.c.b16 %v2061, %v2060
      %v2075 = vpack.c.b16 %v2063, %v2062
      %v2076 = vpack.c.b16 %v2065, %v2064
      %v2077 = vpack.c.b16 %v2067, %v2066
      %v2078 = vpack.c.b16 %v2069, %v2068
      %v2079 = vpack.c.b16 %v2071, %v2070
      %2088 = vmatpush.bf16.msra.mxu0 %v2079
      %2089 = vmatpush.bf16.msra.mxu0 %v2078
      %2090 = vmatpush.bf16.msra.mxu0 %v2077
      %2091 = vmatpush.bf16.msra.mxu0 %v2076
      %2092 = vmatpush.bf16.msra.mxu0 %v2075
      %2093 = vmatpush.bf16.msra.mxu0 %v2074
      %2094 = vmatpush.bf16.msra.mxu0 %v2073
      %2095 = vmatpush.bf16.msra.mxu0 %v2072
      %2096 = vmatmul.bf16.gmra.mxu0 %v2032
      %v2097 = vpop.f32.mrf.mxu0
      %v2098 = vadd.f32 0.0, %v2097
      %v2099 = vpop.f32.mrf.mxu0
      %v2100 = vadd.f32 0.0, %v2099
      %2101 = vmatmul.bf16.gmra.mxu0 %v2033
      %v2102 = vpop.f32.mrf.mxu0
      %v2103 = vadd.f32 0.0, %v2102
      %v2104 = vpop.f32.mrf.mxu0
      %v2105 = vadd.f32 0.0, %v2104
      %2106 = vmatmul.bf16.gmra.mxu0 %v2034
      %v2107 = vpop.f32.mrf.mxu0
      %v2108 = vadd.f32 0.0, %v2107
      %v2109 = vpop.f32.mrf.mxu0
      %v2110 = vadd.f32 0.0, %v2109
      %2111 = vmatmul.bf16.gmra.mxu0 %v2035
      %v2112 = vpop.f32.mrf.mxu0
      %v2113 = vadd.f32 0.0, %v2112
      %v2114 = vpop.f32.mrf.mxu0
      %v2115 = vadd.f32 0.0, %v2114
      %2116 = vdwg.mxu0
      %v2117 = vadd.f32 %v1943, %v2098
      %v2118 = vadd.f32 %v1944, %v2100
      %v2119 = vadd.f32 %v1945, %v2103
      %v2120 = vadd.f32 %v1946, %v2105
      %v2121 = vadd.f32 %v1947, %v2108
      %v2122 = vadd.f32 %v1948, %v2110
      %v2123 = vadd.f32 %v1949, %v2113
      %v2124 = vadd.f32 %v1950, %v2115
      %v2125 = vpack.c.bf16 %v2117, %v2117
      %v2126 = vpack.c.bf16 %v2118, %v2118
      %v2127 = vpack.c.bf16 %v2119, %v2119
      %v2128 = vpack.c.bf16 %v2120, %v2120
      %v2129 = vpack.c.bf16 %v2121, %v2121
      %v2130 = vpack.c.bf16 %v2122, %v2122
      %v2131 = vpack.c.bf16 %v2123, %v2123
      %v2132 = vpack.c.bf16 %v2124, %v2124
      %2133 = vst [vmem:[%s262] sm:$0xf] %v2125
      %2134 = vst [vmem:[%s262 + $0x4] sm:$0xf] %v2126
      %2135 = vst [vmem:[%s262 + $0x8] sm:$0xf] %v2127
      %2136 = vst [vmem:[%s262 + $0xc] sm:$0xf] %v2128
      %2137 = vst [vmem:[%s262 + $0x10] sm:$0xf] %v2129
      %2138 = vst [vmem:[%s262 + $0x14] sm:$0xf] %v2130
      %2139 = vst [vmem:[%s262 + $0x18] sm:$0xf] %v2131
      %2140 = vst [vmem:[%s262 + $0x1c] sm:$0xf] %v2132
      %v2141 = vadd.f32 %v2117, %v2118
      %v2142 = vadd.f32 %v2141, %v2119
      %v2143 = vadd.f32 %v2142, %v2120
      %v2144 = vadd.f32 %v2143, %v2121
      %v2145 = vadd.f32 %v2144, %v2122
      %v2146 = vadd.f32 %v2145, %v2123
      %v2147 = vadd.f32 %v2146, %v2124
      %v2148 = vrot.slane %v2147, 4
      %v2149 = vadd.f32 %v2147, %v2148
      %v2150 = vrot.slane %v2149, 2
      %v2151 = vadd.f32 %v2149, %v2150
      %v2152 = vrot.slane %v2151, 1
      %v2153 = vadd.f32 %v2151, %v2152
      %2154 = vst [vmem:[%s265] sm:$0x1] %v2153
      %v2155 = vmul.f32 %v2117, %v2117
      %v2156 = vmul.f32 %v2118, %v2118
      %v2157 = vmul.f32 %v2119, %v2119
      %v2158 = vmul.f32 %v2120, %v2120
      %v2159 = vmul.f32 %v2121, %v2121
      %v2160 = vmul.f32 %v2122, %v2122
      %v2161 = vmul.f32 %v2123, %v2123
      %v2162 = vmul.f32 %v2124, %v2124
      %v2163 = vadd.f32 %v2155, %v2156
      %v2164 = vadd.f32 %v2163, %v2157
      %v2165 = vadd.f32 %v2164, %v2158
      %v2166 = vadd.f32 %v2165, %v2159
      %v2167 = vadd.f32 %v2166, %v2160
      %v2168 = vadd.f32 %v2167, %v2161
      %v2169 = vadd.f32 %v2168, %v2162
      %v2170 = vrot.slane %v2169, 4
      %v2171 = vadd.f32 %v2169, %v2170
      %v2172 = vrot.slane %v2171, 2
      %v2173 = vadd.f32 %v2171, %v2172
      %v2174 = vrot.slane %v2173, 1
      %v2175 = vadd.f32 %v2173, %v2174
      %2176 = vst [vmem:[%s268] sm:$0x1] %v2175
      %p2177 = scmp.lt.s32.totalorder %s18, 1
      %s2178 = scalar_select %p2177, %s18, 1
      %s2179 = smul.addr %s2178, 8
      %s2180 = smul.addr %s2179, 4
      %s2181 = scalar_lea.vmem %s4, %s2180
      %p2182 = scmp.lt.s32.totalorder %s18, 1
      %s2183 = scalar_select %p2182, %s18, 1
      %s2184 = scalar_lea.vmem %s5, %s2183
      %p2185 = scmp.lt.s32.totalorder %s18, 1
      %s2186 = scalar_select %p2185, %s18, 1
      %s2187 = scalar_lea.vmem %s6, %s2186
      // Predicated region
      $region37: #{basic_block_forward.4} parent=35 // pred_check
        %p2188 = pneg %p125
      $region38: #{basic_block_forward.4} parent=35 // pred_check_branch
        %2190 = sbr.rel (%p2188) target = $region40
      $region39: #{basic_block_forward.4} parent=35 // pred_region
        _
      $region40: #{basic_block_forward.4} parent=35 // pred_fallthru
        _
      // Predicated region
      $region41: #{basic_block_forward.4} parent=35 // pred_check
        %p2191 = pneg %p151
      $region42: #{basic_block_forward.4} parent=35 // pred_check_branch
        %2193 = sbr.rel (%p2191) target = $region44
      $region43: #{basic_block_forward.4} parent=35 // pred_region
        _
      $region44: #{basic_block_forward.4} parent=35 // pred_fallthru
        _
      // Predicated region
      $region45: #{basic_block_forward.4} parent=35 // pred_check
        %p2194 = pneg %p177
      $region46: #{basic_block_forward.4} parent=35 // pred_check_branch
        %2196 = sbr.rel (%p2194) target = $region48
      $region47: #{basic_block_forward.4} parent=35 // pred_region
        _
      $region48: #{basic_block_forward.4} parent=35 // pred_fallthru
        _
    $region36: #{basic_block_forward.4} parent=5 // pred_fallthru
      _
    %p2197 = scmp.le.s32.totalorder 2, %s13
    // Predicated region
    $region49: #{basic_block_forward.4} parent=5 // pred_check
      %p2198 = pneg %p2197
    $region50: #{basic_block_forward.4} parent=5 // pred_check_branch
      %2200 = sbr.rel (%p2198) target = $region52
    $region51: #{basic_block_forward.4} parent=5 // pred_region
      %s2201 = ssub.s32 %s13, 2
      // Predicated region
      $region53: #{basic_block_forward.4} parent=51 // pred_check
        %p2202 = pneg %p131
      $region54: #{basic_block_forward.4} parent=51 // pred_check_branch
        %2204 = sbr.rel (%p2202) target = $region56
      $region55: #{basic_block_forward.4} parent=51 // pred_region
        %p2205 = scmp.lt.s32.totalorder %s19, 1
        %s2206 = scalar_select %p2205, %s19, 1
        %s2207 = smul.addr %s2206, 8
        %s2208 = smul.addr %s2207, 4
        %s2209 = scalar_lea.vmem %s4, %s2208
      $region56: #{basic_block_forward.4} parent=51 // pred_fallthru
        _
      // Predicated region
      $region57: #{basic_block_forward.4} parent=51 // pred_check
        %p2210 = pneg %p157
      $region58: #{basic_block_forward.4} parent=51 // pred_check_branch
        %2212 = sbr.rel (%p2210) target = $region60
      $region59: #{basic_block_forward.4} parent=51 // pred_region
        %p2213 = scmp.lt.s32.totalorder %s19, 1
        %s2214 = scalar_select %p2213, %s19, 1
        %s2215 = scalar_lea.vmem %s5, %s2214
      $region60: #{basic_block_forward.4} parent=51 // pred_fallthru
        _
      // Predicated region
      $region61: #{basic_block_forward.4} parent=51 // pred_check
        %p2216 = pneg %p183
      $region62: #{basic_block_forward.4} parent=51 // pred_check_branch
        %2218 = sbr.rel (%p2216) target = $region64
      $region63: #{basic_block_forward.4} parent=51 // pred_region
        %p2219 = scmp.lt.s32.totalorder %s19, 1
        %s2220 = scalar_select %p2219, %s19, 1
        %s2221 = scalar_lea.vmem %s6, %s2220
      $region64: #{basic_block_forward.4} parent=51 // pred_fallthru
        _
    $region52: #{basic_block_forward.4} parent=5 // pred_fallthru
      _
  $region6: #{basic_block_forward.4} parent=0 // loop_footer
    %s17 = sadd.s32 1, %s13
  $region7: #{basic_block_forward.4} parent=0 // loop_footer_branch
    %12 = sbr.rel target = $region3
  $region8: #{basic_block_forward.4} parent=0 // loop_exit
    _

</llo_original>
